<compile_context>
chip_gen: v6e
topology: v6e:2x2x1
jax: 0.10.0
libtpu: 0.0.40
codegen_flags: <defaults>
</compile_context>

<pallas_src>
import functools

import jax
import jax.numpy as jnp
from jax.experimental import pallas as pl
from jax.experimental.pallas import tpu as pltpu

_LANE = 128
_SUBLANE = 8


def _round_up(x, m):
    return ((x + m - 1) // m) * m


def _pad_gate_cols(w, H, Hp):
    """(rows, 4H) gate-blocked [i|f|g|o] -> (rows, 4Hp) with 128-aligned gates."""
    rows = w.shape[0]
    out = jnp.zeros((rows, 4 * Hp), w.dtype)
    for g in range(4):
        out = out.at[:, g * Hp: g * Hp + H].set(w[:, g * H:(g + 1) * H])
    return out


def _pad_rows(w, rows_p):
    pad = rows_p - w.shape[0]
    return w if pad == 0 else jnp.pad(w, ((0, pad), (0, 0)))


def _vmem_budget_bytes():
    """Generation-aware usable-VMEM budget (v7x: 64 MiB phys; v5e/v6e: 128 MiB)."""
    cap = 64 * 1024 * 1024  # conservative fallback (v7x)
    try:
        info = pltpu.get_tpu_info()
        cap = int(getattr(info, "vmem_capacity_bytes", cap))
    except Exception:
        pass
    # Leave headroom for Mosaic-internal scratch; never ask for more than 100 MiB.
    return int(min(max(cap - 16 * 1024 * 1024, 32 * 1024 * 1024),
                   100 * 1024 * 1024))


def _auto_time_chunk(T, Bp, d_in0, Hp, n_layers, budget):
    """Pick the largest time-chunk that fits the VMEM budget (<=256 steps),
    preferring a divisor of T so the ragged-tail masking can be dropped."""
    d_max = max(d_in0, Hp) if n_layers > 1 else d_in0
    itm = 4  # f32
    # Chunk-size-independent VMEM: double-buffered weights + bias + h/c outputs.
    fixed = 2 * itm * (d_max + Hp + 1) * 4 * Hp + 4 * itm * Bp * Hp
    # Per-timestep VMEM: 2x x chunk + 2x out chunk + gates scratch.
    per_step = itm * Bp * (2 * d_max + 2 * Hp + 4 * Hp)
    avail = budget - fixed
    tc = avail // per_step
    tc = int(min(tc, 256, T))
    tc = max(tc, min(8, T), 1)
    # Prefer a divisor of T (no per-step masking, no padded timesteps).
    best_div = 1
    for d in range(1, tc + 1):
        if T % d == 0:
            best_div = d
    if best_div * 2 >= tc or best_div >= 64:
        return best_div
    return tc


# -----------------------------------------------------------------------------
# Pallas kernel: one LSTM layer, one time-chunk per grid step.
# x is time-major and flattened: row index = t * Bp + b.
# -----------------------------------------------------------------------------
def _lstm_layer_kernel(x_ref, wih_ref, whh_ref, b_ref,
                       out_ref, hT_ref, cT_ref,
                       gx_scr,
                       *, seq_len, chunk_steps, batch_pad, ragged, unroll):
    ck = pl.program_id(0)
    TC = chunk_steps
    Bp = batch_pad
    Hp = hT_ref.shape[-1]

    # hT/cT output blocks (constant index maps) ARE the carried recurrent state:
    # they stay VMEM-resident across the sequential chunk axis.
    @pl.when(ck == 0)
    def _():
        hT_ref[...] = jnp.zeros_like(hT_ref)
        cT_ref[...] = jnp.zeros_like(cT_ref)

    # Hoisted input projection: one MXU-efficient GEMM per chunk,
    # (TC*Bp, D) x (D, 4Hp) + bias, off the recurrent critical path.
    gx_scr[...] = (jnp.dot(x_ref[...], wih_ref[...],
                           preferred_element_type=jnp.float32)
                   + b_ref[...])

    def cell_math(t, h, c):
        row0 = pl.multiple_of(t * Bp, Bp)
        # Only the recurrent matmul remains inside the sequential loop.
        gates = gx_scr[pl.ds(row0, Bp), :] + jnp.dot(
            h, whh_ref[...], preferred_element_type=jnp.float32)
        # 128-aligned gate slices (Hp is a multiple of 128): free ref views.
        i_g = jax.nn.sigmoid(gates[:, 0 * Hp:1 * Hp])
        f_g = jax.nn.sigmoid(gates[:, 1 * Hp:2 * Hp])
        g_g = jnp.tanh(gates[:, 2 * Hp:3 * Hp])
        o_g = jax.nn.sigmoid(gates[:, 3 * Hp:4 * Hp])
        c_new = f_g * c + i_g * g_g
        h_new = o_g * jnp.tanh(c_new)
        return row0, h_new, c_new

    if not ragged:
        # Fast path: TC divides T -> no masking on the critical path.
        def step(t, carry):
            h, c = carry
            row0, h_new, c_new = cell_math(t, h, c)
            out_ref[pl.ds(row0, Bp), :] = h_new.astype(out_ref.dtype)
            return h_new, c_new
    else:
        # Ragged last chunk: hold state (and output) past the true seq length.
        def step(t, carry):
            h, c = carry
            row0, h_new, c_new = cell_math(t, h, c)
            keep = (ck * TC + t) < seq_len
            h = jnp.where(keep, h_new, h)
            c = jnp.where(keep, c_new, c)
            out_ref[pl.ds(row0, Bp), :] = h.astype(out_ref.dtype)
            return h, c

    h0 = hT_ref[...].astype(jnp.float32)
    c0 = cT_ref[...].astype(jnp.float32)
    h_fin, c_fin = jax.lax.fori_loop(0, TC, step, (h0, c0), unroll=unroll)
    hT_ref[...] = h_fin.astype(hT_ref.dtype)
    cT_ref[...] = c_fin.astype(cT_ref.dtype)


def _lstm_layer(x2d, w_ih_t, w_hh_t, bias_row, *, seq_len, batch_pad, chunk,
                vmem_limit):
    """One LSTM layer over a full (padded) sequence.

    x2d:      (T_pad*Bp, D_in)  time-major, flattened (t major, b minor)
    w_ih_t:   (D_in, 4*Hp)      gate-blocked, lane-aligned
    w_hh_t:   (Hp, 4*Hp)        gate-blocked, lane-aligned
    bias_row: (1, 4*Hp)

    returns: out_seq (T_pad*Bp, Hp), h_T (Bp, Hp), c_T (Bp, Hp)
    """
    TBp, D = x2d.shape
    Bp = batch_pad
    T_pad = TBp // Bp
    H4p = w_ih_t.shape[1]
    Hp = H4p // 4
    TC = chunk
    n_chunks = T_pad // TC
    dtype = x2d.dtype
    ragged = (seq_len % TC) != 0

    kernel = functools.partial(
        _lstm_layer_kernel,
        seq_len=seq_len, chunk_steps=TC, batch_pad=Bp, ragged=ragged,
        unroll=min(TC, 8))

    grid_spec = pltpu.PrefetchScalarGridSpec(
        num_scalar_prefetch=0,
        grid=(n_chunks,),
        in_specs=[
            pl.BlockSpec((TC * Bp, D), lambda ck: (ck, 0)),   # x chunk
            pl.BlockSpec((D, H4p), lambda ck: (0, 0)),        # W_ih^T (resident)
            pl.BlockSpec((Hp, H4p), lambda ck: (0, 0)),       # W_hh^T (resident)
            pl.BlockSpec((1, H4p), lambda ck: (0, 0)),        # bias   (resident)
        ],
        out_specs=[
            pl.BlockSpec((TC * Bp, Hp), lambda ck: (ck, 0)),  # output chunk
            pl.BlockSpec((Bp, Hp), lambda ck: (0, 0)),        # final hidden (carry)
            pl.BlockSpec((Bp, Hp), lambda ck: (0, 0)),        # final cell   (carry)
        ],
        scratch_shapes=[
            pltpu.VMEM((TC * Bp, H4p), jnp.float32),          # gates_x chunk
        ],
    )

    out_seq, h_T, c_T = pl.pallas_call(
        kernel,
        out_shape=(
            jax.ShapeDtypeStruct((TBp, Hp), dtype),
            jax.ShapeDtypeStruct((Bp, Hp), dtype),
            jax.ShapeDtypeStruct((Bp, Hp), dtype),
        ),
        grid_spec=grid_spec,
        compiler_params=pltpu.CompilerParams(
            dimension_semantics=("arbitrary",),   # recurrent axis: never parallel
            vmem_limit_bytes=int(vmem_limit)),
    )(x2d, w_ih_t, w_hh_t, bias_row)
    return out_seq, h_T, c_T


# -----------------------------------------------------------------------------
# Module wrapper (glue in plain JAX)
# -----------------------------------------------------------------------------
class S2S2SEncoderPallas:
    """LSTM encoder; forward(X) returns (hidden, cell), each (n_layers, B, H)."""

    def __init__(self, inp_dim, hidden_dim, n_layers, dropout, key,
                 time_chunk=None):
        self.inp_dim = inp_dim
        self.hidden_dim = hidden_dim
        self.n_layers = n_layers
        self.dropout = dropout  # eval-mode semantics (identity between layers)
        self.time_chunk = time_chunk            # None -> auto (VMEM-budgeted)
        self.Hp = _round_up(hidden_dim, _LANE)   # lane-aligned hidden dim
        self.vmem_budget = _vmem_budget_bytes()  # generation-aware

        H, Hp = hidden_dim, self.Hp
        bound = float(hidden_dim) ** -0.5        # PyTorch nn.LSTM init bound

        self.params = []          # unpadded (for the pure-JAX reference)
        self.padded_params = []   # lane-aligned, gate-blocked (for the kernel)
        for layer in range(n_layers):
            d_in = inp_dim if layer == 0 else hidden_dim
            key, k1, k2, k3, k4 = jax.random.split(key, 5)
            w_ih = jax.random.uniform(k1, (4 * H, d_in), jnp.float32, -bound, bound)
            w_hh = jax.random.uniform(k2, (4 * H, H), jnp.float32, -bound, bound)
            b_ih = jax.random.uniform(k3, (4 * H,), jnp.float32, -bound, bound)
            b_hh = jax.random.uniform(k4, (4 * H,), jnp.float32, -bound, bound)

            w_ih_t = jnp.transpose(w_ih)             # (d_in, 4H)
            w_hh_t = jnp.transpose(w_hh)             # (H, 4H)
            bias = (b_ih + b_hh)[None, :]            # (1, 4H)
            self.params.append(dict(w_ih_t=w_ih_t, w_hh_t=w_hh_t, bias=bias))

            w_ih_p = _pad_gate_cols(w_ih_t, H, Hp)   # (d_in, 4Hp)
            if layer > 0:
                # layer>0 consumes the padded (Hp-wide) hidden sequence
                w_ih_p = _pad_rows(w_ih_p, Hp)       # (Hp, 4Hp)
            w_hh_p = _pad_rows(_pad_gate_cols(w_hh_t, H, Hp), Hp)  # (Hp, 4Hp)
            bias_p = _pad_gate_cols(bias, H, Hp)     # (1, 4Hp)
            self.padded_params.append(dict(w_ih_t=w_ih_p, w_hh_t=w_hh_p,
                                           bias=bias_p))

    @functools.partial(jax.jit, static_argnums=0)
    def __call__(self, X):
        # X: (B, T, inp_dim)  batch_first, like the PyTorch module.
        B, T, D = X.shape
        H = self.hidden_dim
        Hp = self.Hp
        Bp = _round_up(B, _SUBLANE)

        if self.time_chunk is None:
            TC = _auto_time_chunk(T, Bp, D, Hp, self.n_layers, self.vmem_budget)
        else:
            TC = max(1, min(self.time_chunk, T))
        T_pad = ((T + TC - 1) // TC) * TC

        # One HBM transpose of X (layer 0 only); all layer outputs are already
        # in the flattened time-major layout the kernel consumes.
        x = jnp.transpose(X, (1, 0, 2))                              # (T, B, D)
        x = jnp.pad(x, ((0, T_pad - T), (0, Bp - B), (0, 0)))
        x = x.reshape(T_pad * Bp, D)                                 # t-major

        h_fin, c_fin = [], []
        for p in self.padded_params:
            x, h_T, c_T = _lstm_layer(x, p["w_ih_t"], p["w_hh_t"], p["bias"],
                                      seq_len=T, batch_pad=Bp, chunk=TC,
                                      vmem_limit=self.vmem_budget)
            h_fin.append(h_T[:B, :H])
            c_fin.append(c_T[:B, :H])
        hidden = jnp.stack(h_fin, axis=0)            # (n_layers, B, H)
        cell = jnp.stack(c_fin, axis=0)              # (n_layers, B, H)
        return hidden, cell


# -----------------------------------------------------------------------------
# Pure-JAX reference LSTM (correctness sanity check)
# -----------------------------------------------------------------------------
def _reference_lstm(X, params, hidden_dim):
    B = X.shape[0]
    x = jnp.transpose(X, (1, 0, 2))  # (T, B, D)
    h_finals, c_finals = [], []
    H = hidden_dim
    for p in params:
        def step(carry, x_t):
            h, c = carry
            gates = x_t @ p["w_ih_t"] + h @ p["w_hh_t"] + p["bias"]
            i = jax.nn.sigmoid(gates[:, 0 * H:1 * H])
            f = jax.nn.sigmoid(gates[:, 1 * H:2 * H])
            g = jnp.tanh(gates[:, 2 * H:3 * H])
            o = jax.nn.sigmoid(gates[:, 3 * H:4 * H])
            c_new = f * c + i * g
            h_new = o * jnp.tanh(c_new)
            return (h_new, c_new), h_new

        init = (jnp.zeros((B, H), jnp.float32), jnp.zeros((B, H), jnp.float32))
        (h_T, c_T), out = jax.lax.scan(step, init, x)
        x = out
        h_finals.append(h_T)
        c_finals.append(c_T)
    return jnp.stack(h_finals, 0), jnp.stack(c_finals, 0)


if __name__ == "__main__":
    # Small shapes consistent with the module: batch=2, seq=8, inp_dim=8,
    # hidden=32, n_layers=2, dropout=0.0.
    B, T, D, H, L = 2, 8, 8, 32, 2

    key = jax.random.PRNGKey(0)
    key, k_x, k_p = jax.random.split(key, 3)
    X = jax.random.normal(k_x, (B, T, D), jnp.float32)

    enc = S2S2SEncoderPallas(inp_dim=D, hidden_dim=H, n_layers=L,
                             dropout=0.0, key=k_p)
    hidden, cell = enc(X)
    hidden = jax.block_until_ready(hidden)
    cell = jax.block_until_ready(cell)
    assert hidden.shape == (L, B, H) and cell.shape == (L, B, H)

    # Sanity check against a pure-JAX LSTM reference.
    h_ref, c_ref = _reference_lstm(X, enc.params, H)
    assert jnp.allclose(hidden, h_ref, atol=1e-4, rtol=1e-4)
    assert jnp.allclose(cell, c_ref, atol=1e-4, rtol=1e-4)

    # Also exercise the multi-chunk + ragged-T masking path (T=8, chunk=3).
    enc2 = S2S2SEncoderPallas(inp_dim=D, hidden_dim=H, n_layers=L,
                              dropout=0.0, key=k_p, time_chunk=3)
    hidden2, cell2 = enc2(X)
    hidden2 = jax.block_until_ready(hidden2)
    cell2 = jax.block_until_ready(cell2)
    assert jnp.allclose(hidden2, h_ref, atol=1e-4, rtol=1e-4)
    assert jnp.allclose(cell2, c_ref, atol=1e-4, rtol=1e-4)

    print("KERNEL_OK")
</pallas_src>

<mosaic_0001>
module attributes {stable_mosaic.version = 11 : i64} {
  func.func @_lstm_layer_kernel(%arg0: i32, %arg1: memref<64x8xf32, #tpu.memory_space<vmem>>, %arg2: memref<8x512xf32, #tpu.memory_space<vmem>>, %arg3: memref<128x512xf32, #tpu.memory_space<vmem>>, %arg4: memref<1x512xf32, #tpu.memory_space<vmem>>, %arg5: memref<64x128xf32, #tpu.memory_space<vmem>>, %arg6: memref<8x128xf32, #tpu.memory_space<vmem>>, %arg7: memref<8x128xf32, #tpu.memory_space<vmem>>, %arg8: memref<64x512xf32, #tpu.memory_space<vmem>>) attributes {dimension_semantics = [#tpu.dimension_semantics<arbitrary>], iteration_bounds = array<i64: 1>, scalar_prefetch = 0 : i64, scratch_operands = 1 : i64, tpu.core_type = #tpu.core_type<tc>, window_params = [{transform_indices = @transform_0, window_bounds = array<i64: 64, 8>}, {pipeline_mode = #tpu.pipeline_mode<synchronous>, transform_indices = @transform_1, window_bounds = array<i64: 8, 512>}, {pipeline_mode = #tpu.pipeline_mode<synchronous>, transform_indices = @transform_2, window_bounds = array<i64: 128, 512>}, {pipeline_mode = #tpu.pipeline_mode<synchronous>, transform_indices = @transform_3, window_bounds = array<i64: 1, 512>}, {transform_indices = @transform_4, window_bounds = array<i64: 64, 128>}, {pipeline_mode = #tpu.pipeline_mode<synchronous>, transform_indices = @transform_5, window_bounds = array<i64: 8, 128>}, {pipeline_mode = #tpu.pipeline_mode<synchronous>, transform_indices = @transform_6, window_bounds = array<i64: 8, 128>}]} {
    %c0_i32 = arith.constant 0 : i32
    %0 = arith.cmpi eq, %arg0, %c0_i32 : i32
    %1 = arith.extui %0 : i1 to i32
    %c0_i32_0 = arith.constant 0 : i32
    %2 = arith.cmpi ne, %1, %c0_i32_0 : i32
    scf.if %2 {
      %cst_89 = arith.constant 0.000000e+00 : f32
      %286 = vector.broadcast %cst_89 : f32 to vector<8x128xf32>
      %c0_90 = arith.constant 0 : index
      %c0_91 = arith.constant 0 : index
      %287 = vector.load %arg6[%c0_90, %c0_91] : memref<8x128xf32, #tpu.memory_space<vmem>>, vector<8x128xf32>
      tpu.vector_store %arg6[%c0_90, %c0_91], %286 {strides = array<i32>} : memref<8x128xf32, #tpu.memory_space<vmem>>, vector<8x128xf32>,
      %cst_92 = arith.constant 0.000000e+00 : f32
      %288 = vector.broadcast %cst_92 : f32 to vector<8x128xf32>
      %c0_93 = arith.constant 0 : index
      %c0_94 = arith.constant 0 : index
      %289 = vector.load %arg7[%c0_93, %c0_94] : memref<8x128xf32, #tpu.memory_space<vmem>>, vector<8x128xf32>
      tpu.vector_store %arg7[%c0_93, %c0_94], %288 {strides = array<i32>} : memref<8x128xf32, #tpu.memory_space<vmem>>, vector<8x128xf32>,
    } else {
    }
    %c0 = arith.constant 0 : index
    %c0_1 = arith.constant 0 : index
    %3 = vector.load %arg1[%c0, %c0_1] : memref<64x8xf32, #tpu.memory_space<vmem>>, vector<64x8xf32>
    %c0_2 = arith.constant 0 : index
    %c0_3 = arith.constant 0 : index
    %4 = vector.load %arg2[%c0_2, %c0_3] : memref<8x512xf32, #tpu.memory_space<vmem>>, vector<8x512xf32>
    %cst = arith.constant dense<0.000000e+00> : vector<64x512xf32>
    %5 = tpu.matmul %3, %4, %cst {dimension_numbers = #tpu.dot_dimension_numbers<[1], [0], [0], [1], [0, 0, 1, 1], [], []>} : vector<64x8xf32>, vector<8x512xf32>, vector<64x512xf32> -> vector<64x512xf32>
    %c0_4 = arith.constant 0 : index
    %c0_5 = arith.constant 0 : index
    %6 = vector.load %arg4[%c0_4, %c0_5] : memref<1x512xf32, #tpu.memory_space<vmem>>, vector<1x512xf32>
    %7 = vector.broadcast %6 : vector<1x512xf32> to vector<64x512xf32>
    %8 = arith.addf %5, %7 : vector<64x512xf32>
    %c0_6 = arith.constant 0 : index
    %c0_7 = arith.constant 0 : index
    %9 = vector.load %arg8[%c0_6, %c0_7] : memref<64x512xf32, #tpu.memory_space<vmem>>, vector<64x512xf32>
    tpu.vector_store %arg8[%c0_6, %c0_7], %8 {strides = array<i32>} : memref<64x512xf32, #tpu.memory_space<vmem>>, vector<64x512xf32>,
    %c0_8 = arith.constant 0 : index
    %c0_9 = arith.constant 0 : index
    %10 = vector.load %arg6[%c0_8, %c0_9] : memref<8x128xf32, #tpu.memory_space<vmem>>, vector<8x128xf32>
    %c0_10 = arith.constant 0 : index
    %c0_11 = arith.constant 0 : index
    %11 = vector.load %arg7[%c0_10, %c0_11] : memref<8x128xf32, #tpu.memory_space<vmem>>, vector<8x128xf32>
    %c0_i32_12 = arith.constant 0 : i32
    %c8_i32 = arith.constant 8 : i32
    %12 = arith.muli %c0_i32_12, %c8_i32 : i32
    %13 = tpu.assume_multiple %12, 8 : i32
    %14 = arith.index_cast %13 : i32 to index
    %c0_13 = arith.constant 0 : index
    %15 = vector.load %arg8[%14, %c0_13] : memref<64x512xf32, #tpu.memory_space<vmem>>, vector<8x512xf32>
    %c0_14 = arith.constant 0 : index
    %c0_15 = arith.constant 0 : index
    %16 = vector.load %arg3[%c0_14, %c0_15] : memref<128x512xf32, #tpu.memory_space<vmem>>, vector<128x512xf32>
    %cst_16 = arith.constant dense<0.000000e+00> : vector<8x512xf32>
    %17 = tpu.matmul %10, %16, %cst_16 {dimension_numbers = #tpu.dot_dimension_numbers<[1], [0], [0], [1], [0, 0, 1, 1], [], []>} : vector<8x128xf32>, vector<128x512xf32>, vector<8x512xf32> -> vector<8x512xf32>
    %18 = arith.addf %15, %17 : vector<8x512xf32>
    %19 = vector.extract_strided_slice %18 {offsets = [0, 0], sizes = [8, 128], strides = [1, 1]} : vector<8x512xf32> to vector<8x128xf32>
    %20 = arith.negf %19 : vector<8x128xf32>
    %21 = math.exp %20 : vector<8x128xf32>
    %cst_17 = arith.constant 1.000000e+00 : f32
    %22 = vector.broadcast %cst_17 : f32 to vector<8x128xf32>
    %23 = arith.addf %22, %21 : vector<8x128xf32>
    %24 = arith.divf %22, %23 : vector<8x128xf32>
    %25 = vector.extract_strided_slice %18 {offsets = [0, 128], sizes = [8, 128], strides = [1, 1]} : vector<8x512xf32> to vector<8x128xf32>
    %26 = arith.negf %25 : vector<8x128xf32>
    %27 = math.exp %26 : vector<8x128xf32>
    %cst_18 = arith.constant 1.000000e+00 : f32
    %28 = vector.broadcast %cst_18 : f32 to vector<8x128xf32>
    %29 = arith.addf %28, %27 : vector<8x128xf32>
    %30 = arith.divf %28, %29 : vector<8x128xf32>
    %31 = vector.extract_strided_slice %18 {offsets = [0, 256], sizes = [8, 128], strides = [1, 1]} : vector<8x512xf32> to vector<8x128xf32>
    %32 = math.tanh %31 : vector<8x128xf32>
    %33 = vector.extract_strided_slice %18 {offsets = [0, 384], sizes = [8, 128], strides = [1, 1]} : vector<8x512xf32> to vector<8x128xf32>
    %34 = arith.negf %33 : vector<8x128xf32>
    %35 = math.exp %34 : vector<8x128xf32>
    %cst_19 = arith.constant 1.000000e+00 : f32
    %36 = vector.broadcast %cst_19 : f32 to vector<8x128xf32>
    %37 = arith.addf %36, %35 : vector<8x128xf32>
    %38 = arith.divf %36, %37 : vector<8x128xf32>
    %39 = arith.mulf %30, %11 : vector<8x128xf32>
    %40 = arith.mulf %24, %32 : vector<8x128xf32>
    %41 = arith.addf %39, %40 : vector<8x128xf32>
    %42 = math.tanh %41 : vector<8x128xf32>
    %43 = arith.mulf %38, %42 : vector<8x128xf32>
    %44 = arith.index_cast %13 : i32 to index
    %c0_20 = arith.constant 0 : index
    %45 = vector.load %arg5[%44, %c0_20] : memref<64x128xf32, #tpu.memory_space<vmem>>, vector<8x128xf32>
    tpu.vector_store %arg5[%44, %c0_20], %43 {strides = array<i32>} : memref<64x128xf32, #tpu.memory_space<vmem>>, vector<8x128xf32>,
    %c1_i32 = arith.constant 1 : i32
    %c8_i32_21 = arith.constant 8 : i32
    %46 = arith.muli %c1_i32, %c8_i32_21 : i32
    %47 = tpu.assume_multiple %46, 8 : i32
    %48 = arith.index_cast %47 : i32 to index
    %c0_22 = arith.constant 0 : index
    %49 = vector.load %arg8[%48, %c0_22] : memref<64x512xf32, #tpu.memory_space<vmem>>, vector<8x512xf32>
    %c0_23 = arith.constant 0 : index
    %c0_24 = arith.constant 0 : index
    %50 = vector.load %arg3[%c0_23, %c0_24] : memref<128x512xf32, #tpu.memory_space<vmem>>, vector<128x512xf32>
    %cst_25 = arith.constant dense<0.000000e+00> : vector<8x512xf32>
    %51 = tpu.matmul %43, %50, %cst_25 {dimension_numbers = #tpu.dot_dimension_numbers<[1], [0], [0], [1], [0, 0, 1, 1], [], []>} : vector<8x128xf32>, vector<128x512xf32>, vector<8x512xf32> -> vector<8x512xf32>
    %52 = arith.addf %49, %51 : vector<8x512xf32>
    %53 = vector.extract_strided_slice %52 {offsets = [0, 0], sizes = [8, 128], strides = [1, 1]} : vector<8x512xf32> to vector<8x128xf32>
    %54 = arith.negf %53 : vector<8x128xf32>
    %55 = math.exp %54 : vector<8x128xf32>
    %cst_26 = arith.constant 1.000000e+00 : f32
    %56 = vector.broadcast %cst_26 : f32 to vector<8x128xf32>
    %57 = arith.addf %56, %55 : vector<8x128xf32>
    %58 = arith.divf %56, %57 : vector<8x128xf32>
    %59 = vector.extract_strided_slice %52 {offsets = [0, 128], sizes = [8, 128], strides = [1, 1]} : vector<8x512xf32> to vector<8x128xf32>
    %60 = arith.negf %59 : vector<8x128xf32>
    %61 = math.exp %60 : vector<8x128xf32>
    %cst_27 = arith.constant 1.000000e+00 : f32
    %62 = vector.broadcast %cst_27 : f32 to vector<8x128xf32>
    %63 = arith.addf %62, %61 : vector<8x128xf32>
    %64 = arith.divf %62, %63 : vector<8x128xf32>
    %65 = vector.extract_strided_slice %52 {offsets = [0, 256], sizes = [8, 128], strides = [1, 1]} : vector<8x512xf32> to vector<8x128xf32>
    %66 = math.tanh %65 : vector<8x128xf32>
    %67 = vector.extract_strided_slice %52 {offsets = [0, 384], sizes = [8, 128], strides = [1, 1]} : vector<8x512xf32> to vector<8x128xf32>
    %68 = arith.negf %67 : vector<8x128xf32>
    %69 = math.exp %68 : vector<8x128xf32>
    %cst_28 = arith.constant 1.000000e+00 : f32
    %70 = vector.broadcast %cst_28 : f32 to vector<8x128xf32>
    %71 = arith.addf %70, %69 : vector<8x128xf32>
    %72 = arith.divf %70, %71 : vector<8x128xf32>
    %73 = arith.mulf %64, %41 : vector<8x128xf32>
    %74 = arith.mulf %58, %66 : vector<8x128xf32>
    %75 = arith.addf %73, %74 : vector<8x128xf32>
    %76 = math.tanh %75 : vector<8x128xf32>
    %77 = arith.mulf %72, %76 : vector<8x128xf32>
    %78 = arith.index_cast %47 : i32 to index
    %c0_29 = arith.constant 0 : index
    %79 = vector.load %arg5[%78, %c0_29] : memref<64x128xf32, #tpu.memory_space<vmem>>, vector<8x128xf32>
    tpu.vector_store %arg5[%78, %c0_29], %77 {strides = array<i32>} : memref<64x128xf32, #tpu.memory_space<vmem>>, vector<8x128xf32>,
    %c2_i32 = arith.constant 2 : i32
    %c8_i32_30 = arith.constant 8 : i32
    %80 = arith.muli %c2_i32, %c8_i32_30 : i32
    %81 = tpu.assume_multiple %80, 8 : i32
    %82 = arith.index_cast %81 : i32 to index
    %c0_31 = arith.constant 0 : index
    %83 = vector.load %arg8[%82, %c0_31] : memref<64x512xf32, #tpu.memory_space<vmem>>, vector<8x512xf32>
    %c0_32 = arith.constant 0 : index
    %c0_33 = arith.constant 0 : index
    %84 = vector.load %arg3[%c0_32, %c0_33] : memref<128x512xf32, #tpu.memory_space<vmem>>, vector<128x512xf32>
    %cst_34 = arith.constant dense<0.000000e+00> : vector<8x512xf32>
    %85 = tpu.matmul %77, %84, %cst_34 {dimension_numbers = #tpu.dot_dimension_numbers<[1], [0], [0], [1], [0, 0, 1, 1], [], []>} : vector<8x128xf32>, vector<128x512xf32>, vector<8x512xf32> -> vector<8x512xf32>
    %86 = arith.addf %83, %85 : vector<8x512xf32>
    %87 = vector.extract_strided_slice %86 {offsets = [0, 0], sizes = [8, 128], strides = [1, 1]} : vector<8x512xf32> to vector<8x128xf32>
    %88 = arith.negf %87 : vector<8x128xf32>
    %89 = math.exp %88 : vector<8x128xf32>
    %cst_35 = arith.constant 1.000000e+00 : f32
    %90 = vector.broadcast %cst_35 : f32 to vector<8x128xf32>
    %91 = arith.addf %90, %89 : vector<8x128xf32>
    %92 = arith.divf %90, %91 : vector<8x128xf32>
    %93 = vector.extract_strided_slice %86 {offsets = [0, 128], sizes = [8, 128], strides = [1, 1]} : vector<8x512xf32> to vector<8x128xf32>
    %94 = arith.negf %93 : vector<8x128xf32>
    %95 = math.exp %94 : vector<8x128xf32>
    %cst_36 = arith.constant 1.000000e+00 : f32
    %96 = vector.broadcast %cst_36 : f32 to vector<8x128xf32>
    %97 = arith.addf %96, %95 : vector<8x128xf32>
    %98 = arith.divf %96, %97 : vector<8x128xf32>
    %99 = vector.extract_strided_slice %86 {offsets = [0, 256], sizes = [8, 128], strides = [1, 1]} : vector<8x512xf32> to vector<8x128xf32>
    %100 = math.tanh %99 : vector<8x128xf32>
    %101 = vector.extract_strided_slice %86 {offsets = [0, 384], sizes = [8, 128], strides = [1, 1]} : vector<8x512xf32> to vector<8x128xf32>
    %102 = arith.negf %101 : vector<8x128xf32>
    %103 = math.exp %102 : vector<8x128xf32>
    %cst_37 = arith.constant 1.000000e+00 : f32
    %104 = vector.broadcast %cst_37 : f32 to vector<8x128xf32>
    %105 = arith.addf %104, %103 : vector<8x128xf32>
    %106 = arith.divf %104, %105 : vector<8x128xf32>
    %107 = arith.mulf %98, %75 : vector<8x128xf32>
    %108 = arith.mulf %92, %100 : vector<8x128xf32>
    %109 = arith.addf %107, %108 : vector<8x128xf32>
    %110 = math.tanh %109 : vector<8x128xf32>
    %111 = arith.mulf %106, %110 : vector<8x128xf32>
    %112 = arith.index_cast %81 : i32 to index
    %c0_38 = arith.constant 0 : index
    %113 = vector.load %arg5[%112, %c0_38] : memref<64x128xf32, #tpu.memory_space<vmem>>, vector<8x128xf32>
    tpu.vector_store %arg5[%112, %c0_38], %111 {strides = array<i32>} : memref<64x128xf32, #tpu.memory_space<vmem>>, vector<8x128xf32>,
    %c3_i32 = arith.constant 3 : i32
    %c8_i32_39 = arith.constant 8 : i32
    %114 = arith.muli %c3_i32, %c8_i32_39 : i32
    %115 = tpu.assume_multiple %114, 8 : i32
    %116 = arith.index_cast %115 : i32 to index
    %c0_40 = arith.constant 0 : index
    %117 = vector.load %arg8[%116, %c0_40] : memref<64x512xf32, #tpu.memory_space<vmem>>, vector<8x512xf32>
    %c0_41 = arith.constant 0 : index
    %c0_42 = arith.constant 0 : index
    %118 = vector.load %arg3[%c0_41, %c0_42] : memref<128x512xf32, #tpu.memory_space<vmem>>, vector<128x512xf32>
    %cst_43 = arith.constant dense<0.000000e+00> : vector<8x512xf32>
    %119 = tpu.matmul %111, %118, %cst_43 {dimension_numbers = #tpu.dot_dimension_numbers<[1], [0], [0], [1], [0, 0, 1, 1], [], []>} : vector<8x128xf32>, vector<128x512xf32>, vector<8x512xf32> -> vector<8x512xf32>
    %120 = arith.addf %117, %119 : vector<8x512xf32>
    %121 = vector.extract_strided_slice %120 {offsets = [0, 0], sizes = [8, 128], strides = [1, 1]} : vector<8x512xf32> to vector<8x128xf32>
    %122 = arith.negf %121 : vector<8x128xf32>
    %123 = math.exp %122 : vector<8x128xf32>
    %cst_44 = arith.constant 1.000000e+00 : f32
    %124 = vector.broadcast %cst_44 : f32 to vector<8x128xf32>
    %125 = arith.addf %124, %123 : vector<8x128xf32>
    %126 = arith.divf %124, %125 : vector<8x128xf32>
    %127 = vector.extract_strided_slice %120 {offsets = [0, 128], sizes = [8, 128], strides = [1, 1]} : vector<8x512xf32> to vector<8x128xf32>
    %128 = arith.negf %127 : vector<8x128xf32>
    %129 = math.exp %128 : vector<8x128xf32>
    %cst_45 = arith.constant 1.000000e+00 : f32
    %130 = vector.broadcast %cst_45 : f32 to vector<8x128xf32>
    %131 = arith.addf %130, %129 : vector<8x128xf32>
    %132 = arith.divf %130, %131 : vector<8x128xf32>
    %133 = vector.extract_strided_slice %120 {offsets = [0, 256], sizes = [8, 128], strides = [1, 1]} : vector<8x512xf32> to vector<8x128xf32>
    %134 = math.tanh %133 : vector<8x128xf32>
    %135 = vector.extract_strided_slice %120 {offsets = [0, 384], sizes = [8, 128], strides = [1, 1]} : vector<8x512xf32> to vector<8x128xf32>
    %136 = arith.negf %135 : vector<8x128xf32>
    %137 = math.exp %136 : vector<8x128xf32>
    %cst_46 = arith.constant 1.000000e+00 : f32
    %138 = vector.broadcast %cst_46 : f32 to vector<8x128xf32>
    %139 = arith.addf %138, %137 : vector<8x128xf32>
    %140 = arith.divf %138, %139 : vector<8x128xf32>
    %141 = arith.mulf %132, %109 : vector<8x128xf32>
    %142 = arith.mulf %126, %134 : vector<8x128xf32>
    %143 = arith.addf %141, %142 : vector<8x128xf32>
    %144 = math.tanh %143 : vector<8x128xf32>
    %145 = arith.mulf %140, %144 : vector<8x128xf32>
    %146 = arith.index_cast %115 : i32 to index
    %c0_47 = arith.constant 0 : index
    %147 = vector.load %arg5[%146, %c0_47] : memref<64x128xf32, #tpu.memory_space<vmem>>, vector<8x128xf32>
    tpu.vector_store %arg5[%146, %c0_47], %145 {strides = array<i32>} : memref<64x128xf32, #tpu.memory_space<vmem>>, vector<8x128xf32>,
    %c4_i32 = arith.constant 4 : i32
    %c8_i32_48 = arith.constant 8 : i32
    %148 = arith.muli %c4_i32, %c8_i32_48 : i32
    %149 = tpu.assume_multiple %148, 8 : i32
    %150 = arith.index_cast %149 : i32 to index
    %c0_49 = arith.constant 0 : index
    %151 = vector.load %arg8[%150, %c0_49] : memref<64x512xf32, #tpu.memory_space<vmem>>, vector<8x512xf32>
    %c0_50 = arith.constant 0 : index
    %c0_51 = arith.constant 0 : index
    %152 = vector.load %arg3[%c0_50, %c0_51] : memref<128x512xf32, #tpu.memory_space<vmem>>, vector<128x512xf32>
    %cst_52 = arith.constant dense<0.000000e+00> : vector<8x512xf32>
    %153 = tpu.matmul %145, %152, %cst_52 {dimension_numbers = #tpu.dot_dimension_numbers<[1], [0], [0], [1], [0, 0, 1, 1], [], []>} : vector<8x128xf32>, vector<128x512xf32>, vector<8x512xf32> -> vector<8x512xf32>
    %154 = arith.addf %151, %153 : vector<8x512xf32>
    %155 = vector.extract_strided_slice %154 {offsets = [0, 0], sizes = [8, 128], strides = [1, 1]} : vector<8x512xf32> to vector<8x128xf32>
    %156 = arith.negf %155 : vector<8x128xf32>
    %157 = math.exp %156 : vector<8x128xf32>
    %cst_53 = arith.constant 1.000000e+00 : f32
    %158 = vector.broadcast %cst_53 : f32 to vector<8x128xf32>
    %159 = arith.addf %158, %157 : vector<8x128xf32>
    %160 = arith.divf %158, %159 : vector<8x128xf32>
    %161 = vector.extract_strided_slice %154 {offsets = [0, 128], sizes = [8, 128], strides = [1, 1]} : vector<8x512xf32> to vector<8x128xf32>
    %162 = arith.negf %161 : vector<8x128xf32>
    %163 = math.exp %162 : vector<8x128xf32>
    %cst_54 = arith.constant 1.000000e+00 : f32
    %164 = vector.broadcast %cst_54 : f32 to vector<8x128xf32>
    %165 = arith.addf %164, %163 : vector<8x128xf32>
    %166 = arith.divf %164, %165 : vector<8x128xf32>
    %167 = vector.extract_strided_slice %154 {offsets = [0, 256], sizes = [8, 128], strides = [1, 1]} : vector<8x512xf32> to vector<8x128xf32>
    %168 = math.tanh %167 : vector<8x128xf32>
    %169 = vector.extract_strided_slice %154 {offsets = [0, 384], sizes = [8, 128], strides = [1, 1]} : vector<8x512xf32> to vector<8x128xf32>
    %170 = arith.negf %169 : vector<8x128xf32>
    %171 = math.exp %170 : vector<8x128xf32>
    %cst_55 = arith.constant 1.000000e+00 : f32
    %172 = vector.broadcast %cst_55 : f32 to vector<8x128xf32>
    %173 = arith.addf %172, %171 : vector<8x128xf32>
    %174 = arith.divf %172, %173 : vector<8x128xf32>
    %175 = arith.mulf %166, %143 : vector<8x128xf32>
    %176 = arith.mulf %160, %168 : vector<8x128xf32>
    %177 = arith.addf %175, %176 : vector<8x128xf32>
    %178 = math.tanh %177 : vector<8x128xf32>
    %179 = arith.mulf %174, %178 : vector<8x128xf32>
    %180 = arith.index_cast %149 : i32 to index
    %c0_56 = arith.constant 0 : index
    %181 = vector.load %arg5[%180, %c0_56] : memref<64x128xf32, #tpu.memory_space<vmem>>, vector<8x128xf32>
    tpu.vector_store %arg5[%180, %c0_56], %179 {strides = array<i32>} : memref<64x128xf32, #tpu.memory_space<vmem>>, vector<8x128xf32>,
    %c5_i32 = arith.constant 5 : i32
    %c8_i32_57 = arith.constant 8 : i32
    %182 = arith.muli %c5_i32, %c8_i32_57 : i32
    %183 = tpu.assume_multiple %182, 8 : i32
    %184 = arith.index_cast %183 : i32 to index
    %c0_58 = arith.constant 0 : index
    %185 = vector.load %arg8[%184, %c0_58] : memref<64x512xf32, #tpu.memory_space<vmem>>, vector<8x512xf32>
    %c0_59 = arith.constant 0 : index
    %c0_60 = arith.constant 0 : index
    %186 = vector.load %arg3[%c0_59, %c0_60] : memref<128x512xf32, #tpu.memory_space<vmem>>, vector<128x512xf32>
    %cst_61 = arith.constant dense<0.000000e+00> : vector<8x512xf32>
    %187 = tpu.matmul %179, %186, %cst_61 {dimension_numbers = #tpu.dot_dimension_numbers<[1], [0], [0], [1], [0, 0, 1, 1], [], []>} : vector<8x128xf32>, vector<128x512xf32>, vector<8x512xf32> -> vector<8x512xf32>
    %188 = arith.addf %185, %187 : vector<8x512xf32>
    %189 = vector.extract_strided_slice %188 {offsets = [0, 0], sizes = [8, 128], strides = [1, 1]} : vector<8x512xf32> to vector<8x128xf32>
    %190 = arith.negf %189 : vector<8x128xf32>
    %191 = math.exp %190 : vector<8x128xf32>
    %cst_62 = arith.constant 1.000000e+00 : f32
    %192 = vector.broadcast %cst_62 : f32 to vector<8x128xf32>
    %193 = arith.addf %192, %191 : vector<8x128xf32>
    %194 = arith.divf %192, %193 : vector<8x128xf32>
    %195 = vector.extract_strided_slice %188 {offsets = [0, 128], sizes = [8, 128], strides = [1, 1]} : vector<8x512xf32> to vector<8x128xf32>
    %196 = arith.negf %195 : vector<8x128xf32>
    %197 = math.exp %196 : vector<8x128xf32>
    %cst_63 = arith.constant 1.000000e+00 : f32
    %198 = vector.broadcast %cst_63 : f32 to vector<8x128xf32>
    %199 = arith.addf %198, %197 : vector<8x128xf32>
    %200 = arith.divf %198, %199 : vector<8x128xf32>
    %201 = vector.extract_strided_slice %188 {offsets = [0, 256], sizes = [8, 128], strides = [1, 1]} : vector<8x512xf32> to vector<8x128xf32>
    %202 = math.tanh %201 : vector<8x128xf32>
    %203 = vector.extract_strided_slice %188 {offsets = [0, 384], sizes = [8, 128], strides = [1, 1]} : vector<8x512xf32> to vector<8x128xf32>
    %204 = arith.negf %203 : vector<8x128xf32>
    %205 = math.exp %204 : vector<8x128xf32>
    %cst_64 = arith.constant 1.000000e+00 : f32
    %206 = vector.broadcast %cst_64 : f32 to vector<8x128xf32>
    %207 = arith.addf %206, %205 : vector<8x128xf32>
    %208 = arith.divf %206, %207 : vector<8x128xf32>
    %209 = arith.mulf %200, %177 : vector<8x128xf32>
    %210 = arith.mulf %194, %202 : vector<8x128xf32>
    %211 = arith.addf %209, %210 : vector<8x128xf32>
    %212 = math.tanh %211 : vector<8x128xf32>
    %213 = arith.mulf %208, %212 : vector<8x128xf32>
    %214 = arith.index_cast %183 : i32 to index
    %c0_65 = arith.constant 0 : index
    %215 = vector.load %arg5[%214, %c0_65] : memref<64x128xf32, #tpu.memory_space<vmem>>, vector<8x128xf32>
    tpu.vector_store %arg5[%214, %c0_65], %213 {strides = array<i32>} : memref<64x128xf32, #tpu.memory_space<vmem>>, vector<8x128xf32>,
    %c6_i32 = arith.constant 6 : i32
    %c8_i32_66 = arith.constant 8 : i32
    %216 = arith.muli %c6_i32, %c8_i32_66 : i32
    %217 = tpu.assume_multiple %216, 8 : i32
    %218 = arith.index_cast %217 : i32 to index
    %c0_67 = arith.constant 0 : index
    %219 = vector.load %arg8[%218, %c0_67] : memref<64x512xf32, #tpu.memory_space<vmem>>, vector<8x512xf32>
    %c0_68 = arith.constant 0 : index
    %c0_69 = arith.constant 0 : index
    %220 = vector.load %arg3[%c0_68, %c0_69] : memref<128x512xf32, #tpu.memory_space<vmem>>, vector<128x512xf32>
    %cst_70 = arith.constant dense<0.000000e+00> : vector<8x512xf32>
    %221 = tpu.matmul %213, %220, %cst_70 {dimension_numbers = #tpu.dot_dimension_numbers<[1], [0], [0], [1], [0, 0, 1, 1], [], []>} : vector<8x128xf32>, vector<128x512xf32>, vector<8x512xf32> -> vector<8x512xf32>
    %222 = arith.addf %219, %221 : vector<8x512xf32>
    %223 = vector.extract_strided_slice %222 {offsets = [0, 0], sizes = [8, 128], strides = [1, 1]} : vector<8x512xf32> to vector<8x128xf32>
    %224 = arith.negf %223 : vector<8x128xf32>
    %225 = math.exp %224 : vector<8x128xf32>
    %cst_71 = arith.constant 1.000000e+00 : f32
    %226 = vector.broadcast %cst_71 : f32 to vector<8x128xf32>
    %227 = arith.addf %226, %225 : vector<8x128xf32>
    %228 = arith.divf %226, %227 : vector<8x128xf32>
    %229 = vector.extract_strided_slice %222 {offsets = [0, 128], sizes = [8, 128], strides = [1, 1]} : vector<8x512xf32> to vector<8x128xf32>
    %230 = arith.negf %229 : vector<8x128xf32>
    %231 = math.exp %230 : vector<8x128xf32>
    %cst_72 = arith.constant 1.000000e+00 : f32
    %232 = vector.broadcast %cst_72 : f32 to vector<8x128xf32>
    %233 = arith.addf %232, %231 : vector<8x128xf32>
    %234 = arith.divf %232, %233 : vector<8x128xf32>
    %235 = vector.extract_strided_slice %222 {offsets = [0, 256], sizes = [8, 128], strides = [1, 1]} : vector<8x512xf32> to vector<8x128xf32>
    %236 = math.tanh %235 : vector<8x128xf32>
    %237 = vector.extract_strided_slice %222 {offsets = [0, 384], sizes = [8, 128], strides = [1, 1]} : vector<8x512xf32> to vector<8x128xf32>
    %238 = arith.negf %237 : vector<8x128xf32>
    %239 = math.exp %238 : vector<8x128xf32>
    %cst_73 = arith.constant 1.000000e+00 : f32
    %240 = vector.broadcast %cst_73 : f32 to vector<8x128xf32>
    %241 = arith.addf %240, %239 : vector<8x128xf32>
    %242 = arith.divf %240, %241 : vector<8x128xf32>
    %243 = arith.mulf %234, %211 : vector<8x128xf32>
    %244 = arith.mulf %228, %236 : vector<8x128xf32>
    %245 = arith.addf %243, %244 : vector<8x128xf32>
    %246 = math.tanh %245 : vector<8x128xf32>
    %247 = arith.mulf %242, %246 : vector<8x128xf32>
    %248 = arith.index_cast %217 : i32 to index
    %c0_74 = arith.constant 0 : index
    %249 = vector.load %arg5[%248, %c0_74] : memref<64x128xf32, #tpu.memory_space<vmem>>, vector<8x128xf32>
    tpu.vector_store %arg5[%248, %c0_74], %247 {strides = array<i32>} : memref<64x128xf32, #tpu.memory_space<vmem>>, vector<8x128xf32>,
    %c7_i32 = arith.constant 7 : i32
    %c8_i32_75 = arith.constant 8 : i32
    %250 = arith.muli %c7_i32, %c8_i32_75 : i32
    %251 = tpu.assume_multiple %250, 8 : i32
    %252 = arith.index_cast %251 : i32 to index
    %c0_76 = arith.constant 0 : index
    %253 = vector.load %arg8[%252, %c0_76] : memref<64x512xf32, #tpu.memory_space<vmem>>, vector<8x512xf32>
    %c0_77 = arith.constant 0 : index
    %c0_78 = arith.constant 0 : index
    %254 = vector.load %arg3[%c0_77, %c0_78] : memref<128x512xf32, #tpu.memory_space<vmem>>, vector<128x512xf32>
    %cst_79 = arith.constant dense<0.000000e+00> : vector<8x512xf32>
    %255 = tpu.matmul %247, %254, %cst_79 {dimension_numbers = #tpu.dot_dimension_numbers<[1], [0], [0], [1], [0, 0, 1, 1], [], []>} : vector<8x128xf32>, vector<128x512xf32>, vector<8x512xf32> -> vector<8x512xf32>
    %256 = arith.addf %253, %255 : vector<8x512xf32>
    %257 = vector.extract_strided_slice %256 {offsets = [0, 0], sizes = [8, 128], strides = [1, 1]} : vector<8x512xf32> to vector<8x128xf32>
    %258 = arith.negf %257 : vector<8x128xf32>
    %259 = math.exp %258 : vector<8x128xf32>
    %cst_80 = arith.constant 1.000000e+00 : f32
    %260 = vector.broadcast %cst_80 : f32 to vector<8x128xf32>
    %261 = arith.addf %260, %259 : vector<8x128xf32>
    %262 = arith.divf %260, %261 : vector<8x128xf32>
    %263 = vector.extract_strided_slice %256 {offsets = [0, 128], sizes = [8, 128], strides = [1, 1]} : vector<8x512xf32> to vector<8x128xf32>
    %264 = arith.negf %263 : vector<8x128xf32>
    %265 = math.exp %264 : vector<8x128xf32>
    %cst_81 = arith.constant 1.000000e+00 : f32
    %266 = vector.broadcast %cst_81 : f32 to vector<8x128xf32>
    %267 = arith.addf %266, %265 : vector<8x128xf32>
    %268 = arith.divf %266, %267 : vector<8x128xf32>
    %269 = vector.extract_strided_slice %256 {offsets = [0, 256], sizes = [8, 128], strides = [1, 1]} : vector<8x512xf32> to vector<8x128xf32>
    %270 = math.tanh %269 : vector<8x128xf32>
    %271 = vector.extract_strided_slice %256 {offsets = [0, 384], sizes = [8, 128], strides = [1, 1]} : vector<8x512xf32> to vector<8x128xf32>
    %272 = arith.negf %271 : vector<8x128xf32>
    %273 = math.exp %272 : vector<8x128xf32>
    %cst_82 = arith.constant 1.000000e+00 : f32
    %274 = vector.broadcast %cst_82 : f32 to vector<8x128xf32>
    %275 = arith.addf %274, %273 : vector<8x128xf32>
    %276 = arith.divf %274, %275 : vector<8x128xf32>
    %277 = arith.mulf %268, %245 : vector<8x128xf32>
    %278 = arith.mulf %262, %270 : vector<8x128xf32>
    %279 = arith.addf %277, %278 : vector<8x128xf32>
    %280 = math.tanh %279 : vector<8x128xf32>
    %281 = arith.mulf %276, %280 : vector<8x128xf32>
    %282 = arith.index_cast %251 : i32 to index
    %c0_83 = arith.constant 0 : index
    %283 = vector.load %arg5[%282, %c0_83] : memref<64x128xf32, #tpu.memory_space<vmem>>, vector<8x128xf32>
    tpu.vector_store %arg5[%282, %c0_83], %281 {strides = array<i32>} : memref<64x128xf32, #tpu.memory_space<vmem>>, vector<8x128xf32>,
    %c8_i32_84 = arith.constant 8 : i32
    %c0_85 = arith.constant 0 : index
    %c0_86 = arith.constant 0 : index
    %284 = vector.load %arg6[%c0_85, %c0_86] : memref<8x128xf32, #tpu.memory_space<vmem>>, vector<8x128xf32>
    tpu.vector_store %arg6[%c0_85, %c0_86], %281 {strides = array<i32>} : memref<8x128xf32, #tpu.memory_space<vmem>>, vector<8x128xf32>,
    %c0_87 = arith.constant 0 : index
    %c0_88 = arith.constant 0 : index
    %285 = vector.load %arg7[%c0_87, %c0_88] : memref<8x128xf32, #tpu.memory_space<vmem>>, vector<8x128xf32>
    tpu.vector_store %arg7[%c0_87, %c0_88], %279 {strides = array<i32>} : memref<8x128xf32, #tpu.memory_space<vmem>>, vector<8x128xf32>,
    return
  }
  func.func @transform_0(%arg0: i32) -> (i32, i32) {
    %c0_i32 = arith.constant 0 : i32
    %c0_i32_0 = arith.constant 0 : i32
    return %arg0, %c0_i32 : i32, i32
  }
  func.func @transform_1(%arg0: i32) -> (i32, i32) {
    %c0_i32 = arith.constant 0 : i32
    %c0_i32_0 = arith.constant 0 : i32
    %c0_i32_1 = arith.constant 0 : i32
    return %c0_i32, %c0_i32_0 : i32, i32
  }
  func.func @transform_2(%arg0: i32) -> (i32, i32) {
    %c0_i32 = arith.constant 0 : i32
    %c0_i32_0 = arith.constant 0 : i32
    %c0_i32_1 = arith.constant 0 : i32
    return %c0_i32, %c0_i32_0 : i32, i32
  }
  func.func @transform_3(%arg0: i32) -> (i32, i32) {
    %c0_i32 = arith.constant 0 : i32
    %c0_i32_0 = arith.constant 0 : i32
    %c0_i32_1 = arith.constant 0 : i32
    return %c0_i32, %c0_i32_0 : i32, i32
  }
  func.func @transform_4(%arg0: i32) -> (i32, i32) {
    %c0_i32 = arith.constant 0 : i32
    %c0_i32_0 = arith.constant 0 : i32
    return %arg0, %c0_i32 : i32, i32
  }
  func.func @transform_5(%arg0: i32) -> (i32, i32) {
    %c0_i32 = arith.constant 0 : i32
    %c0_i32_0 = arith.constant 0 : i32
    %c0_i32_1 = arith.constant 0 : i32
    return %c0_i32, %c0_i32_0 : i32, i32
  }
  func.func @transform_6(%arg0: i32) -> (i32, i32) {
    %c0_i32 = arith.constant 0 : i32
    %c0_i32_0 = arith.constant 0 : i32
    %c0_i32_1 = arith.constant 0 : i32
    return %c0_i32, %c0_i32_0 : i32, i32
  }
}

module attributes {stable_mosaic.version = 11 : i64} {
  func.func @_lstm_layer_kernel(%arg0: i32, %arg1: memref<64x128xf32, #tpu.memory_space<vmem>>, %arg2: memref<128x512xf32, #tpu.memory_space<vmem>>, %arg3: memref<128x512xf32, #tpu.memory_space<vmem>>, %arg4: memref<1x512xf32, #tpu.memory_space<vmem>>, %arg5: memref<64x128xf32, #tpu.memory_space<vmem>>, %arg6: memref<8x128xf32, #tpu.memory_space<vmem>>, %arg7: memref<8x128xf32, #tpu.memory_space<vmem>>, %arg8: memref<64x512xf32, #tpu.memory_space<vmem>>) attributes {dimension_semantics = [#tpu.dimension_semantics<arbitrary>], iteration_bounds = array<i64: 1>, scalar_prefetch = 0 : i64, scratch_operands = 1 : i64, tpu.core_type = #tpu.core_type<tc>, window_params = [{transform_indices = @transform_0, window_bounds = array<i64: 64, 128>}, {pipeline_mode = #tpu.pipeline_mode<synchronous>, transform_indices = @transform_1, window_bounds = array<i64: 128, 512>}, {pipeline_mode = #tpu.pipeline_mode<synchronous>, transform_indices = @transform_2, window_bounds = array<i64: 128, 512>}, {pipeline_mode = #tpu.pipeline_mode<synchronous>, transform_indices = @transform_3, window_bounds = array<i64: 1, 512>}, {transform_indices = @transform_4, window_bounds = array<i64: 64, 128>}, {pipeline_mode = #tpu.pipeline_mode<synchronous>, transform_indices = @transform_5, window_bounds = array<i64: 8, 128>}, {pipeline_mode = #tpu.pipeline_mode<synchronous>, transform_indices = @transform_6, window_bounds = array<i64: 8, 128>}]} {
    %c0_i32 = arith.constant 0 : i32
    %0 = arith.cmpi eq, %arg0, %c0_i32 : i32
    %1 = arith.extui %0 : i1 to i32
    %c0_i32_0 = arith.constant 0 : i32
    %2 = arith.cmpi ne, %1, %c0_i32_0 : i32
    scf.if %2 {
      %cst_89 = arith.constant 0.000000e+00 : f32
      %286 = vector.broadcast %cst_89 : f32 to vector<8x128xf32>
      %c0_90 = arith.constant 0 : index
      %c0_91 = arith.constant 0 : index
      %287 = vector.load %arg6[%c0_90, %c0_91] : memref<8x128xf32, #tpu.memory_space<vmem>>, vector<8x128xf32>
      tpu.vector_store %arg6[%c0_90, %c0_91], %286 {strides = array<i32>} : memref<8x128xf32, #tpu.memory_space<vmem>>, vector<8x128xf32>,
      %cst_92 = arith.constant 0.000000e+00 : f32
      %288 = vector.broadcast %cst_92 : f32 to vector<8x128xf32>
      %c0_93 = arith.constant 0 : index
      %c0_94 = arith.constant 0 : index
      %289 = vector.load %arg7[%c0_93, %c0_94] : memref<8x128xf32, #tpu.memory_space<vmem>>, vector<8x128xf32>
      tpu.vector_store %arg7[%c0_93, %c0_94], %288 {strides = array<i32>} : memref<8x128xf32, #tpu.memory_space<vmem>>, vector<8x128xf32>,
    } else {
    }
    %c0 = arith.constant 0 : index
    %c0_1 = arith.constant 0 : index
    %3 = vector.load %arg1[%c0, %c0_1] : memref<64x128xf32, #tpu.memory_space<vmem>>, vector<64x128xf32>
    %c0_2 = arith.constant 0 : index
    %c0_3 = arith.constant 0 : index
    %4 = vector.load %arg2[%c0_2, %c0_3] : memref<128x512xf32, #tpu.memory_space<vmem>>, vector<128x512xf32>
    %cst = arith.constant dense<0.000000e+00> : vector<64x512xf32>
    %5 = tpu.matmul %3, %4, %cst {dimension_numbers = #tpu.dot_dimension_numbers<[1], [0], [0], [1], [0, 0, 1, 1], [], []>} : vector<64x128xf32>, vector<128x512xf32>, vector<64x512xf32> -> vector<64x512xf32>
    %c0_4 = arith.constant 0 : index
    %c0_5 = arith.constant 0 : index
    %6 = vector.load %arg4[%c0_4, %c0_5] : memref<1x512xf32, #tpu.memory_space<vmem>>, vector<1x512xf32>
    %7 = vector.broadcast %6 : vector<1x512xf32> to vector<64x512xf32>
    %8 = arith.addf %5, %7 : vector<64x512xf32>
    %c0_6 = arith.constant 0 : index
    %c0_7 = arith.constant 0 : index
    %9 = vector.load %arg8[%c0_6, %c0_7] : memref<64x512xf32, #tpu.memory_space<vmem>>, vector<64x512xf32>
    tpu.vector_store %arg8[%c0_6, %c0_7], %8 {strides = array<i32>} : memref<64x512xf32, #tpu.memory_space<vmem>>, vector<64x512xf32>,
    %c0_8 = arith.constant 0 : index
    %c0_9 = arith.constant 0 : index
    %10 = vector.load %arg6[%c0_8, %c0_9] : memref<8x128xf32, #tpu.memory_space<vmem>>, vector<8x128xf32>
    %c0_10 = arith.constant 0 : index
    %c0_11 = arith.constant 0 : index
    %11 = vector.load %arg7[%c0_10, %c0_11] : memref<8x128xf32, #tpu.memory_space<vmem>>, vector<8x128xf32>
    %c0_i32_12 = arith.constant 0 : i32
    %c8_i32 = arith.constant 8 : i32
    %12 = arith.muli %c0_i32_12, %c8_i32 : i32
    %13 = tpu.assume_multiple %12, 8 : i32
    %14 = arith.index_cast %13 : i32 to index
    %c0_13 = arith.constant 0 : index
    %15 = vector.load %arg8[%14, %c0_13] : memref<64x512xf32, #tpu.memory_space<vmem>>, vector<8x512xf32>
    %c0_14 = arith.constant 0 : index
    %c0_15 = arith.constant 0 : index
    %16 = vector.load %arg3[%c0_14, %c0_15] : memref<128x512xf32, #tpu.memory_space<vmem>>, vector<128x512xf32>
    %cst_16 = arith.constant dense<0.000000e+00> : vector<8x512xf32>
    %17 = tpu.matmul %10, %16, %cst_16 {dimension_numbers = #tpu.dot_dimension_numbers<[1], [0], [0], [1], [0, 0, 1, 1], [], []>} : vector<8x128xf32>, vector<128x512xf32>, vector<8x512xf32> -> vector<8x512xf32>
    %18 = arith.addf %15, %17 : vector<8x512xf32>
    %19 = vector.extract_strided_slice %18 {offsets = [0, 0], sizes = [8, 128], strides = [1, 1]} : vector<8x512xf32> to vector<8x128xf32>
    %20 = arith.negf %19 : vector<8x128xf32>
    %21 = math.exp %20 : vector<8x128xf32>
    %cst_17 = arith.constant 1.000000e+00 : f32
    %22 = vector.broadcast %cst_17 : f32 to vector<8x128xf32>
    %23 = arith.addf %22, %21 : vector<8x128xf32>
    %24 = arith.divf %22, %23 : vector<8x128xf32>
    %25 = vector.extract_strided_slice %18 {offsets = [0, 128], sizes = [8, 128], strides = [1, 1]} : vector<8x512xf32> to vector<8x128xf32>
    %26 = arith.negf %25 : vector<8x128xf32>
    %27 = math.exp %26 : vector<8x128xf32>
    %cst_18 = arith.constant 1.000000e+00 : f32
    %28 = vector.broadcast %cst_18 : f32 to vector<8x128xf32>
    %29 = arith.addf %28, %27 : vector<8x128xf32>
    %30 = arith.divf %28, %29 : vector<8x128xf32>
    %31 = vector.extract_strided_slice %18 {offsets = [0, 256], sizes = [8, 128], strides = [1, 1]} : vector<8x512xf32> to vector<8x128xf32>
    %32 = math.tanh %31 : vector<8x128xf32>
    %33 = vector.extract_strided_slice %18 {offsets = [0, 384], sizes = [8, 128], strides = [1, 1]} : vector<8x512xf32> to vector<8x128xf32>
    %34 = arith.negf %33 : vector<8x128xf32>
    %35 = math.exp %34 : vector<8x128xf32>
    %cst_19 = arith.constant 1.000000e+00 : f32
    %36 = vector.broadcast %cst_19 : f32 to vector<8x128xf32>
    %37 = arith.addf %36, %35 : vector<8x128xf32>
    %38 = arith.divf %36, %37 : vector<8x128xf32>
    %39 = arith.mulf %30, %11 : vector<8x128xf32>
    %40 = arith.mulf %24, %32 : vector<8x128xf32>
    %41 = arith.addf %39, %40 : vector<8x128xf32>
    %42 = math.tanh %41 : vector<8x128xf32>
    %43 = arith.mulf %38, %42 : vector<8x128xf32>
    %44 = arith.index_cast %13 : i32 to index
    %c0_20 = arith.constant 0 : index
    %45 = vector.load %arg5[%44, %c0_20] : memref<64x128xf32, #tpu.memory_space<vmem>>, vector<8x128xf32>
    tpu.vector_store %arg5[%44, %c0_20], %43 {strides = array<i32>} : memref<64x128xf32, #tpu.memory_space<vmem>>, vector<8x128xf32>,
    %c1_i32 = arith.constant 1 : i32
    %c8_i32_21 = arith.constant 8 : i32
    %46 = arith.muli %c1_i32, %c8_i32_21 : i32
    %47 = tpu.assume_multiple %46, 8 : i32
    %48 = arith.index_cast %47 : i32 to index
    %c0_22 = arith.constant 0 : index
    %49 = vector.load %arg8[%48, %c0_22] : memref<64x512xf32, #tpu.memory_space<vmem>>, vector<8x512xf32>
    %c0_23 = arith.constant 0 : index
    %c0_24 = arith.constant 0 : index
    %50 = vector.load %arg3[%c0_23, %c0_24] : memref<128x512xf32, #tpu.memory_space<vmem>>, vector<128x512xf32>
    %cst_25 = arith.constant dense<0.000000e+00> : vector<8x512xf32>
    %51 = tpu.matmul %43, %50, %cst_25 {dimension_numbers = #tpu.dot_dimension_numbers<[1], [0], [0], [1], [0, 0, 1, 1], [], []>} : vector<8x128xf32>, vector<128x512xf32>, vector<8x512xf32> -> vector<8x512xf32>
    %52 = arith.addf %49, %51 : vector<8x512xf32>
    %53 = vector.extract_strided_slice %52 {offsets = [0, 0], sizes = [8, 128], strides = [1, 1]} : vector<8x512xf32> to vector<8x128xf32>
    %54 = arith.negf %53 : vector<8x128xf32>
    %55 = math.exp %54 : vector<8x128xf32>
    %cst_26 = arith.constant 1.000000e+00 : f32
    %56 = vector.broadcast %cst_26 : f32 to vector<8x128xf32>
    %57 = arith.addf %56, %55 : vector<8x128xf32>
    %58 = arith.divf %56, %57 : vector<8x128xf32>
    %59 = vector.extract_strided_slice %52 {offsets = [0, 128], sizes = [8, 128], strides = [1, 1]} : vector<8x512xf32> to vector<8x128xf32>
    %60 = arith.negf %59 : vector<8x128xf32>
    %61 = math.exp %60 : vector<8x128xf32>
    %cst_27 = arith.constant 1.000000e+00 : f32
    %62 = vector.broadcast %cst_27 : f32 to vector<8x128xf32>
    %63 = arith.addf %62, %61 : vector<8x128xf32>
    %64 = arith.divf %62, %63 : vector<8x128xf32>
    %65 = vector.extract_strided_slice %52 {offsets = [0, 256], sizes = [8, 128], strides = [1, 1]} : vector<8x512xf32> to vector<8x128xf32>
    %66 = math.tanh %65 : vector<8x128xf32>
    %67 = vector.extract_strided_slice %52 {offsets = [0, 384], sizes = [8, 128], strides = [1, 1]} : vector<8x512xf32> to vector<8x128xf32>
    %68 = arith.negf %67 : vector<8x128xf32>
    %69 = math.exp %68 : vector<8x128xf32>
    %cst_28 = arith.constant 1.000000e+00 : f32
    %70 = vector.broadcast %cst_28 : f32 to vector<8x128xf32>
    %71 = arith.addf %70, %69 : vector<8x128xf32>
    %72 = arith.divf %70, %71 : vector<8x128xf32>
    %73 = arith.mulf %64, %41 : vector<8x128xf32>
    %74 = arith.mulf %58, %66 : vector<8x128xf32>
    %75 = arith.addf %73, %74 : vector<8x128xf32>
    %76 = math.tanh %75 : vector<8x128xf32>
    %77 = arith.mulf %72, %76 : vector<8x128xf32>
    %78 = arith.index_cast %47 : i32 to index
    %c0_29 = arith.constant 0 : index
    %79 = vector.load %arg5[%78, %c0_29] : memref<64x128xf32, #tpu.memory_space<vmem>>, vector<8x128xf32>
    tpu.vector_store %arg5[%78, %c0_29], %77 {strides = array<i32>} : memref<64x128xf32, #tpu.memory_space<vmem>>, vector<8x128xf32>,
    %c2_i32 = arith.constant 2 : i32
    %c8_i32_30 = arith.constant 8 : i32
    %80 = arith.muli %c2_i32, %c8_i32_30 : i32
    %81 = tpu.assume_multiple %80, 8 : i32
    %82 = arith.index_cast %81 : i32 to index
    %c0_31 = arith.constant 0 : index
    %83 = vector.load %arg8[%82, %c0_31] : memref<64x512xf32, #tpu.memory_space<vmem>>, vector<8x512xf32>
    %c0_32 = arith.constant 0 : index
    %c0_33 = arith.constant 0 : index
    %84 = vector.load %arg3[%c0_32, %c0_33] : memref<128x512xf32, #tpu.memory_space<vmem>>, vector<128x512xf32>
    %cst_34 = arith.constant dense<0.000000e+00> : vector<8x512xf32>
    %85 = tpu.matmul %77, %84, %cst_34 {dimension_numbers = #tpu.dot_dimension_numbers<[1], [0], [0], [1], [0, 0, 1, 1], [], []>} : vector<8x128xf32>, vector<128x512xf32>, vector<8x512xf32> -> vector<8x512xf32>
    %86 = arith.addf %83, %85 : vector<8x512xf32>
    %87 = vector.extract_strided_slice %86 {offsets = [0, 0], sizes = [8, 128], strides = [1, 1]} : vector<8x512xf32> to vector<8x128xf32>
    %88 = arith.negf %87 : vector<8x128xf32>
    %89 = math.exp %88 : vector<8x128xf32>
    %cst_35 = arith.constant 1.000000e+00 : f32
    %90 = vector.broadcast %cst_35 : f32 to vector<8x128xf32>
    %91 = arith.addf %90, %89 : vector<8x128xf32>
    %92 = arith.divf %90, %91 : vector<8x128xf32>
    %93 = vector.extract_strided_slice %86 {offsets = [0, 128], sizes = [8, 128], strides = [1, 1]} : vector<8x512xf32> to vector<8x128xf32>
    %94 = arith.negf %93 : vector<8x128xf32>
    %95 = math.exp %94 : vector<8x128xf32>
    %cst_36 = arith.constant 1.000000e+00 : f32
    %96 = vector.broadcast %cst_36 : f32 to vector<8x128xf32>
    %97 = arith.addf %96, %95 : vector<8x128xf32>
    %98 = arith.divf %96, %97 : vector<8x128xf32>
    %99 = vector.extract_strided_slice %86 {offsets = [0, 256], sizes = [8, 128], strides = [1, 1]} : vector<8x512xf32> to vector<8x128xf32>
    %100 = math.tanh %99 : vector<8x128xf32>
    %101 = vector.extract_strided_slice %86 {offsets = [0, 384], sizes = [8, 128], strides = [1, 1]} : vector<8x512xf32> to vector<8x128xf32>
    %102 = arith.negf %101 : vector<8x128xf32>
    %103 = math.exp %102 : vector<8x128xf32>
    %cst_37 = arith.constant 1.000000e+00 : f32
    %104 = vector.broadcast %cst_37 : f32 to vector<8x128xf32>
    %105 = arith.addf %104, %103 : vector<8x128xf32>
    %106 = arith.divf %104, %105 : vector<8x128xf32>
    %107 = arith.mulf %98, %75 : vector<8x128xf32>
    %108 = arith.mulf %92, %100 : vector<8x128xf32>
    %109 = arith.addf %107, %108 : vector<8x128xf32>
    %110 = math.tanh %109 : vector<8x128xf32>
    %111 = arith.mulf %106, %110 : vector<8x128xf32>
    %112 = arith.index_cast %81 : i32 to index
    %c0_38 = arith.constant 0 : index
    %113 = vector.load %arg5[%112, %c0_38] : memref<64x128xf32, #tpu.memory_space<vmem>>, vector<8x128xf32>
    tpu.vector_store %arg5[%112, %c0_38], %111 {strides = array<i32>} : memref<64x128xf32, #tpu.memory_space<vmem>>, vector<8x128xf32>,
    %c3_i32 = arith.constant 3 : i32
    %c8_i32_39 = arith.constant 8 : i32
    %114 = arith.muli %c3_i32, %c8_i32_39 : i32
    %115 = tpu.assume_multiple %114, 8 : i32
    %116 = arith.index_cast %115 : i32 to index
    %c0_40 = arith.constant 0 : index
    %117 = vector.load %arg8[%116, %c0_40] : memref<64x512xf32, #tpu.memory_space<vmem>>, vector<8x512xf32>
    %c0_41 = arith.constant 0 : index
    %c0_42 = arith.constant 0 : index
    %118 = vector.load %arg3[%c0_41, %c0_42] : memref<128x512xf32, #tpu.memory_space<vmem>>, vector<128x512xf32>
    %cst_43 = arith.constant dense<0.000000e+00> : vector<8x512xf32>
    %119 = tpu.matmul %111, %118, %cst_43 {dimension_numbers = #tpu.dot_dimension_numbers<[1], [0], [0], [1], [0, 0, 1, 1], [], []>} : vector<8x128xf32>, vector<128x512xf32>, vector<8x512xf32> -> vector<8x512xf32>
    %120 = arith.addf %117, %119 : vector<8x512xf32>
    %121 = vector.extract_strided_slice %120 {offsets = [0, 0], sizes = [8, 128], strides = [1, 1]} : vector<8x512xf32> to vector<8x128xf32>
    %122 = arith.negf %121 : vector<8x128xf32>
    %123 = math.exp %122 : vector<8x128xf32>
    %cst_44 = arith.constant 1.000000e+00 : f32
    %124 = vector.broadcast %cst_44 : f32 to vector<8x128xf32>
    %125 = arith.addf %124, %123 : vector<8x128xf32>
    %126 = arith.divf %124, %125 : vector<8x128xf32>
    %127 = vector.extract_strided_slice %120 {offsets = [0, 128], sizes = [8, 128], strides = [1, 1]} : vector<8x512xf32> to vector<8x128xf32>
    %128 = arith.negf %127 : vector<8x128xf32>
    %129 = math.exp %128 : vector<8x128xf32>
    %cst_45 = arith.constant 1.000000e+00 : f32
    %130 = vector.broadcast %cst_45 : f32 to vector<8x128xf32>
    %131 = arith.addf %130, %129 : vector<8x128xf32>
    %132 = arith.divf %130, %131 : vector<8x128xf32>
    %133 = vector.extract_strided_slice %120 {offsets = [0, 256], sizes = [8, 128], strides = [1, 1]} : vector<8x512xf32> to vector<8x128xf32>
    %134 = math.tanh %133 : vector<8x128xf32>
    %135 = vector.extract_strided_slice %120 {offsets = [0, 384], sizes = [8, 128], strides = [1, 1]} : vector<8x512xf32> to vector<8x128xf32>
    %136 = arith.negf %135 : vector<8x128xf32>
    %137 = math.exp %136 : vector<8x128xf32>
    %cst_46 = arith.constant 1.000000e+00 : f32
    %138 = vector.broadcast %cst_46 : f32 to vector<8x128xf32>
    %139 = arith.addf %138, %137 : vector<8x128xf32>
    %140 = arith.divf %138, %139 : vector<8x128xf32>
    %141 = arith.mulf %132, %109 : vector<8x128xf32>
    %142 = arith.mulf %126, %134 : vector<8x128xf32>
    %143 = arith.addf %141, %142 : vector<8x128xf32>
    %144 = math.tanh %143 : vector<8x128xf32>
    %145 = arith.mulf %140, %144 : vector<8x128xf32>
    %146 = arith.index_cast %115 : i32 to index
    %c0_47 = arith.constant 0 : index
    %147 = vector.load %arg5[%146, %c0_47] : memref<64x128xf32, #tpu.memory_space<vmem>>, vector<8x128xf32>
    tpu.vector_store %arg5[%146, %c0_47], %145 {strides = array<i32>} : memref<64x128xf32, #tpu.memory_space<vmem>>, vector<8x128xf32>,
    %c4_i32 = arith.constant 4 : i32
    %c8_i32_48 = arith.constant 8 : i32
    %148 = arith.muli %c4_i32, %c8_i32_48 : i32
    %149 = tpu.assume_multiple %148, 8 : i32
    %150 = arith.index_cast %149 : i32 to index
    %c0_49 = arith.constant 0 : index
    %151 = vector.load %arg8[%150, %c0_49] : memref<64x512xf32, #tpu.memory_space<vmem>>, vector<8x512xf32>
    %c0_50 = arith.constant 0 : index
    %c0_51 = arith.constant 0 : index
    %152 = vector.load %arg3[%c0_50, %c0_51] : memref<128x512xf32, #tpu.memory_space<vmem>>, vector<128x512xf32>
    %cst_52 = arith.constant dense<0.000000e+00> : vector<8x512xf32>
    %153 = tpu.matmul %145, %152, %cst_52 {dimension_numbers = #tpu.dot_dimension_numbers<[1], [0], [0], [1], [0, 0, 1, 1], [], []>} : vector<8x128xf32>, vector<128x512xf32>, vector<8x512xf32> -> vector<8x512xf32>
    %154 = arith.addf %151, %153 : vector<8x512xf32>
    %155 = vector.extract_strided_slice %154 {offsets = [0, 0], sizes = [8, 128], strides = [1, 1]} : vector<8x512xf32> to vector<8x128xf32>
    %156 = arith.negf %155 : vector<8x128xf32>
    %157 = math.exp %156 : vector<8x128xf32>
    %cst_53 = arith.constant 1.000000e+00 : f32
    %158 = vector.broadcast %cst_53 : f32 to vector<8x128xf32>
    %159 = arith.addf %158, %157 : vector<8x128xf32>
    %160 = arith.divf %158, %159 : vector<8x128xf32>
    %161 = vector.extract_strided_slice %154 {offsets = [0, 128], sizes = [8, 128], strides = [1, 1]} : vector<8x512xf32> to vector<8x128xf32>
    %162 = arith.negf %161 : vector<8x128xf32>
    %163 = math.exp %162 : vector<8x128xf32>
    %cst_54 = arith.constant 1.000000e+00 : f32
    %164 = vector.broadcast %cst_54 : f32 to vector<8x128xf32>
    %165 = arith.addf %164, %163 : vector<8x128xf32>
    %166 = arith.divf %164, %165 : vector<8x128xf32>
    %167 = vector.extract_strided_slice %154 {offsets = [0, 256], sizes = [8, 128], strides = [1, 1]} : vector<8x512xf32> to vector<8x128xf32>
    %168 = math.tanh %167 : vector<8x128xf32>
    %169 = vector.extract_strided_slice %154 {offsets = [0, 384], sizes = [8, 128], strides = [1, 1]} : vector<8x512xf32> to vector<8x128xf32>
    %170 = arith.negf %169 : vector<8x128xf32>
    %171 = math.exp %170 : vector<8x128xf32>
    %cst_55 = arith.constant 1.000000e+00 : f32
    %172 = vector.broadcast %cst_55 : f32 to vector<8x128xf32>
    %173 = arith.addf %172, %171 : vector<8x128xf32>
    %174 = arith.divf %172, %173 : vector<8x128xf32>
    %175 = arith.mulf %166, %143 : vector<8x128xf32>
    %176 = arith.mulf %160, %168 : vector<8x128xf32>
    %177 = arith.addf %175, %176 : vector<8x128xf32>
    %178 = math.tanh %177 : vector<8x128xf32>
    %179 = arith.mulf %174, %178 : vector<8x128xf32>
    %180 = arith.index_cast %149 : i32 to index
    %c0_56 = arith.constant 0 : index
    %181 = vector.load %arg5[%180, %c0_56] : memref<64x128xf32, #tpu.memory_space<vmem>>, vector<8x128xf32>
    tpu.vector_store %arg5[%180, %c0_56], %179 {strides = array<i32>} : memref<64x128xf32, #tpu.memory_space<vmem>>, vector<8x128xf32>,
    %c5_i32 = arith.constant 5 : i32
    %c8_i32_57 = arith.constant 8 : i32
    %182 = arith.muli %c5_i32, %c8_i32_57 : i32
    %183 = tpu.assume_multiple %182, 8 : i32
    %184 = arith.index_cast %183 : i32 to index
    %c0_58 = arith.constant 0 : index
    %185 = vector.load %arg8[%184, %c0_58] : memref<64x512xf32, #tpu.memory_space<vmem>>, vector<8x512xf32>
    %c0_59 = arith.constant 0 : index
    %c0_60 = arith.constant 0 : index
    %186 = vector.load %arg3[%c0_59, %c0_60] : memref<128x512xf32, #tpu.memory_space<vmem>>, vector<128x512xf32>
    %cst_61 = arith.constant dense<0.000000e+00> : vector<8x512xf32>
    %187 = tpu.matmul %179, %186, %cst_61 {dimension_numbers = #tpu.dot_dimension_numbers<[1], [0], [0], [1], [0, 0, 1, 1], [], []>} : vector<8x128xf32>, vector<128x512xf32>, vector<8x512xf32> -> vector<8x512xf32>
    %188 = arith.addf %185, %187 : vector<8x512xf32>
    %189 = vector.extract_strided_slice %188 {offsets = [0, 0], sizes = [8, 128], strides = [1, 1]} : vector<8x512xf32> to vector<8x128xf32>
    %190 = arith.negf %189 : vector<8x128xf32>
    %191 = math.exp %190 : vector<8x128xf32>
    %cst_62 = arith.constant 1.000000e+00 : f32
    %192 = vector.broadcast %cst_62 : f32 to vector<8x128xf32>
    %193 = arith.addf %192, %191 : vector<8x128xf32>
    %194 = arith.divf %192, %193 : vector<8x128xf32>
    %195 = vector.extract_strided_slice %188 {offsets = [0, 128], sizes = [8, 128], strides = [1, 1]} : vector<8x512xf32> to vector<8x128xf32>
    %196 = arith.negf %195 : vector<8x128xf32>
    %197 = math.exp %196 : vector<8x128xf32>
    %cst_63 = arith.constant 1.000000e+00 : f32
    %198 = vector.broadcast %cst_63 : f32 to vector<8x128xf32>
    %199 = arith.addf %198, %197 : vector<8x128xf32>
    %200 = arith.divf %198, %199 : vector<8x128xf32>
    %201 = vector.extract_strided_slice %188 {offsets = [0, 256], sizes = [8, 128], strides = [1, 1]} : vector<8x512xf32> to vector<8x128xf32>
    %202 = math.tanh %201 : vector<8x128xf32>
    %203 = vector.extract_strided_slice %188 {offsets = [0, 384], sizes = [8, 128], strides = [1, 1]} : vector<8x512xf32> to vector<8x128xf32>
    %204 = arith.negf %203 : vector<8x128xf32>
    %205 = math.exp %204 : vector<8x128xf32>
    %cst_64 = arith.constant 1.000000e+00 : f32
    %206 = vector.broadcast %cst_64 : f32 to vector<8x128xf32>
    %207 = arith.addf %206, %205 : vector<8x128xf32>
    %208 = arith.divf %206, %207 : vector<8x128xf32>
    %209 = arith.mulf %200, %177 : vector<8x128xf32>
    %210 = arith.mulf %194, %202 : vector<8x128xf32>
    %211 = arith.addf %209, %210 : vector<8x128xf32>
    %212 = math.tanh %211 : vector<8x128xf32>
    %213 = arith.mulf %208, %212 : vector<8x128xf32>
    %214 = arith.index_cast %183 : i32 to index
    %c0_65 = arith.constant 0 : index
    %215 = vector.load %arg5[%214, %c0_65] : memref<64x128xf32, #tpu.memory_space<vmem>>, vector<8x128xf32>
    tpu.vector_store %arg5[%214, %c0_65], %213 {strides = array<i32>} : memref<64x128xf32, #tpu.memory_space<vmem>>, vector<8x128xf32>,
    %c6_i32 = arith.constant 6 : i32
    %c8_i32_66 = arith.constant 8 : i32
    %216 = arith.muli %c6_i32, %c8_i32_66 : i32
    %217 = tpu.assume_multiple %216, 8 : i32
    %218 = arith.index_cast %217 : i32 to index
    %c0_67 = arith.constant 0 : index
    %219 = vector.load %arg8[%218, %c0_67] : memref<64x512xf32, #tpu.memory_space<vmem>>, vector<8x512xf32>
    %c0_68 = arith.constant 0 : index
    %c0_69 = arith.constant 0 : index
    %220 = vector.load %arg3[%c0_68, %c0_69] : memref<128x512xf32, #tpu.memory_space<vmem>>, vector<128x512xf32>
    %cst_70 = arith.constant dense<0.000000e+00> : vector<8x512xf32>
    %221 = tpu.matmul %213, %220, %cst_70 {dimension_numbers = #tpu.dot_dimension_numbers<[1], [0], [0], [1], [0, 0, 1, 1], [], []>} : vector<8x128xf32>, vector<128x512xf32>, vector<8x512xf32> -> vector<8x512xf32>
    %222 = arith.addf %219, %221 : vector<8x512xf32>
    %223 = vector.extract_strided_slice %222 {offsets = [0, 0], sizes = [8, 128], strides = [1, 1]} : vector<8x512xf32> to vector<8x128xf32>
    %224 = arith.negf %223 : vector<8x128xf32>
    %225 = math.exp %224 : vector<8x128xf32>
    %cst_71 = arith.constant 1.000000e+00 : f32
    %226 = vector.broadcast %cst_71 : f32 to vector<8x128xf32>
    %227 = arith.addf %226, %225 : vector<8x128xf32>
    %228 = arith.divf %226, %227 : vector<8x128xf32>
    %229 = vector.extract_strided_slice %222 {offsets = [0, 128], sizes = [8, 128], strides = [1, 1]} : vector<8x512xf32> to vector<8x128xf32>
    %230 = arith.negf %229 : vector<8x128xf32>
    %231 = math.exp %230 : vector<8x128xf32>
    %cst_72 = arith.constant 1.000000e+00 : f32
    %232 = vector.broadcast %cst_72 : f32 to vector<8x128xf32>
    %233 = arith.addf %232, %231 : vector<8x128xf32>
    %234 = arith.divf %232, %233 : vector<8x128xf32>
    %235 = vector.extract_strided_slice %222 {offsets = [0, 256], sizes = [8, 128], strides = [1, 1]} : vector<8x512xf32> to vector<8x128xf32>
    %236 = math.tanh %235 : vector<8x128xf32>
    %237 = vector.extract_strided_slice %222 {offsets = [0, 384], sizes = [8, 128], strides = [1, 1]} : vector<8x512xf32> to vector<8x128xf32>
    %238 = arith.negf %237 : vector<8x128xf32>
    %239 = math.exp %238 : vector<8x128xf32>
    %cst_73 = arith.constant 1.000000e+00 : f32
    %240 = vector.broadcast %cst_73 : f32 to vector<8x128xf32>
    %241 = arith.addf %240, %239 : vector<8x128xf32>
    %242 = arith.divf %240, %241 : vector<8x128xf32>
    %243 = arith.mulf %234, %211 : vector<8x128xf32>
    %244 = arith.mulf %228, %236 : vector<8x128xf32>
    %245 = arith.addf %243, %244 : vector<8x128xf32>
    %246 = math.tanh %245 : vector<8x128xf32>
    %247 = arith.mulf %242, %246 : vector<8x128xf32>
    %248 = arith.index_cast %217 : i32 to index
    %c0_74 = arith.constant 0 : index
    %249 = vector.load %arg5[%248, %c0_74] : memref<64x128xf32, #tpu.memory_space<vmem>>, vector<8x128xf32>
    tpu.vector_store %arg5[%248, %c0_74], %247 {strides = array<i32>} : memref<64x128xf32, #tpu.memory_space<vmem>>, vector<8x128xf32>,
    %c7_i32 = arith.constant 7 : i32
    %c8_i32_75 = arith.constant 8 : i32
    %250 = arith.muli %c7_i32, %c8_i32_75 : i32
    %251 = tpu.assume_multiple %250, 8 : i32
    %252 = arith.index_cast %251 : i32 to index
    %c0_76 = arith.constant 0 : index
    %253 = vector.load %arg8[%252, %c0_76] : memref<64x512xf32, #tpu.memory_space<vmem>>, vector<8x512xf32>
    %c0_77 = arith.constant 0 : index
    %c0_78 = arith.constant 0 : index
    %254 = vector.load %arg3[%c0_77, %c0_78] : memref<128x512xf32, #tpu.memory_space<vmem>>, vector<128x512xf32>
    %cst_79 = arith.constant dense<0.000000e+00> : vector<8x512xf32>
    %255 = tpu.matmul %247, %254, %cst_79 {dimension_numbers = #tpu.dot_dimension_numbers<[1], [0], [0], [1], [0, 0, 1, 1], [], []>} : vector<8x128xf32>, vector<128x512xf32>, vector<8x512xf32> -> vector<8x512xf32>
    %256 = arith.addf %253, %255 : vector<8x512xf32>
    %257 = vector.extract_strided_slice %256 {offsets = [0, 0], sizes = [8, 128], strides = [1, 1]} : vector<8x512xf32> to vector<8x128xf32>
    %258 = arith.negf %257 : vector<8x128xf32>
    %259 = math.exp %258 : vector<8x128xf32>
    %cst_80 = arith.constant 1.000000e+00 : f32
    %260 = vector.broadcast %cst_80 : f32 to vector<8x128xf32>
    %261 = arith.addf %260, %259 : vector<8x128xf32>
    %262 = arith.divf %260, %261 : vector<8x128xf32>
    %263 = vector.extract_strided_slice %256 {offsets = [0, 128], sizes = [8, 128], strides = [1, 1]} : vector<8x512xf32> to vector<8x128xf32>
    %264 = arith.negf %263 : vector<8x128xf32>
    %265 = math.exp %264 : vector<8x128xf32>
    %cst_81 = arith.constant 1.000000e+00 : f32
    %266 = vector.broadcast %cst_81 : f32 to vector<8x128xf32>
    %267 = arith.addf %266, %265 : vector<8x128xf32>
    %268 = arith.divf %266, %267 : vector<8x128xf32>
    %269 = vector.extract_strided_slice %256 {offsets = [0, 256], sizes = [8, 128], strides = [1, 1]} : vector<8x512xf32> to vector<8x128xf32>
    %270 = math.tanh %269 : vector<8x128xf32>
    %271 = vector.extract_strided_slice %256 {offsets = [0, 384], sizes = [8, 128], strides = [1, 1]} : vector<8x512xf32> to vector<8x128xf32>
    %272 = arith.negf %271 : vector<8x128xf32>
    %273 = math.exp %272 : vector<8x128xf32>
    %cst_82 = arith.constant 1.000000e+00 : f32
    %274 = vector.broadcast %cst_82 : f32 to vector<8x128xf32>
    %275 = arith.addf %274, %273 : vector<8x128xf32>
    %276 = arith.divf %274, %275 : vector<8x128xf32>
    %277 = arith.mulf %268, %245 : vector<8x128xf32>
    %278 = arith.mulf %262, %270 : vector<8x128xf32>
    %279 = arith.addf %277, %278 : vector<8x128xf32>
    %280 = math.tanh %279 : vector<8x128xf32>
    %281 = arith.mulf %276, %280 : vector<8x128xf32>
    %282 = arith.index_cast %251 : i32 to index
    %c0_83 = arith.constant 0 : index
    %283 = vector.load %arg5[%282, %c0_83] : memref<64x128xf32, #tpu.memory_space<vmem>>, vector<8x128xf32>
    tpu.vector_store %arg5[%282, %c0_83], %281 {strides = array<i32>} : memref<64x128xf32, #tpu.memory_space<vmem>>, vector<8x128xf32>,
    %c8_i32_84 = arith.constant 8 : i32
    %c0_85 = arith.constant 0 : index
    %c0_86 = arith.constant 0 : index
    %284 = vector.load %arg6[%c0_85, %c0_86] : memref<8x128xf32, #tpu.memory_space<vmem>>, vector<8x128xf32>
    tpu.vector_store %arg6[%c0_85, %c0_86], %281 {strides = array<i32>} : memref<8x128xf32, #tpu.memory_space<vmem>>, vector<8x128xf32>,
    %c0_87 = arith.constant 0 : index
    %c0_88 = arith.constant 0 : index
    %285 = vector.load %arg7[%c0_87, %c0_88] : memref<8x128xf32, #tpu.memory_space<vmem>>, vector<8x128xf32>
    tpu.vector_store %arg7[%c0_87, %c0_88], %279 {strides = array<i32>} : memref<8x128xf32, #tpu.memory_space<vmem>>, vector<8x128xf32>,
    return
  }
  func.func @transform_0(%arg0: i32) -> (i32, i32) {
    %c0_i32 = arith.constant 0 : i32
    %c0_i32_0 = arith.constant 0 : i32
    return %arg0, %c0_i32 : i32, i32
  }
  func.func @transform_1(%arg0: i32) -> (i32, i32) {
    %c0_i32 = arith.constant 0 : i32
    %c0_i32_0 = arith.constant 0 : i32
    %c0_i32_1 = arith.constant 0 : i32
    return %c0_i32, %c0_i32_0 : i32, i32
  }
  func.func @transform_2(%arg0: i32) -> (i32, i32) {
    %c0_i32 = arith.constant 0 : i32
    %c0_i32_0 = arith.constant 0 : i32
    %c0_i32_1 = arith.constant 0 : i32
    return %c0_i32, %c0_i32_0 : i32, i32
  }
  func.func @transform_3(%arg0: i32) -> (i32, i32) {
    %c0_i32 = arith.constant 0 : i32
    %c0_i32_0 = arith.constant 0 : i32
    %c0_i32_1 = arith.constant 0 : i32
    return %c0_i32, %c0_i32_0 : i32, i32
  }
  func.func @transform_4(%arg0: i32) -> (i32, i32) {
    %c0_i32 = arith.constant 0 : i32
    %c0_i32_0 = arith.constant 0 : i32
    return %arg0, %c0_i32 : i32, i32
  }
  func.func @transform_5(%arg0: i32) -> (i32, i32) {
    %c0_i32 = arith.constant 0 : i32
    %c0_i32_0 = arith.constant 0 : i32
    %c0_i32_1 = arith.constant 0 : i32
    return %c0_i32, %c0_i32_0 : i32, i32
  }
  func.func @transform_6(%arg0: i32) -> (i32, i32) {
    %c0_i32 = arith.constant 0 : i32
    %c0_i32_0 = arith.constant 0 : i32
    %c0_i32_1 = arith.constant 0 : i32
    return %c0_i32, %c0_i32_0 : i32, i32
  }
}

</mosaic_0001>

<llo_original>
// kernel: a_call__.2
$region0: #{a_call__.2}
  #allocation0 [shape = 'u32[]', space=smem, size = 0x4, offset = 0x4, fixed_abs, tag = 'smem constant byte address 0x4 - core index']
  #allocation1 [shape = 'u32[144,128]{1,0:T(1,128)}', space=vmem, size = 0x12000, scoped, tag = 'internal scratch']
  #allocation2 [shape = 'f32[64,512]{1,0:T(8,128)}', space=vmem, size = 0x20000, scoped, tag = 'scratch operand']
  %s0 = inlined_call_operand.vmem [shape: f32[64,8], index: 0, kind: input, shape index: {}]
  %s1 = inlined_call_operand.vmem [shape: f32[8,512], index: 1, kind: input, shape index: {}]
  %s2 = inlined_call_operand.hbm [shape: f32[128,512], index: 2, kind: input, shape index: {}]
  %s3 = inlined_call_operand.vmem [shape: f32[1,512], index: 3, kind: input, shape index: {}]
  %s4 = inlined_call_operand.vmem [shape: f32[64,128], index: 4, kind: output, shape index: {0}]
  %s5 = inlined_call_operand.vmem [shape: f32[8,128], index: 5, kind: output, shape index: {1}]
  %s6 = inlined_call_operand.vmem [shape: f32[8,128], index: 6, kind: output, shape index: {2}]
  %7 = xla_tuple %s4, %s5, %s6
  %s8 = sld [smem:[#allocation0]]
  $region50: #{a_call__.2} parent=0
    _
  %s10 = ssub.s32 1, %s8
  %s11 = scalar_select 0, %s10, %s8
  $region1: #{a_call__.2} parent=0
    #allocation3 [shape = 'u8[262144]{0}', space=vmem, size = 0x40000, scoped, tag = 'input window, operand 2, single buffered']
    #allocation4 [shape = 's32[1]{0}', space=sflag, size = 0x4, scoped, tag = 'scoped memory for a_call__.2']
    %12 = vsyncpa [#allocation4], 0
    // Predicated region
    $region2: #{a_call__.2} parent=1 // pred_check
      _
    $region3: #{a_call__.2} parent=1 // pred_check_branch
      %14 = sbr.rel (0) target = $region5
    $region4: #{a_call__.2} parent=1 // pred_region
      _
    $region5: #{a_call__.2} parent=1 // pred_fallthru
      _
    // Predicated region
    $region6: #{a_call__.2} parent=1 // pred_check
      _
    $region7: #{a_call__.2} parent=1 // pred_check_branch
      %16 = sbr.rel (0) target = $region9
    $region8: #{a_call__.2} parent=1 // pred_region
      _
    $region9: #{a_call__.2} parent=1 // pred_fallthru
      _
    // Predicated region
    $region10: #{a_call__.2} parent=1 // pred_check
      _
    $region11: #{a_call__.2} parent=1 // pred_check_branch
      %18 = sbr.rel (0) target = $region13
    $region12: #{a_call__.2} parent=1 // pred_region
      %s20 = ssub.s32 8192, 8192
      %21 = vsyncadd [#allocation4], %s20
      %s22 = sshll.u32 [#allocation3], 4
      %s23 = int_to_ptr.vmem [resolvable:$true] %s22
      %28 = dma.hbm_to_vmem [thread:$0]  %s2, 8192, %s23, [#allocation4], 512, 512, 32
    $region13: #{a_call__.2} parent=1 // pred_fallthru
      _
    // Predicated region
    $region14: #{a_call__.2} parent=1 // pred_check
      _
    $region15: #{a_call__.2} parent=1 // pred_check_branch
      %30 = sbr.rel (0) target = $region17
    $region16: #{a_call__.2} parent=1 // pred_region
      _
    $region17: #{a_call__.2} parent=1 // pred_fallthru
      _
    // Predicated region
    $region18: #{a_call__.2} parent=1 // pred_check
      _
    $region19: #{a_call__.2} parent=1 // pred_check_branch
      %32 = sbr.rel (0) target = $region21
    $region20: #{a_call__.2} parent=1 // pred_region
      %33 = dma.done [#allocation4], 8192
    $region21: #{a_call__.2} parent=1 // pred_fallthru
      _
    %p34 = scmp.eq.s32.totalorder 0, 0
    // Predicated region
    $region22: #{a_call__.2} parent=1 // pred_check
      %p35 = pneg %p34
    $region23: #{a_call__.2} parent=1 // pred_check_branch
      %37 = sbr.rel (%p35) target = $region25
    $region24: #{a_call__.2} parent=1 // pred_region
      %38 = vst [vmem:[%s5] sm:$0xff] 0.0
      %39 = vst [vmem:[%s6] sm:$0xff] 0.0
    $region25: #{a_call__.2} parent=1 // pred_fallthru
      _
    %v40 = vld [vmem:[%s0] sm:$0xff]
    %v41 = vld [vmem:[%s0 + $0x8] sm:$0xff]
    %v42 = vld [vmem:[%s0 + $0x10] sm:$0xff]
    %v43 = vld [vmem:[%s0 + $0x18] sm:$0xff]
    %v44 = vld [vmem:[%s0 + $0x20] sm:$0xff]
    %v45 = vld [vmem:[%s0 + $0x28] sm:$0xff]
    %v46 = vld [vmem:[%s0 + $0x30] sm:$0xff]
    %v47 = vld [vmem:[%s0 + $0x38] sm:$0xff]
    %v48 = vld [vmem:[%s1] sm:$0xff]
    %v49 = vld [vmem:[%s1 + $0x8] sm:$0xff]
    %v50 = vld [vmem:[%s1 + $0x10] sm:$0xff]
    %v51 = vld [vmem:[%s1 + $0x18] sm:$0xff]
    %v52 = vld [vmem:[%s3] sm:$0xf]
    %v54 = vlaneseq
    %v55 = vshrl.u32 %v54, 7
    %v56 = vsub.s32 0, %v55
    %v57 = vrot.slane %v52, %v56
    %v58 = vlaneseq
    %v59 = vshrl.u32 %v58, 7
    %v60 = vsub.s32 1, %v59
    %v61 = vrot.slane %v52, %v60
    %v62 = vlaneseq
    %v63 = vshrl.u32 %v62, 7
    %v64 = vsub.s32 2, %v63
    %v65 = vrot.slane %v52, %v64
    %v66 = vlaneseq
    %v67 = vshrl.u32 %v66, 7
    %v68 = vsub.s32 3, %v67
    %v69 = vrot.slane %v52, %v68
    %vm74 = vcmask 64512
    %v76 = vsel %vm74, %v40, 0
    %v79 = vsel %vm74, %v41, 0
    %v82 = vsel %vm74, %v42, 0
    %v85 = vsel %vm74, %v43, 0
    %v88 = vsel %vm74, %v44, 0
    %v91 = vsel %vm74, %v45, 0
    %v94 = vsel %vm74, %v46, 0
    %v97 = vsel %vm74, %v47, 0
    %99 = vmatprep.subr.mxu0 0.0
    %100 = vmatpush1.msra.mxu0 0.0
    %101 = vmatprep.subr.mxu0 0.0
    %102 = vmatpush1.msra.mxu0 0.0
    %103 = vmatprep.subr.mxu0 0.0
    %104 = vmatpush1.msra.mxu0 0.0
    %105 = vmatprep.subr.mxu0 0.0
    %106 = vmatpush1.msra.mxu0 0.0
    %107 = vmatprep.subr.mxu0 0.0
    %108 = vmatpush1.msra.mxu0 0.0
    %109 = vmatprep.subr.mxu0 0.0
    %110 = vmatpush1.msra.mxu0 0.0
    %111 = vmatprep.subr.mxu0 0.0
    %112 = vmatpush1.msra.mxu0 0.0
    %113 = vmatprep.subr.mxu0 0.0
    %114 = vmatpush1.msra.mxu0 0.0
    %115 = vmatprep.subr.mxu0 0.0
    %116 = vmatpush1.msra.mxu0 0.0
    %117 = vmatprep.subr.mxu0 0.0
    %118 = vmatpush1.msra.mxu0 0.0
    %119 = vmatprep.subr.mxu0 0.0
    %120 = vmatpush1.msra.mxu0 0.0
    %121 = vmatprep.subr.mxu0 0.0
    %122 = vmatpush1.msra.mxu0 0.0
    %123 = vmatprep.subr.mxu0 0.0
    %124 = vmatpush1.msra.mxu0 0.0
    %125 = vmatprep.subr.mxu0 0.0
    %126 = vmatpush1.msra.mxu0 0.0
    %127 = vmatprep.subr.mxu0 0.0
    %128 = vmatpush1.msra.mxu0 0.0
    %129 = vmatprep.subr.mxu0 %v49
    %130 = vmatpush1.msra.mxu0 %v48
    %131 = vmatprep.subr.mxu0 0.0
    %132 = vmatpush2.msra.mxu0 0.0
    %133 = vmatprep.subr.mxu0 0.0
    %134 = vmatpush2.msra.mxu0 0.0
    %135 = vmatprep.subr.mxu0 0.0
    %136 = vmatpush2.msra.mxu0 0.0
    %137 = vmatprep.subr.mxu0 0.0
    %138 = vmatpush2.msra.mxu0 0.0
    %139 = vmatprep.subr.mxu0 0.0
    %140 = vmatpush2.msra.mxu0 0.0
    %141 = vmatprep.subr.mxu0 0.0
    %142 = vmatpush2.msra.mxu0 0.0
    %143 = vmatprep.subr.mxu0 0.0
    %144 = vmatpush2.msra.mxu0 0.0
    %145 = vmatprep.subr.mxu0 0.0
    %146 = vmatpush2.msra.mxu0 0.0
    %147 = vmatprep.subr.mxu0 0.0
    %148 = vmatpush2.msra.mxu0 0.0
    %149 = vmatprep.subr.mxu0 0.0
    %150 = vmatpush2.msra.mxu0 0.0
    %151 = vmatprep.subr.mxu0 0.0
    %152 = vmatpush2.msra.mxu0 0.0
    %153 = vmatprep.subr.mxu0 0.0
    %154 = vmatpush2.msra.mxu0 0.0
    %155 = vmatprep.subr.mxu0 0.0
    %156 = vmatpush2.msra.mxu0 0.0
    %157 = vmatprep.subr.mxu0 0.0
    %158 = vmatpush2.msra.mxu0 0.0
    %159 = vmatprep.subr.mxu0 0.0
    %160 = vmatpush2.msra.mxu0 0.0
    %161 = vmatprep.subr.mxu0 0.0
    %162 = vmatpush2.msra.mxu0 0.0
    %163 = vmatprep.mubr.f32.mxu0 0.0
    %164 = vmatmul.mubr.f32.gmra.mxu0 %v76
    %v165 = vpop.f32.mrf.mxu0
    %v166 = vadd.f32 %v57, %v165
    %v167 = vpop.f32.mrf.mxu0
    %v168 = vadd.f32 %v61, %v167
    %169 = vmatprep.mubr.f32.mxu0 0.0
    %170 = vmatmul.mubr.f32.gmra.mxu0 %v79
    %v171 = vpop.f32.mrf.mxu0
    %v172 = vadd.f32 %v57, %v171
    %v173 = vpop.f32.mrf.mxu0
    %v174 = vadd.f32 %v61, %v173
    %175 = vmatprep.mubr.f32.mxu0 0.0
    %176 = vmatmul.mubr.f32.gmra.mxu0 %v82
    %v177 = vpop.f32.mrf.mxu0
    %v178 = vadd.f32 %v57, %v177
    %v179 = vpop.f32.mrf.mxu0
    %v180 = vadd.f32 %v61, %v179
    %181 = vmatprep.mubr.f32.mxu0 0.0
    %182 = vmatmul.mubr.f32.gmra.mxu0 %v85
    %v183 = vpop.f32.mrf.mxu0
    %v184 = vadd.f32 %v57, %v183
    %v185 = vpop.f32.mrf.mxu0
    %v186 = vadd.f32 %v61, %v185
    %187 = vmatprep.mubr.f32.mxu0 0.0
    %188 = vmatmul.mubr.f32.gmra.mxu0 %v88
    %v189 = vpop.f32.mrf.mxu0
    %v190 = vadd.f32 %v57, %v189
    %v191 = vpop.f32.mrf.mxu0
    %v192 = vadd.f32 %v61, %v191
    %193 = vmatprep.mubr.f32.mxu0 0.0
    %194 = vmatmul.mubr.f32.gmra.mxu0 %v91
    %v195 = vpop.f32.mrf.mxu0
    %v196 = vadd.f32 %v57, %v195
    %v197 = vpop.f32.mrf.mxu0
    %v198 = vadd.f32 %v61, %v197
    %199 = vmatprep.mubr.f32.mxu0 0.0
    %200 = vmatmul.mubr.f32.gmra.mxu0 %v94
    %v201 = vpop.f32.mrf.mxu0
    %v202 = vadd.f32 %v57, %v201
    %v203 = vpop.f32.mrf.mxu0
    %v204 = vadd.f32 %v61, %v203
    %205 = vmatprep.mubr.f32.mxu0 0.0
    %206 = vmatmul.mubr.f32.gmra.mxu0 %v97
    %v207 = vpop.f32.mrf.mxu0
    %v208 = vadd.f32 %v57, %v207
    %v209 = vpop.f32.mrf.mxu0
    %v210 = vadd.f32 %v61, %v209
    %211 = vdwg.mxu0
    %212 = vmatprep.subr.mxu0 0.0
    %213 = vmatpush1.msra.mxu0 0.0
    %214 = vmatprep.subr.mxu0 0.0
    %215 = vmatpush1.msra.mxu0 0.0
    %216 = vmatprep.subr.mxu0 0.0
    %217 = vmatpush1.msra.mxu0 0.0
    %218 = vmatprep.subr.mxu0 0.0
    %219 = vmatpush1.msra.mxu0 0.0
    %220 = vmatprep.subr.mxu0 0.0
    %221 = vmatpush1.msra.mxu0 0.0
    %222 = vmatprep.subr.mxu0 0.0
    %223 = vmatpush1.msra.mxu0 0.0
    %224 = vmatprep.subr.mxu0 0.0
    %225 = vmatpush1.msra.mxu0 0.0
    %226 = vmatprep.subr.mxu0 0.0
    %227 = vmatpush1.msra.mxu0 0.0
    %228 = vmatprep.subr.mxu0 0.0
    %229 = vmatpush1.msra.mxu0 0.0
    %230 = vmatprep.subr.mxu0 0.0
    %231 = vmatpush1.msra.mxu0 0.0
    %232 = vmatprep.subr.mxu0 0.0
    %233 = vmatpush1.msra.mxu0 0.0
    %234 = vmatprep.subr.mxu0 0.0
    %235 = vmatpush1.msra.mxu0 0.0
    %236 = vmatprep.subr.mxu0 0.0
    %237 = vmatpush1.msra.mxu0 0.0
    %238 = vmatprep.subr.mxu0 0.0
    %239 = vmatpush1.msra.mxu0 0.0
    %240 = vmatprep.subr.mxu0 0.0
    %241 = vmatpush1.msra.mxu0 0.0
    %242 = vmatprep.subr.mxu0 %v51
    %243 = vmatpush1.msra.mxu0 %v50
    %244 = vmatprep.subr.mxu0 0.0
    %245 = vmatpush2.msra.mxu0 0.0
    %246 = vmatprep.subr.mxu0 0.0
    %247 = vmatpush2.msra.mxu0 0.0
    %248 = vmatprep.subr.mxu0 0.0
    %249 = vmatpush2.msra.mxu0 0.0
    %250 = vmatprep.subr.mxu0 0.0
    %251 = vmatpush2.msra.mxu0 0.0
    %252 = vmatprep.subr.mxu0 0.0
    %253 = vmatpush2.msra.mxu0 0.0
    %254 = vmatprep.subr.mxu0 0.0
    %255 = vmatpush2.msra.mxu0 0.0
    %256 = vmatprep.subr.mxu0 0.0
    %257 = vmatpush2.msra.mxu0 0.0
    %258 = vmatprep.subr.mxu0 0.0
    %259 = vmatpush2.msra.mxu0 0.0
    %260 = vmatprep.subr.mxu0 0.0
    %261 = vmatpush2.msra.mxu0 0.0
    %262 = vmatprep.subr.mxu0 0.0
    %263 = vmatpush2.msra.mxu0 0.0
    %264 = vmatprep.subr.mxu0 0.0
    %265 = vmatpush2.msra.mxu0 0.0
    %266 = vmatprep.subr.mxu0 0.0
    %267 = vmatpush2.msra.mxu0 0.0
    %268 = vmatprep.subr.mxu0 0.0
    %269 = vmatpush2.msra.mxu0 0.0
    %270 = vmatprep.subr.mxu0 0.0
    %271 = vmatpush2.msra.mxu0 0.0
    %272 = vmatprep.subr.mxu0 0.0
    %273 = vmatpush2.msra.mxu0 0.0
    %274 = vmatprep.subr.mxu0 0.0
    %275 = vmatpush2.msra.mxu0 0.0
    %276 = vmatprep.mubr.f32.mxu0 0.0
    %277 = vmatmul.mubr.f32.gmra.mxu0 %v76
    %v278 = vpop.f32.mrf.mxu0
    %v279 = vadd.f32 %v65, %v278
    %v280 = vpop.f32.mrf.mxu0
    %v281 = vadd.f32 %v69, %v280
    %282 = vmatprep.mubr.f32.mxu0 0.0
    %283 = vmatmul.mubr.f32.gmra.mxu0 %v79
    %v284 = vpop.f32.mrf.mxu0
    %v285 = vadd.f32 %v65, %v284
    %v286 = vpop.f32.mrf.mxu0
    %v287 = vadd.f32 %v69, %v286
    %288 = vmatprep.mubr.f32.mxu0 0.0
    %289 = vmatmul.mubr.f32.gmra.mxu0 %v82
    %v290 = vpop.f32.mrf.mxu0
    %v291 = vadd.f32 %v65, %v290
    %v292 = vpop.f32.mrf.mxu0
    %v293 = vadd.f32 %v69, %v292
    %294 = vmatprep.mubr.f32.mxu0 0.0
    %295 = vmatmul.mubr.f32.gmra.mxu0 %v85
    %v296 = vpop.f32.mrf.mxu0
    %v297 = vadd.f32 %v65, %v296
    %v298 = vpop.f32.mrf.mxu0
    %v299 = vadd.f32 %v69, %v298
    %300 = vmatprep.mubr.f32.mxu0 0.0
    %301 = vmatmul.mubr.f32.gmra.mxu0 %v88
    %v302 = vpop.f32.mrf.mxu0
    %v303 = vadd.f32 %v65, %v302
    %v304 = vpop.f32.mrf.mxu0
    %v305 = vadd.f32 %v69, %v304
    %306 = vmatprep.mubr.f32.mxu0 0.0
    %307 = vmatmul.mubr.f32.gmra.mxu0 %v91
    %v308 = vpop.f32.mrf.mxu0
    %v309 = vadd.f32 %v65, %v308
    %v310 = vpop.f32.mrf.mxu0
    %v311 = vadd.f32 %v69, %v310
    %312 = vmatprep.mubr.f32.mxu0 0.0
    %313 = vmatmul.mubr.f32.gmra.mxu0 %v94
    %v314 = vpop.f32.mrf.mxu0
    %v315 = vadd.f32 %v65, %v314
    %v316 = vpop.f32.mrf.mxu0
    %v317 = vadd.f32 %v69, %v316
    %318 = vmatprep.mubr.f32.mxu0 0.0
    %319 = vmatmul.mubr.f32.gmra.mxu0 %v97
    %v320 = vpop.f32.mrf.mxu0
    %v321 = vadd.f32 %v65, %v320
    %v322 = vpop.f32.mrf.mxu0
    %v323 = vadd.f32 %v69, %v322
    %324 = vdwg.mxu0
    %325 = vst [vmem:[#allocation2] sm:$0xff] %v166
    %326 = vst [vmem:[#allocation2 + $0x8] sm:$0xff] %v168
    %327 = vst [vmem:[#allocation2 + $0x10] sm:$0xff] %v279
    %328 = vst [vmem:[#allocation2 + $0x18] sm:$0xff] %v281
    %329 = vst [vmem:[#allocation2 + $0x20] sm:$0xff] %v172
    %330 = vst [vmem:[#allocation2 + $0x28] sm:$0xff] %v174
    %331 = vst [vmem:[#allocation2 + $0x30] sm:$0xff] %v285
    %332 = vst [vmem:[#allocation2 + $0x38] sm:$0xff] %v287
    %333 = vst [vmem:[#allocation2 + $0x40] sm:$0xff] %v178
    %334 = vst [vmem:[#allocation2 + $0x48] sm:$0xff] %v180
    %335 = vst [vmem:[#allocation2 + $0x50] sm:$0xff] %v291
    %336 = vst [vmem:[#allocation2 + $0x58] sm:$0xff] %v293
    %337 = vst [vmem:[#allocation2 + $0x60] sm:$0xff] %v184
    %338 = vst [vmem:[#allocation2 + $0x68] sm:$0xff] %v186
    %339 = vst [vmem:[#allocation2 + $0x70] sm:$0xff] %v297
    %340 = vst [vmem:[#allocation2 + $0x78] sm:$0xff] %v299
    %341 = vst [vmem:[#allocation2 + $0x80] sm:$0xff] %v190
    %342 = vst [vmem:[#allocation2 + $0x88] sm:$0xff] %v192
    %343 = vst [vmem:[#allocation2 + $0x90] sm:$0xff] %v303
    %344 = vst [vmem:[#allocation2 + $0x98] sm:$0xff] %v305
    %345 = vst [vmem:[#allocation2 + $0xa0] sm:$0xff] %v196
    %346 = vst [vmem:[#allocation2 + $0xa8] sm:$0xff] %v198
    %347 = vst [vmem:[#allocation2 + $0xb0] sm:$0xff] %v309
    %348 = vst [vmem:[#allocation2 + $0xb8] sm:$0xff] %v311
    %349 = vst [vmem:[#allocation2 + $0xc0] sm:$0xff] %v202
    %350 = vst [vmem:[#allocation2 + $0xc8] sm:$0xff] %v204
    %351 = vst [vmem:[#allocation2 + $0xd0] sm:$0xff] %v315
    %352 = vst [vmem:[#allocation2 + $0xd8] sm:$0xff] %v317
    %353 = vst [vmem:[#allocation2 + $0xe0] sm:$0xff] %v208
    %354 = vst [vmem:[#allocation2 + $0xe8] sm:$0xff] %v210
    %355 = vst [vmem:[#allocation2 + $0xf0] sm:$0xff] %v321
    %356 = vst [vmem:[#allocation2 + $0xf8] sm:$0xff] %v323
    %v357 = vld [vmem:[%s5] sm:$0xff]
    %v358 = vld [vmem:[%s6] sm:$0xff]
    %s359 = smul.u32 0, 4
    %s360 = smul.addr %s359, 8
    %s361 = scalar_lea.vmem [#allocation2], %s360
    %v362 = vld [vmem:[%s361] sm:$0xff]
    %v363 = vld [vmem:[%s361 + $0x8] sm:$0xff]
    %v364 = vld [vmem:[%s361 + $0x10] sm:$0xff]
    %v365 = vld [vmem:[%s361 + $0x18] sm:$0xff]
    %v366 = vld [vmem:[#allocation3] sm:$0xff]
    %v367 = vld [vmem:[#allocation3 + $0x8] sm:$0xff]
    %v368 = vld [vmem:[#allocation3 + $0x10] sm:$0xff]
    %v369 = vld [vmem:[#allocation3 + $0x18] sm:$0xff]
    %v370 = vld [vmem:[#allocation3 + $0x20] sm:$0xff]
    %v371 = vld [vmem:[#allocation3 + $0x28] sm:$0xff]
    %v372 = vld [vmem:[#allocation3 + $0x30] sm:$0xff]
    %v373 = vld [vmem:[#allocation3 + $0x38] sm:$0xff]
    %v374 = vld [vmem:[#allocation3 + $0x40] sm:$0xff]
    %v375 = vld [vmem:[#allocation3 + $0x48] sm:$0xff]
    %v376 = vld [vmem:[#allocation3 + $0x50] sm:$0xff]
    %v377 = vld [vmem:[#allocation3 + $0x58] sm:$0xff]
    %v378 = vld [vmem:[#allocation3 + $0x60] sm:$0xff]
    %v379 = vld [vmem:[#allocation3 + $0x68] sm:$0xff]
    %v380 = vld [vmem:[#allocation3 + $0x70] sm:$0xff]
    %v381 = vld [vmem:[#allocation3 + $0x78] sm:$0xff]
    %v382 = vld [vmem:[#allocation3 + $0x80] sm:$0xff]
    %v383 = vld [vmem:[#allocation3 + $0x88] sm:$0xff]
    %v384 = vld [vmem:[#allocation3 + $0x90] sm:$0xff]
    %v385 = vld [vmem:[#allocation3 + $0x98] sm:$0xff]
    %v386 = vld [vmem:[#allocation3 + $0xa0] sm:$0xff]
    %v387 = vld [vmem:[#allocation3 + $0xa8] sm:$0xff]
    %v388 = vld [vmem:[#allocation3 + $0xb0] sm:$0xff]
    %v389 = vld [vmem:[#allocation3 + $0xb8] sm:$0xff]
    %v390 = vld [vmem:[#allocation3 + $0xc0] sm:$0xff]
    %v391 = vld [vmem:[#allocation3 + $0xc8] sm:$0xff]
    %v392 = vld [vmem:[#allocation3 + $0xd0] sm:$0xff]
    %v393 = vld [vmem:[#allocation3 + $0xd8] sm:$0xff]
    %v394 = vld [vmem:[#allocation3 + $0xe0] sm:$0xff]
    %v395 = vld [vmem:[#allocation3 + $0xe8] sm:$0xff]
    %v396 = vld [vmem:[#allocation3 + $0xf0] sm:$0xff]
    %v397 = vld [vmem:[#allocation3 + $0xf8] sm:$0xff]
    %v398 = vld [vmem:[#allocation3 + $0x100] sm:$0xff]
    %v399 = vld [vmem:[#allocation3 + $0x108] sm:$0xff]
    %v400 = vld [vmem:[#allocation3 + $0x110] sm:$0xff]
    %v401 = vld [vmem:[#allocation3 + $0x118] sm:$0xff]
    %v402 = vld [vmem:[#allocation3 + $0x120] sm:$0xff]
    %v403 = vld [vmem:[#allocation3 + $0x128] sm:$0xff]
    %v404 = vld [vmem:[#allocation3 + $0x130] sm:$0xff]
    %v405 = vld [vmem:[#allocation3 + $0x138] sm:$0xff]
    %v406 = vld [vmem:[#allocation3 + $0x140] sm:$0xff]
    %v407 = vld [vmem:[#allocation3 + $0x148] sm:$0xff]
    %v408 = vld [vmem:[#allocation3 + $0x150] sm:$0xff]
    %v409 = vld [vmem:[#allocation3 + $0x158] sm:$0xff]
    %v410 = vld [vmem:[#allocation3 + $0x160] sm:$0xff]
    %v411 = vld [vmem:[#allocation3 + $0x168] sm:$0xff]
    %v412 = vld [vmem:[#allocation3 + $0x170] sm:$0xff]
    %v413 = vld [vmem:[#allocation3 + $0x178] sm:$0xff]
    %v414 = vld [vmem:[#allocation3 + $0x180] sm:$0xff]
    %v415 = vld [vmem:[#allocation3 + $0x188] sm:$0xff]
    %v416 = vld [vmem:[#allocation3 + $0x190] sm:$0xff]
    %v417 = vld [vmem:[#allocation3 + $0x198] sm:$0xff]
    %v418 = vld [vmem:[#allocation3 + $0x1a0] sm:$0xff]
    %v419 = vld [vmem:[#allocation3 + $0x1a8] sm:$0xff]
    %v420 = vld [vmem:[#allocation3 + $0x1b0] sm:$0xff]
    %v421 = vld [vmem:[#allocation3 + $0x1b8] sm:$0xff]
    %v422 = vld [vmem:[#allocation3 + $0x1c0] sm:$0xff]
    %v423 = vld [vmem:[#allocation3 + $0x1c8] sm:$0xff]
    %v424 = vld [vmem:[#allocation3 + $0x1d0] sm:$0xff]
    %v425 = vld [vmem:[#allocation3 + $0x1d8] sm:$0xff]
    %v426 = vld [vmem:[#allocation3 + $0x1e0] sm:$0xff]
    %v427 = vld [vmem:[#allocation3 + $0x1e8] sm:$0xff]
    %v428 = vld [vmem:[#allocation3 + $0x1f0] sm:$0xff]
    %v429 = vld [vmem:[#allocation3 + $0x1f8] sm:$0xff]
    %430 = vmatprep.subr.mxu0 %v427
    %431 = vmatpush1.msra.mxu0 %v426
    %432 = vmatprep.subr.mxu0 %v423
    %433 = vmatpush1.msra.mxu0 %v422
    %434 = vmatprep.subr.mxu0 %v419
    %435 = vmatpush1.msra.mxu0 %v418
    %436 = vmatprep.subr.mxu0 %v415
    %437 = vmatpush1.msra.mxu0 %v414
    %438 = vmatprep.subr.mxu0 %v411
    %439 = vmatpush1.msra.mxu0 %v410
    %440 = vmatprep.subr.mxu0 %v407
    %441 = vmatpush1.msra.mxu0 %v406
    %442 = vmatprep.subr.mxu0 %v403
    %443 = vmatpush1.msra.mxu0 %v402
    %444 = vmatprep.subr.mxu0 %v399
    %445 = vmatpush1.msra.mxu0 %v398
    %446 = vmatprep.subr.mxu0 %v395
    %447 = vmatpush1.msra.mxu0 %v394
    %448 = vmatprep.subr.mxu0 %v391
    %449 = vmatpush1.msra.mxu0 %v390
    %450 = vmatprep.subr.mxu0 %v387
    %451 = vmatpush1.msra.mxu0 %v386
    %452 = vmatprep.subr.mxu0 %v383
    %453 = vmatpush1.msra.mxu0 %v382
    %454 = vmatprep.subr.mxu0 %v379
    %455 = vmatpush1.msra.mxu0 %v378
    %456 = vmatprep.subr.mxu0 %v375
    %457 = vmatpush1.msra.mxu0 %v374
    %458 = vmatprep.subr.mxu0 %v371
    %459 = vmatpush1.msra.mxu0 %v370
    %460 = vmatprep.subr.mxu0 %v367
    %461 = vmatpush1.msra.mxu0 %v366
    %462 = vmatprep.subr.mxu0 0.0
    %463 = vmatpush2.msra.mxu0 0.0
    %464 = vmatprep.subr.mxu0 0.0
    %465 = vmatpush2.msra.mxu0 0.0
    %466 = vmatprep.subr.mxu0 0.0
    %467 = vmatpush2.msra.mxu0 0.0
    %468 = vmatprep.subr.mxu0 0.0
    %469 = vmatpush2.msra.mxu0 0.0
    %470 = vmatprep.subr.mxu0 0.0
    %471 = vmatpush2.msra.mxu0 0.0
    %472 = vmatprep.subr.mxu0 0.0
    %473 = vmatpush2.msra.mxu0 0.0
    %474 = vmatprep.subr.mxu0 0.0
    %475 = vmatpush2.msra.mxu0 0.0
    %476 = vmatprep.subr.mxu0 0.0
    %477 = vmatpush2.msra.mxu0 0.0
    %478 = vmatprep.subr.mxu0 0.0
    %479 = vmatpush2.msra.mxu0 0.0
    %480 = vmatprep.subr.mxu0 0.0
    %481 = vmatpush2.msra.mxu0 0.0
    %482 = vmatprep.subr.mxu0 0.0
    %483 = vmatpush2.msra.mxu0 0.0
    %484 = vmatprep.subr.mxu0 0.0
    %485 = vmatpush2.msra.mxu0 0.0
    %486 = vmatprep.subr.mxu0 0.0
    %487 = vmatpush2.msra.mxu0 0.0
    %488 = vmatprep.subr.mxu0 0.0
    %489 = vmatpush2.msra.mxu0 0.0
    %490 = vmatprep.subr.mxu0 0.0
    %491 = vmatpush2.msra.mxu0 0.0
    %492 = vmatprep.subr.mxu0 0.0
    %493 = vmatpush2.msra.mxu0 0.0
    %494 = vmatprep.mubr.f32.mxu0 0.0
    %495 = vmatmul.mubr.f32.gmra.mxu0 %v357
    %v496 = vpop.f32.mrf.mxu0
    %v497 = vadd.f32 0.0, %v496
    %v498 = vpop.f32.mrf.mxu0
    %v499 = vadd.f32 0.0, %v498
    %500 = vdwg.mxu0
    %501 = vmatprep.subr.mxu0 %v429
    %502 = vmatpush1.msra.mxu0 %v428
    %503 = vmatprep.subr.mxu0 %v425
    %504 = vmatpush1.msra.mxu0 %v424
    %505 = vmatprep.subr.mxu0 %v421
    %506 = vmatpush1.msra.mxu0 %v420
    %507 = vmatprep.subr.mxu0 %v417
    %508 = vmatpush1.msra.mxu0 %v416
    %509 = vmatprep.subr.mxu0 %v413
    %510 = vmatpush1.msra.mxu0 %v412
    %511 = vmatprep.subr.mxu0 %v409
    %512 = vmatpush1.msra.mxu0 %v408
    %513 = vmatprep.subr.mxu0 %v405
    %514 = vmatpush1.msra.mxu0 %v404
    %515 = vmatprep.subr.mxu0 %v401
    %516 = vmatpush1.msra.mxu0 %v400
    %517 = vmatprep.subr.mxu0 %v397
    %518 = vmatpush1.msra.mxu0 %v396
    %519 = vmatprep.subr.mxu0 %v393
    %520 = vmatpush1.msra.mxu0 %v392
    %521 = vmatprep.subr.mxu0 %v389
    %522 = vmatpush1.msra.mxu0 %v388
    %523 = vmatprep.subr.mxu0 %v385
    %524 = vmatpush1.msra.mxu0 %v384
    %525 = vmatprep.subr.mxu0 %v381
    %526 = vmatpush1.msra.mxu0 %v380
    %527 = vmatprep.subr.mxu0 %v377
    %528 = vmatpush1.msra.mxu0 %v376
    %529 = vmatprep.subr.mxu0 %v373
    %530 = vmatpush1.msra.mxu0 %v372
    %531 = vmatprep.subr.mxu0 %v369
    %532 = vmatpush1.msra.mxu0 %v368
    %533 = vmatprep.subr.mxu0 0.0
    %534 = vmatpush2.msra.mxu0 0.0
    %535 = vmatprep.subr.mxu0 0.0
    %536 = vmatpush2.msra.mxu0 0.0
    %537 = vmatprep.subr.mxu0 0.0
    %538 = vmatpush2.msra.mxu0 0.0
    %539 = vmatprep.subr.mxu0 0.0
    %540 = vmatpush2.msra.mxu0 0.0
    %541 = vmatprep.subr.mxu0 0.0
    %542 = vmatpush2.msra.mxu0 0.0
    %543 = vmatprep.subr.mxu0 0.0
    %544 = vmatpush2.msra.mxu0 0.0
    %545 = vmatprep.subr.mxu0 0.0
    %546 = vmatpush2.msra.mxu0 0.0
    %547 = vmatprep.subr.mxu0 0.0
    %548 = vmatpush2.msra.mxu0 0.0
    %549 = vmatprep.subr.mxu0 0.0
    %550 = vmatpush2.msra.mxu0 0.0
    %551 = vmatprep.subr.mxu0 0.0
    %552 = vmatpush2.msra.mxu0 0.0
    %553 = vmatprep.subr.mxu0 0.0
    %554 = vmatpush2.msra.mxu0 0.0
    %555 = vmatprep.subr.mxu0 0.0
    %556 = vmatpush2.msra.mxu0 0.0
    %557 = vmatprep.subr.mxu0 0.0
    %558 = vmatpush2.msra.mxu0 0.0
    %559 = vmatprep.subr.mxu0 0.0
    %560 = vmatpush2.msra.mxu0 0.0
    %561 = vmatprep.subr.mxu0 0.0
    %562 = vmatpush2.msra.mxu0 0.0
    %563 = vmatprep.subr.mxu0 0.0
    %564 = vmatpush2.msra.mxu0 0.0
    %565 = vmatprep.mubr.f32.mxu0 0.0
    %566 = vmatmul.mubr.f32.gmra.mxu0 %v357
    %v567 = vpop.f32.mrf.mxu0
    %v568 = vadd.f32 0.0, %v567
    %v569 = vpop.f32.mrf.mxu0
    %v570 = vadd.f32 0.0, %v569
    %571 = vdwg.mxu0
    %v572 = vadd.f32 %v362, %v497
    %v573 = vadd.f32 %v363, %v499
    %v574 = vadd.f32 %v364, %v568
    %v575 = vadd.f32 %v365, %v570
    %v576 = vxor.u32 %v572, 2147483648
    %v577 = vmul.f32 %v576, 1.442695
    %v578 = vpow.pop %v577
    %v579 = vadd.f32 %v578, 1.0
    %v580 = vrcp.pop %v579
    %v581 = vmul.f32 1.0, %v580
    %v582 = vxor.u32 %v573, 2147483648
    %v583 = vmul.f32 %v582, 1.442695
    %v584 = vpow.pop %v583
    %v585 = vadd.f32 %v584, 1.0
    %v586 = vrcp.pop %v585
    %v587 = vmul.f32 1.0, %v586
    %v588 = vtanh.pop %v574
    %v589 = vxor.u32 %v575, 2147483648
    %v590 = vmul.f32 %v589, 1.442695
    %v591 = vpow.pop %v590
    %v592 = vadd.f32 %v591, 1.0
    %v593 = vrcp.pop %v592
    %v594 = vmul.f32 1.0, %v593
    %v595 = vmul.f32 %v587, %v358
    %v596 = vmul.f32 %v581, %v588
    %v597 = vadd.f32 %v595, %v596
    %v598 = vtanh.pop %v597
    %v599 = vmul.f32 %v594, %v598
    %600 = vst [vmem:[%s4] sm:$0xff] %v599
    %s601 = smul.u32 1, 4
    %s602 = smul.addr %s601, 8
    %s603 = scalar_lea.vmem [#allocation2], %s602
    %v604 = vld [vmem:[%s603] sm:$0xff]
    %v605 = vld [vmem:[%s603 + $0x8] sm:$0xff]
    %v606 = vld [vmem:[%s603 + $0x10] sm:$0xff]
    %v607 = vld [vmem:[%s603 + $0x18] sm:$0xff]
    %v608 = vld [vmem:[#allocation3] sm:$0xff]
    %v609 = vld [vmem:[#allocation3 + $0x8] sm:$0xff]
    %v610 = vld [vmem:[#allocation3 + $0x10] sm:$0xff]
    %v611 = vld [vmem:[#allocation3 + $0x18] sm:$0xff]
    %v612 = vld [vmem:[#allocation3 + $0x20] sm:$0xff]
    %v613 = vld [vmem:[#allocation3 + $0x28] sm:$0xff]
    %v614 = vld [vmem:[#allocation3 + $0x30] sm:$0xff]
    %v615 = vld [vmem:[#allocation3 + $0x38] sm:$0xff]
    %v616 = vld [vmem:[#allocation3 + $0x40] sm:$0xff]
    %v617 = vld [vmem:[#allocation3 + $0x48] sm:$0xff]
    %v618 = vld [vmem:[#allocation3 + $0x50] sm:$0xff]
    %v619 = vld [vmem:[#allocation3 + $0x58] sm:$0xff]
    %v620 = vld [vmem:[#allocation3 + $0x60] sm:$0xff]
    %v621 = vld [vmem:[#allocation3 + $0x68] sm:$0xff]
    %v622 = vld [vmem:[#allocation3 + $0x70] sm:$0xff]
    %v623 = vld [vmem:[#allocation3 + $0x78] sm:$0xff]
    %v624 = vld [vmem:[#allocation3 + $0x80] sm:$0xff]
    %v625 = vld [vmem:[#allocation3 + $0x88] sm:$0xff]
    %v626 = vld [vmem:[#allocation3 + $0x90] sm:$0xff]
    %v627 = vld [vmem:[#allocation3 + $0x98] sm:$0xff]
    %v628 = vld [vmem:[#allocation3 + $0xa0] sm:$0xff]
    %v629 = vld [vmem:[#allocation3 + $0xa8] sm:$0xff]
    %v630 = vld [vmem:[#allocation3 + $0xb0] sm:$0xff]
    %v631 = vld [vmem:[#allocation3 + $0xb8] sm:$0xff]
    %v632 = vld [vmem:[#allocation3 + $0xc0] sm:$0xff]
    %v633 = vld [vmem:[#allocation3 + $0xc8] sm:$0xff]
    %v634 = vld [vmem:[#allocation3 + $0xd0] sm:$0xff]
    %v635 = vld [vmem:[#allocation3 + $0xd8] sm:$0xff]
    %v636 = vld [vmem:[#allocation3 + $0xe0] sm:$0xff]
    %v637 = vld [vmem:[#allocation3 + $0xe8] sm:$0xff]
    %v638 = vld [vmem:[#allocation3 + $0xf0] sm:$0xff]
    %v639 = vld [vmem:[#allocation3 + $0xf8] sm:$0xff]
    %v640 = vld [vmem:[#allocation3 + $0x100] sm:$0xff]
    %v641 = vld [vmem:[#allocation3 + $0x108] sm:$0xff]
    %v642 = vld [vmem:[#allocation3 + $0x110] sm:$0xff]
    %v643 = vld [vmem:[#allocation3 + $0x118] sm:$0xff]
    %v644 = vld [vmem:[#allocation3 + $0x120] sm:$0xff]
    %v645 = vld [vmem:[#allocation3 + $0x128] sm:$0xff]
    %v646 = vld [vmem:[#allocation3 + $0x130] sm:$0xff]
    %v647 = vld [vmem:[#allocation3 + $0x138] sm:$0xff]
    %v648 = vld [vmem:[#allocation3 + $0x140] sm:$0xff]
    %v649 = vld [vmem:[#allocation3 + $0x148] sm:$0xff]
    %v650 = vld [vmem:[#allocation3 + $0x150] sm:$0xff]
    %v651 = vld [vmem:[#allocation3 + $0x158] sm:$0xff]
    %v652 = vld [vmem:[#allocation3 + $0x160] sm:$0xff]
    %v653 = vld [vmem:[#allocation3 + $0x168] sm:$0xff]
    %v654 = vld [vmem:[#allocation3 + $0x170] sm:$0xff]
    %v655 = vld [vmem:[#allocation3 + $0x178] sm:$0xff]
    %v656 = vld [vmem:[#allocation3 + $0x180] sm:$0xff]
    %v657 = vld [vmem:[#allocation3 + $0x188] sm:$0xff]
    %v658 = vld [vmem:[#allocation3 + $0x190] sm:$0xff]
    %v659 = vld [vmem:[#allocation3 + $0x198] sm:$0xff]
    %v660 = vld [vmem:[#allocation3 + $0x1a0] sm:$0xff]
    %v661 = vld [vmem:[#allocation3 + $0x1a8] sm:$0xff]
    %v662 = vld [vmem:[#allocation3 + $0x1b0] sm:$0xff]
    %v663 = vld [vmem:[#allocation3 + $0x1b8] sm:$0xff]
    %v664 = vld [vmem:[#allocation3 + $0x1c0] sm:$0xff]
    %v665 = vld [vmem:[#allocation3 + $0x1c8] sm:$0xff]
    %v666 = vld [vmem:[#allocation3 + $0x1d0] sm:$0xff]
    %v667 = vld [vmem:[#allocation3 + $0x1d8] sm:$0xff]
    %v668 = vld [vmem:[#allocation3 + $0x1e0] sm:$0xff]
    %v669 = vld [vmem:[#allocation3 + $0x1e8] sm:$0xff]
    %v670 = vld [vmem:[#allocation3 + $0x1f0] sm:$0xff]
    %v671 = vld [vmem:[#allocation3 + $0x1f8] sm:$0xff]
    %672 = vmatprep.subr.mxu0 %v669
    %673 = vmatpush1.msra.mxu0 %v668
    %674 = vmatprep.subr.mxu0 %v665
    %675 = vmatpush1.msra.mxu0 %v664
    %676 = vmatprep.subr.mxu0 %v661
    %677 = vmatpush1.msra.mxu0 %v660
    %678 = vmatprep.subr.mxu0 %v657
    %679 = vmatpush1.msra.mxu0 %v656
    %680 = vmatprep.subr.mxu0 %v653
    %681 = vmatpush1.msra.mxu0 %v652
    %682 = vmatprep.subr.mxu0 %v649
    %683 = vmatpush1.msra.mxu0 %v648
    %684 = vmatprep.subr.mxu0 %v645
    %685 = vmatpush1.msra.mxu0 %v644
    %686 = vmatprep.subr.mxu0 %v641
    %687 = vmatpush1.msra.mxu0 %v640
    %688 = vmatprep.subr.mxu0 %v637
    %689 = vmatpush1.msra.mxu0 %v636
    %690 = vmatprep.subr.mxu0 %v633
    %691 = vmatpush1.msra.mxu0 %v632
    %692 = vmatprep.subr.mxu0 %v629
    %693 = vmatpush1.msra.mxu0 %v628
    %694 = vmatprep.subr.mxu0 %v625
    %695 = vmatpush1.msra.mxu0 %v624
    %696 = vmatprep.subr.mxu0 %v621
    %697 = vmatpush1.msra.mxu0 %v620
    %698 = vmatprep.subr.mxu0 %v617
    %699 = vmatpush1.msra.mxu0 %v616
    %700 = vmatprep.subr.mxu0 %v613
    %701 = vmatpush1.msra.mxu0 %v612
    %702 = vmatprep.subr.mxu0 %v609
    %703 = vmatpush1.msra.mxu0 %v608
    %704 = vmatprep.subr.mxu0 0.0
    %705 = vmatpush2.msra.mxu0 0.0
    %706 = vmatprep.subr.mxu0 0.0
    %707 = vmatpush2.msra.mxu0 0.0
    %708 = vmatprep.subr.mxu0 0.0
    %709 = vmatpush2.msra.mxu0 0.0
    %710 = vmatprep.subr.mxu0 0.0
    %711 = vmatpush2.msra.mxu0 0.0
    %712 = vmatprep.subr.mxu0 0.0
    %713 = vmatpush2.msra.mxu0 0.0
    %714 = vmatprep.subr.mxu0 0.0
    %715 = vmatpush2.msra.mxu0 0.0
    %716 = vmatprep.subr.mxu0 0.0
    %717 = vmatpush2.msra.mxu0 0.0
    %718 = vmatprep.subr.mxu0 0.0
    %719 = vmatpush2.msra.mxu0 0.0
    %720 = vmatprep.subr.mxu0 0.0
    %721 = vmatpush2.msra.mxu0 0.0
    %722 = vmatprep.subr.mxu0 0.0
    %723 = vmatpush2.msra.mxu0 0.0
    %724 = vmatprep.subr.mxu0 0.0
    %725 = vmatpush2.msra.mxu0 0.0
    %726 = vmatprep.subr.mxu0 0.0
    %727 = vmatpush2.msra.mxu0 0.0
    %728 = vmatprep.subr.mxu0 0.0
    %729 = vmatpush2.msra.mxu0 0.0
    %730 = vmatprep.subr.mxu0 0.0
    %731 = vmatpush2.msra.mxu0 0.0
    %732 = vmatprep.subr.mxu0 0.0
    %733 = vmatpush2.msra.mxu0 0.0
    %734 = vmatprep.subr.mxu0 0.0
    %735 = vmatpush2.msra.mxu0 0.0
    %736 = vmatprep.mubr.f32.mxu0 0.0
    %737 = vmatmul.mubr.f32.gmra.mxu0 %v599
    %v738 = vpop.f32.mrf.mxu0
    %v739 = vadd.f32 0.0, %v738
    %v740 = vpop.f32.mrf.mxu0
    %v741 = vadd.f32 0.0, %v740
    %742 = vdwg.mxu0
    %743 = vmatprep.subr.mxu0 %v671
    %744 = vmatpush1.msra.mxu0 %v670
    %745 = vmatprep.subr.mxu0 %v667
    %746 = vmatpush1.msra.mxu0 %v666
    %747 = vmatprep.subr.mxu0 %v663
    %748 = vmatpush1.msra.mxu0 %v662
    %749 = vmatprep.subr.mxu0 %v659
    %750 = vmatpush1.msra.mxu0 %v658
    %751 = vmatprep.subr.mxu0 %v655
    %752 = vmatpush1.msra.mxu0 %v654
    %753 = vmatprep.subr.mxu0 %v651
    %754 = vmatpush1.msra.mxu0 %v650
    %755 = vmatprep.subr.mxu0 %v647
    %756 = vmatpush1.msra.mxu0 %v646
    %757 = vmatprep.subr.mxu0 %v643
    %758 = vmatpush1.msra.mxu0 %v642
    %759 = vmatprep.subr.mxu0 %v639
    %760 = vmatpush1.msra.mxu0 %v638
    %761 = vmatprep.subr.mxu0 %v635
    %762 = vmatpush1.msra.mxu0 %v634
    %763 = vmatprep.subr.mxu0 %v631
    %764 = vmatpush1.msra.mxu0 %v630
    %765 = vmatprep.subr.mxu0 %v627
    %766 = vmatpush1.msra.mxu0 %v626
    %767 = vmatprep.subr.mxu0 %v623
    %768 = vmatpush1.msra.mxu0 %v622
    %769 = vmatprep.subr.mxu0 %v619
    %770 = vmatpush1.msra.mxu0 %v618
    %771 = vmatprep.subr.mxu0 %v615
    %772 = vmatpush1.msra.mxu0 %v614
    %773 = vmatprep.subr.mxu0 %v611
    %774 = vmatpush1.msra.mxu0 %v610
    %775 = vmatprep.subr.mxu0 0.0
    %776 = vmatpush2.msra.mxu0 0.0
    %777 = vmatprep.subr.mxu0 0.0
    %778 = vmatpush2.msra.mxu0 0.0
    %779 = vmatprep.subr.mxu0 0.0
    %780 = vmatpush2.msra.mxu0 0.0
    %781 = vmatprep.subr.mxu0 0.0
    %782 = vmatpush2.msra.mxu0 0.0
    %783 = vmatprep.subr.mxu0 0.0
    %784 = vmatpush2.msra.mxu0 0.0
    %785 = vmatprep.subr.mxu0 0.0
    %786 = vmatpush2.msra.mxu0 0.0
    %787 = vmatprep.subr.mxu0 0.0
    %788 = vmatpush2.msra.mxu0 0.0
    %789 = vmatprep.subr.mxu0 0.0
    %790 = vmatpush2.msra.mxu0 0.0
    %791 = vmatprep.subr.mxu0 0.0
    %792 = vmatpush2.msra.mxu0 0.0
    %793 = vmatprep.subr.mxu0 0.0
    %794 = vmatpush2.msra.mxu0 0.0
    %795 = vmatprep.subr.mxu0 0.0
    %796 = vmatpush2.msra.mxu0 0.0
    %797 = vmatprep.subr.mxu0 0.0
    %798 = vmatpush2.msra.mxu0 0.0
    %799 = vmatprep.subr.mxu0 0.0
    %800 = vmatpush2.msra.mxu0 0.0
    %801 = vmatprep.subr.mxu0 0.0
    %802 = vmatpush2.msra.mxu0 0.0
    %803 = vmatprep.subr.mxu0 0.0
    %804 = vmatpush2.msra.mxu0 0.0
    %805 = vmatprep.subr.mxu0 0.0
    %806 = vmatpush2.msra.mxu0 0.0
    %807 = vmatprep.mubr.f32.mxu0 0.0
    %808 = vmatmul.mubr.f32.gmra.mxu0 %v599
    %v809 = vpop.f32.mrf.mxu0
    %v810 = vadd.f32 0.0, %v809
    %v811 = vpop.f32.mrf.mxu0
    %v812 = vadd.f32 0.0, %v811
    %813 = vdwg.mxu0
    %v814 = vadd.f32 %v604, %v739
    %v815 = vadd.f32 %v605, %v741
    %v816 = vadd.f32 %v606, %v810
    %v817 = vadd.f32 %v607, %v812
    %v818 = vxor.u32 %v814, 2147483648
    %v819 = vmul.f32 %v818, 1.442695
    %v820 = vpow.pop %v819
    %v821 = vadd.f32 %v820, 1.0
    %v822 = vrcp.pop %v821
    %v823 = vmul.f32 1.0, %v822
    %v824 = vxor.u32 %v815, 2147483648
    %v825 = vmul.f32 %v824, 1.442695
    %v826 = vpow.pop %v825
    %v827 = vadd.f32 %v826, 1.0
    %v828 = vrcp.pop %v827
    %v829 = vmul.f32 1.0, %v828
    %v830 = vtanh.pop %v816
    %v831 = vxor.u32 %v817, 2147483648
    %v832 = vmul.f32 %v831, 1.442695
    %v833 = vpow.pop %v832
    %v834 = vadd.f32 %v833, 1.0
    %v835 = vrcp.pop %v834
    %v836 = vmul.f32 1.0, %v835
    %v837 = vmul.f32 %v829, %v597
    %v838 = vmul.f32 %v823, %v830
    %v839 = vadd.f32 %v837, %v838
    %v840 = vtanh.pop %v839
    %v841 = vmul.f32 %v836, %v840
    %s842 = scalar_lea.vmem %s4, 8
    %843 = vst [vmem:[%s842] sm:$0xff] %v841
    %s844 = smul.u32 2, 4
    %s845 = smul.addr %s844, 8
    %s846 = scalar_lea.vmem [#allocation2], %s845
    %v847 = vld [vmem:[%s846] sm:$0xff]
    %v848 = vld [vmem:[%s846 + $0x8] sm:$0xff]
    %v849 = vld [vmem:[%s846 + $0x10] sm:$0xff]
    %v850 = vld [vmem:[%s846 + $0x18] sm:$0xff]
    %v851 = vld [vmem:[#allocation3] sm:$0xff]
    %v852 = vld [vmem:[#allocation3 + $0x8] sm:$0xff]
    %v853 = vld [vmem:[#allocation3 + $0x10] sm:$0xff]
    %v854 = vld [vmem:[#allocation3 + $0x18] sm:$0xff]
    %v855 = vld [vmem:[#allocation3 + $0x20] sm:$0xff]
    %v856 = vld [vmem:[#allocation3 + $0x28] sm:$0xff]
    %v857 = vld [vmem:[#allocation3 + $0x30] sm:$0xff]
    %v858 = vld [vmem:[#allocation3 + $0x38] sm:$0xff]
    %v859 = vld [vmem:[#allocation3 + $0x40] sm:$0xff]
    %v860 = vld [vmem:[#allocation3 + $0x48] sm:$0xff]
    %v861 = vld [vmem:[#allocation3 + $0x50] sm:$0xff]
    %v862 = vld [vmem:[#allocation3 + $0x58] sm:$0xff]
    %v863 = vld [vmem:[#allocation3 + $0x60] sm:$0xff]
    %v864 = vld [vmem:[#allocation3 + $0x68] sm:$0xff]
    %v865 = vld [vmem:[#allocation3 + $0x70] sm:$0xff]
    %v866 = vld [vmem:[#allocation3 + $0x78] sm:$0xff]
    %v867 = vld [vmem:[#allocation3 + $0x80] sm:$0xff]
    %v868 = vld [vmem:[#allocation3 + $0x88] sm:$0xff]
    %v869 = vld [vmem:[#allocation3 + $0x90] sm:$0xff]
    %v870 = vld [vmem:[#allocation3 + $0x98] sm:$0xff]
    %v871 = vld [vmem:[#allocation3 + $0xa0] sm:$0xff]
    %v872 = vld [vmem:[#allocation3 + $0xa8] sm:$0xff]
    %v873 = vld [vmem:[#allocation3 + $0xb0] sm:$0xff]
    %v874 = vld [vmem:[#allocation3 + $0xb8] sm:$0xff]
    %v875 = vld [vmem:[#allocation3 + $0xc0] sm:$0xff]
    %v876 = vld [vmem:[#allocation3 + $0xc8] sm:$0xff]
    %v877 = vld [vmem:[#allocation3 + $0xd0] sm:$0xff]
    %v878 = vld [vmem:[#allocation3 + $0xd8] sm:$0xff]
    %v879 = vld [vmem:[#allocation3 + $0xe0] sm:$0xff]
    %v880 = vld [vmem:[#allocation3 + $0xe8] sm:$0xff]
    %v881 = vld [vmem:[#allocation3 + $0xf0] sm:$0xff]
    %v882 = vld [vmem:[#allocation3 + $0xf8] sm:$0xff]
    %v883 = vld [vmem:[#allocation3 + $0x100] sm:$0xff]
    %v884 = vld [vmem:[#allocation3 + $0x108] sm:$0xff]
    %v885 = vld [vmem:[#allocation3 + $0x110] sm:$0xff]
    %v886 = vld [vmem:[#allocation3 + $0x118] sm:$0xff]
    %v887 = vld [vmem:[#allocation3 + $0x120] sm:$0xff]
    %v888 = vld [vmem:[#allocation3 + $0x128] sm:$0xff]
    %v889 = vld [vmem:[#allocation3 + $0x130] sm:$0xff]
    %v890 = vld [vmem:[#allocation3 + $0x138] sm:$0xff]
    %v891 = vld [vmem:[#allocation3 + $0x140] sm:$0xff]
    %v892 = vld [vmem:[#allocation3 + $0x148] sm:$0xff]
    %v893 = vld [vmem:[#allocation3 + $0x150] sm:$0xff]
    %v894 = vld [vmem:[#allocation3 + $0x158] sm:$0xff]
    %v895 = vld [vmem:[#allocation3 + $0x160] sm:$0xff]
    %v896 = vld [vmem:[#allocation3 + $0x168] sm:$0xff]
    %v897 = vld [vmem:[#allocation3 + $0x170] sm:$0xff]
    %v898 = vld [vmem:[#allocation3 + $0x178] sm:$0xff]
    %v899 = vld [vmem:[#allocation3 + $0x180] sm:$0xff]
    %v900 = vld [vmem:[#allocation3 + $0x188] sm:$0xff]
    %v901 = vld [vmem:[#allocation3 + $0x190] sm:$0xff]
    %v902 = vld [vmem:[#allocation3 + $0x198] sm:$0xff]
    %v903 = vld [vmem:[#allocation3 + $0x1a0] sm:$0xff]
    %v904 = vld [vmem:[#allocation3 + $0x1a8] sm:$0xff]
    %v905 = vld [vmem:[#allocation3 + $0x1b0] sm:$0xff]
    %v906 = vld [vmem:[#allocation3 + $0x1b8] sm:$0xff]
    %v907 = vld [vmem:[#allocation3 + $0x1c0] sm:$0xff]
    %v908 = vld [vmem:[#allocation3 + $0x1c8] sm:$0xff]
    %v909 = vld [vmem:[#allocation3 + $0x1d0] sm:$0xff]
    %v910 = vld [vmem:[#allocation3 + $0x1d8] sm:$0xff]
    %v911 = vld [vmem:[#allocation3 + $0x1e0] sm:$0xff]
    %v912 = vld [vmem:[#allocation3 + $0x1e8] sm:$0xff]
    %v913 = vld [vmem:[#allocation3 + $0x1f0] sm:$0xff]
    %v914 = vld [vmem:[#allocation3 + $0x1f8] sm:$0xff]
    %915 = vmatprep.subr.mxu0 %v912
    %916 = vmatpush1.msra.mxu0 %v911
    %917 = vmatprep.subr.mxu0 %v908
    %918 = vmatpush1.msra.mxu0 %v907
    %919 = vmatprep.subr.mxu0 %v904
    %920 = vmatpush1.msra.mxu0 %v903
    %921 = vmatprep.subr.mxu0 %v900
    %922 = vmatpush1.msra.mxu0 %v899
    %923 = vmatprep.subr.mxu0 %v896
    %924 = vmatpush1.msra.mxu0 %v895
    %925 = vmatprep.subr.mxu0 %v892
    %926 = vmatpush1.msra.mxu0 %v891
    %927 = vmatprep.subr.mxu0 %v888
    %928 = vmatpush1.msra.mxu0 %v887
    %929 = vmatprep.subr.mxu0 %v884
    %930 = vmatpush1.msra.mxu0 %v883
    %931 = vmatprep.subr.mxu0 %v880
    %932 = vmatpush1.msra.mxu0 %v879
    %933 = vmatprep.subr.mxu0 %v876
    %934 = vmatpush1.msra.mxu0 %v875
    %935 = vmatprep.subr.mxu0 %v872
    %936 = vmatpush1.msra.mxu0 %v871
    %937 = vmatprep.subr.mxu0 %v868
    %938 = vmatpush1.msra.mxu0 %v867
    %939 = vmatprep.subr.mxu0 %v864
    %940 = vmatpush1.msra.mxu0 %v863
    %941 = vmatprep.subr.mxu0 %v860
    %942 = vmatpush1.msra.mxu0 %v859
    %943 = vmatprep.subr.mxu0 %v856
    %944 = vmatpush1.msra.mxu0 %v855
    %945 = vmatprep.subr.mxu0 %v852
    %946 = vmatpush1.msra.mxu0 %v851
    %947 = vmatprep.subr.mxu0 0.0
    %948 = vmatpush2.msra.mxu0 0.0
    %949 = vmatprep.subr.mxu0 0.0
    %950 = vmatpush2.msra.mxu0 0.0
    %951 = vmatprep.subr.mxu0 0.0
    %952 = vmatpush2.msra.mxu0 0.0
    %953 = vmatprep.subr.mxu0 0.0
    %954 = vmatpush2.msra.mxu0 0.0
    %955 = vmatprep.subr.mxu0 0.0
    %956 = vmatpush2.msra.mxu0 0.0
    %957 = vmatprep.subr.mxu0 0.0
    %958 = vmatpush2.msra.mxu0 0.0
    %959 = vmatprep.subr.mxu0 0.0
    %960 = vmatpush2.msra.mxu0 0.0
    %961 = vmatprep.subr.mxu0 0.0
    %962 = vmatpush2.msra.mxu0 0.0
    %963 = vmatprep.subr.mxu0 0.0
    %964 = vmatpush2.msra.mxu0 0.0
    %965 = vmatprep.subr.mxu0 0.0
    %966 = vmatpush2.msra.mxu0 0.0
    %967 = vmatprep.subr.mxu0 0.0
    %968 = vmatpush2.msra.mxu0 0.0
    %969 = vmatprep.subr.mxu0 0.0
    %970 = vmatpush2.msra.mxu0 0.0
    %971 = vmatprep.subr.mxu0 0.0
    %972 = vmatpush2.msra.mxu0 0.0
    %973 = vmatprep.subr.mxu0 0.0
    %974 = vmatpush2.msra.mxu0 0.0
    %975 = vmatprep.subr.mxu0 0.0
    %976 = vmatpush2.msra.mxu0 0.0
    %977 = vmatprep.subr.mxu0 0.0
    %978 = vmatpush2.msra.mxu0 0.0
    %979 = vmatprep.mubr.f32.mxu0 0.0
    %980 = vmatmul.mubr.f32.gmra.mxu0 %v841
    %v981 = vpop.f32.mrf.mxu0
    %v982 = vadd.f32 0.0, %v981
    %v983 = vpop.f32.mrf.mxu0
    %v984 = vadd.f32 0.0, %v983
    %985 = vdwg.mxu0
    %986 = vmatprep.subr.mxu0 %v914
    %987 = vmatpush1.msra.mxu0 %v913
    %988 = vmatprep.subr.mxu0 %v910
    %989 = vmatpush1.msra.mxu0 %v909
    %990 = vmatprep.subr.mxu0 %v906
    %991 = vmatpush1.msra.mxu0 %v905
    %992 = vmatprep.subr.mxu0 %v902
    %993 = vmatpush1.msra.mxu0 %v901
    %994 = vmatprep.subr.mxu0 %v898
    %995 = vmatpush1.msra.mxu0 %v897
    %996 = vmatprep.subr.mxu0 %v894
    %997 = vmatpush1.msra.mxu0 %v893
    %998 = vmatprep.subr.mxu0 %v890
    %999 = vmatpush1.msra.mxu0 %v889
    %1000 = vmatprep.subr.mxu0 %v886
    %1001 = vmatpush1.msra.mxu0 %v885
    %1002 = vmatprep.subr.mxu0 %v882
    %1003 = vmatpush1.msra.mxu0 %v881
    %1004 = vmatprep.subr.mxu0 %v878
    %1005 = vmatpush1.msra.mxu0 %v877
    %1006 = vmatprep.subr.mxu0 %v874
    %1007 = vmatpush1.msra.mxu0 %v873
    %1008 = vmatprep.subr.mxu0 %v870
    %1009 = vmatpush1.msra.mxu0 %v869
    %1010 = vmatprep.subr.mxu0 %v866
    %1011 = vmatpush1.msra.mxu0 %v865
    %1012 = vmatprep.subr.mxu0 %v862
    %1013 = vmatpush1.msra.mxu0 %v861
    %1014 = vmatprep.subr.mxu0 %v858
    %1015 = vmatpush1.msra.mxu0 %v857
    %1016 = vmatprep.subr.mxu0 %v854
    %1017 = vmatpush1.msra.mxu0 %v853
    %1018 = vmatprep.subr.mxu0 0.0
    %1019 = vmatpush2.msra.mxu0 0.0
    %1020 = vmatprep.subr.mxu0 0.0
    %1021 = vmatpush2.msra.mxu0 0.0
    %1022 = vmatprep.subr.mxu0 0.0
    %1023 = vmatpush2.msra.mxu0 0.0
    %1024 = vmatprep.subr.mxu0 0.0
    %1025 = vmatpush2.msra.mxu0 0.0
    %1026 = vmatprep.subr.mxu0 0.0
    %1027 = vmatpush2.msra.mxu0 0.0
    %1028 = vmatprep.subr.mxu0 0.0
    %1029 = vmatpush2.msra.mxu0 0.0
    %1030 = vmatprep.subr.mxu0 0.0
    %1031 = vmatpush2.msra.mxu0 0.0
    %1032 = vmatprep.subr.mxu0 0.0
    %1033 = vmatpush2.msra.mxu0 0.0
    %1034 = vmatprep.subr.mxu0 0.0
    %1035 = vmatpush2.msra.mxu0 0.0
    %1036 = vmatprep.subr.mxu0 0.0
    %1037 = vmatpush2.msra.mxu0 0.0
    %1038 = vmatprep.subr.mxu0 0.0
    %1039 = vmatpush2.msra.mxu0 0.0
    %1040 = vmatprep.subr.mxu0 0.0
    %1041 = vmatpush2.msra.mxu0 0.0
    %1042 = vmatprep.subr.mxu0 0.0
    %1043 = vmatpush2.msra.mxu0 0.0
    %1044 = vmatprep.subr.mxu0 0.0
    %1045 = vmatpush2.msra.mxu0 0.0
    %1046 = vmatprep.subr.mxu0 0.0
    %1047 = vmatpush2.msra.mxu0 0.0
    %1048 = vmatprep.subr.mxu0 0.0
    %1049 = vmatpush2.msra.mxu0 0.0
    %1050 = vmatprep.mubr.f32.mxu0 0.0
    %1051 = vmatmul.mubr.f32.gmra.mxu0 %v841
    %v1052 = vpop.f32.mrf.mxu0
    %v1053 = vadd.f32 0.0, %v1052
    %v1054 = vpop.f32.mrf.mxu0
    %v1055 = vadd.f32 0.0, %v1054
    %1056 = vdwg.mxu0
    %v1057 = vadd.f32 %v847, %v982
    %v1058 = vadd.f32 %v848, %v984
    %v1059 = vadd.f32 %v849, %v1053
    %v1060 = vadd.f32 %v850, %v1055
    %v1061 = vxor.u32 %v1057, 2147483648
    %v1062 = vmul.f32 %v1061, 1.442695
    %v1063 = vpow.pop %v1062
    %v1064 = vadd.f32 %v1063, 1.0
    %v1065 = vrcp.pop %v1064
    %v1066 = vmul.f32 1.0, %v1065
    %v1067 = vxor.u32 %v1058, 2147483648
    %v1068 = vmul.f32 %v1067, 1.442695
    %v1069 = vpow.pop %v1068
    %v1070 = vadd.f32 %v1069, 1.0
    %v1071 = vrcp.pop %v1070
    %v1072 = vmul.f32 1.0, %v1071
    %v1073 = vtanh.pop %v1059
    %v1074 = vxor.u32 %v1060, 2147483648
    %v1075 = vmul.f32 %v1074, 1.442695
    %v1076 = vpow.pop %v1075
    %v1077 = vadd.f32 %v1076, 1.0
    %v1078 = vrcp.pop %v1077
    %v1079 = vmul.f32 1.0, %v1078
    %v1080 = vmul.f32 %v1072, %v839
    %v1081 = vmul.f32 %v1066, %v1073
    %v1082 = vadd.f32 %v1080, %v1081
    %v1083 = vtanh.pop %v1082
    %v1084 = vmul.f32 %v1079, %v1083
    %s1085 = scalar_lea.vmem %s4, 16
    %1086 = vst [vmem:[%s1085] sm:$0xff] %v1084
    %s1087 = smul.u32 3, 4
    %s1088 = smul.addr %s1087, 8
    %s1089 = scalar_lea.vmem [#allocation2], %s1088
    %v1090 = vld [vmem:[%s1089] sm:$0xff]
    %v1091 = vld [vmem:[%s1089 + $0x8] sm:$0xff]
    %v1092 = vld [vmem:[%s1089 + $0x10] sm:$0xff]
    %v1093 = vld [vmem:[%s1089 + $0x18] sm:$0xff]
    %v1094 = vld [vmem:[#allocation3] sm:$0xff]
    %v1095 = vld [vmem:[#allocation3 + $0x8] sm:$0xff]
    %v1096 = vld [vmem:[#allocation3 + $0x10] sm:$0xff]
    %v1097 = vld [vmem:[#allocation3 + $0x18] sm:$0xff]
    %v1098 = vld [vmem:[#allocation3 + $0x20] sm:$0xff]
    %v1099 = vld [vmem:[#allocation3 + $0x28] sm:$0xff]
    %v1100 = vld [vmem:[#allocation3 + $0x30] sm:$0xff]
    %v1101 = vld [vmem:[#allocation3 + $0x38] sm:$0xff]
    %v1102 = vld [vmem:[#allocation3 + $0x40] sm:$0xff]
    %v1103 = vld [vmem:[#allocation3 + $0x48] sm:$0xff]
    %v1104 = vld [vmem:[#allocation3 + $0x50] sm:$0xff]
    %v1105 = vld [vmem:[#allocation3 + $0x58] sm:$0xff]
    %v1106 = vld [vmem:[#allocation3 + $0x60] sm:$0xff]
    %v1107 = vld [vmem:[#allocation3 + $0x68] sm:$0xff]
    %v1108 = vld [vmem:[#allocation3 + $0x70] sm:$0xff]
    %v1109 = vld [vmem:[#allocation3 + $0x78] sm:$0xff]
    %v1110 = vld [vmem:[#allocation3 + $0x80] sm:$0xff]
    %v1111 = vld [vmem:[#allocation3 + $0x88] sm:$0xff]
    %v1112 = vld [vmem:[#allocation3 + $0x90] sm:$0xff]
    %v1113 = vld [vmem:[#allocation3 + $0x98] sm:$0xff]
    %v1114 = vld [vmem:[#allocation3 + $0xa0] sm:$0xff]
    %v1115 = vld [vmem:[#allocation3 + $0xa8] sm:$0xff]
    %v1116 = vld [vmem:[#allocation3 + $0xb0] sm:$0xff]
    %v1117 = vld [vmem:[#allocation3 + $0xb8] sm:$0xff]
    %v1118 = vld [vmem:[#allocation3 + $0xc0] sm:$0xff]
    %v1119 = vld [vmem:[#allocation3 + $0xc8] sm:$0xff]
    %v1120 = vld [vmem:[#allocation3 + $0xd0] sm:$0xff]
    %v1121 = vld [vmem:[#allocation3 + $0xd8] sm:$0xff]
    %v1122 = vld [vmem:[#allocation3 + $0xe0] sm:$0xff]
    %v1123 = vld [vmem:[#allocation3 + $0xe8] sm:$0xff]
    %v1124 = vld [vmem:[#allocation3 + $0xf0] sm:$0xff]
    %v1125 = vld [vmem:[#allocation3 + $0xf8] sm:$0xff]
    %v1126 = vld [vmem:[#allocation3 + $0x100] sm:$0xff]
    %v1127 = vld [vmem:[#allocation3 + $0x108] sm:$0xff]
    %v1128 = vld [vmem:[#allocation3 + $0x110] sm:$0xff]
    %v1129 = vld [vmem:[#allocation3 + $0x118] sm:$0xff]
    %v1130 = vld [vmem:[#allocation3 + $0x120] sm:$0xff]
    %v1131 = vld [vmem:[#allocation3 + $0x128] sm:$0xff]
    %v1132 = vld [vmem:[#allocation3 + $0x130] sm:$0xff]
    %v1133 = vld [vmem:[#allocation3 + $0x138] sm:$0xff]
    %v1134 = vld [vmem:[#allocation3 + $0x140] sm:$0xff]
    %v1135 = vld [vmem:[#allocation3 + $0x148] sm:$0xff]
    %v1136 = vld [vmem:[#allocation3 + $0x150] sm:$0xff]
    %v1137 = vld [vmem:[#allocation3 + $0x158] sm:$0xff]
    %v1138 = vld [vmem:[#allocation3 + $0x160] sm:$0xff]
    %v1139 = vld [vmem:[#allocation3 + $0x168] sm:$0xff]
    %v1140 = vld [vmem:[#allocation3 + $0x170] sm:$0xff]
    %v1141 = vld [vmem:[#allocation3 + $0x178] sm:$0xff]
    %v1142 = vld [vmem:[#allocation3 + $0x180] sm:$0xff]
    %v1143 = vld [vmem:[#allocation3 + $0x188] sm:$0xff]
    %v1144 = vld [vmem:[#allocation3 + $0x190] sm:$0xff]
    %v1145 = vld [vmem:[#allocation3 + $0x198] sm:$0xff]
    %v1146 = vld [vmem:[#allocation3 + $0x1a0] sm:$0xff]
    %v1147 = vld [vmem:[#allocation3 + $0x1a8] sm:$0xff]
    %v1148 = vld [vmem:[#allocation3 + $0x1b0] sm:$0xff]
    %v1149 = vld [vmem:[#allocation3 + $0x1b8] sm:$0xff]
    %v1150 = vld [vmem:[#allocation3 + $0x1c0] sm:$0xff]
    %v1151 = vld [vmem:[#allocation3 + $0x1c8] sm:$0xff]
    %v1152 = vld [vmem:[#allocation3 + $0x1d0] sm:$0xff]
    %v1153 = vld [vmem:[#allocation3 + $0x1d8] sm:$0xff]
    %v1154 = vld [vmem:[#allocation3 + $0x1e0] sm:$0xff]
    %v1155 = vld [vmem:[#allocation3 + $0x1e8] sm:$0xff]
    %v1156 = vld [vmem:[#allocation3 + $0x1f0] sm:$0xff]
    %v1157 = vld [vmem:[#allocation3 + $0x1f8] sm:$0xff]
    %1158 = vmatprep.subr.mxu0 %v1155
    %1159 = vmatpush1.msra.mxu0 %v1154
    %1160 = vmatprep.subr.mxu0 %v1151
    %1161 = vmatpush1.msra.mxu0 %v1150
    %1162 = vmatprep.subr.mxu0 %v1147
    %1163 = vmatpush1.msra.mxu0 %v1146
    %1164 = vmatprep.subr.mxu0 %v1143
    %1165 = vmatpush1.msra.mxu0 %v1142
    %1166 = vmatprep.subr.mxu0 %v1139
    %1167 = vmatpush1.msra.mxu0 %v1138
    %1168 = vmatprep.subr.mxu0 %v1135
    %1169 = vmatpush1.msra.mxu0 %v1134
    %1170 = vmatprep.subr.mxu0 %v1131
    %1171 = vmatpush1.msra.mxu0 %v1130
    %1172 = vmatprep.subr.mxu0 %v1127
    %1173 = vmatpush1.msra.mxu0 %v1126
    %1174 = vmatprep.subr.mxu0 %v1123
    %1175 = vmatpush1.msra.mxu0 %v1122
    %1176 = vmatprep.subr.mxu0 %v1119
    %1177 = vmatpush1.msra.mxu0 %v1118
    %1178 = vmatprep.subr.mxu0 %v1115
    %1179 = vmatpush1.msra.mxu0 %v1114
    %1180 = vmatprep.subr.mxu0 %v1111
    %1181 = vmatpush1.msra.mxu0 %v1110
    %1182 = vmatprep.subr.mxu0 %v1107
    %1183 = vmatpush1.msra.mxu0 %v1106
    %1184 = vmatprep.subr.mxu0 %v1103
    %1185 = vmatpush1.msra.mxu0 %v1102
    %1186 = vmatprep.subr.mxu0 %v1099
    %1187 = vmatpush1.msra.mxu0 %v1098
    %1188 = vmatprep.subr.mxu0 %v1095
    %1189 = vmatpush1.msra.mxu0 %v1094
    %1190 = vmatprep.subr.mxu0 0.0
    %1191 = vmatpush2.msra.mxu0 0.0
    %1192 = vmatprep.subr.mxu0 0.0
    %1193 = vmatpush2.msra.mxu0 0.0
    %1194 = vmatprep.subr.mxu0 0.0
    %1195 = vmatpush2.msra.mxu0 0.0
    %1196 = vmatprep.subr.mxu0 0.0
    %1197 = vmatpush2.msra.mxu0 0.0
    %1198 = vmatprep.subr.mxu0 0.0
    %1199 = vmatpush2.msra.mxu0 0.0
    %1200 = vmatprep.subr.mxu0 0.0
    %1201 = vmatpush2.msra.mxu0 0.0
    %1202 = vmatprep.subr.mxu0 0.0
    %1203 = vmatpush2.msra.mxu0 0.0
    %1204 = vmatprep.subr.mxu0 0.0
    %1205 = vmatpush2.msra.mxu0 0.0
    %1206 = vmatprep.subr.mxu0 0.0
    %1207 = vmatpush2.msra.mxu0 0.0
    %1208 = vmatprep.subr.mxu0 0.0
    %1209 = vmatpush2.msra.mxu0 0.0
    %1210 = vmatprep.subr.mxu0 0.0
    %1211 = vmatpush2.msra.mxu0 0.0
    %1212 = vmatprep.subr.mxu0 0.0
    %1213 = vmatpush2.msra.mxu0 0.0
    %1214 = vmatprep.subr.mxu0 0.0
    %1215 = vmatpush2.msra.mxu0 0.0
    %1216 = vmatprep.subr.mxu0 0.0
    %1217 = vmatpush2.msra.mxu0 0.0
    %1218 = vmatprep.subr.mxu0 0.0
    %1219 = vmatpush2.msra.mxu0 0.0
    %1220 = vmatprep.subr.mxu0 0.0
    %1221 = vmatpush2.msra.mxu0 0.0
    %1222 = vmatprep.mubr.f32.mxu0 0.0
    %1223 = vmatmul.mubr.f32.gmra.mxu0 %v1084
    %v1224 = vpop.f32.mrf.mxu0
    %v1225 = vadd.f32 0.0, %v1224
    %v1226 = vpop.f32.mrf.mxu0
    %v1227 = vadd.f32 0.0, %v1226
    %1228 = vdwg.mxu0
    %1229 = vmatprep.subr.mxu0 %v1157
    %1230 = vmatpush1.msra.mxu0 %v1156
    %1231 = vmatprep.subr.mxu0 %v1153
    %1232 = vmatpush1.msra.mxu0 %v1152
    %1233 = vmatprep.subr.mxu0 %v1149
    %1234 = vmatpush1.msra.mxu0 %v1148
    %1235 = vmatprep.subr.mxu0 %v1145
    %1236 = vmatpush1.msra.mxu0 %v1144
    %1237 = vmatprep.subr.mxu0 %v1141
    %1238 = vmatpush1.msra.mxu0 %v1140
    %1239 = vmatprep.subr.mxu0 %v1137
    %1240 = vmatpush1.msra.mxu0 %v1136
    %1241 = vmatprep.subr.mxu0 %v1133
    %1242 = vmatpush1.msra.mxu0 %v1132
    %1243 = vmatprep.subr.mxu0 %v1129
    %1244 = vmatpush1.msra.mxu0 %v1128
    %1245 = vmatprep.subr.mxu0 %v1125
    %1246 = vmatpush1.msra.mxu0 %v1124
    %1247 = vmatprep.subr.mxu0 %v1121
    %1248 = vmatpush1.msra.mxu0 %v1120
    %1249 = vmatprep.subr.mxu0 %v1117
    %1250 = vmatpush1.msra.mxu0 %v1116
    %1251 = vmatprep.subr.mxu0 %v1113
    %1252 = vmatpush1.msra.mxu0 %v1112
    %1253 = vmatprep.subr.mxu0 %v1109
    %1254 = vmatpush1.msra.mxu0 %v1108
    %1255 = vmatprep.subr.mxu0 %v1105
    %1256 = vmatpush1.msra.mxu0 %v1104
    %1257 = vmatprep.subr.mxu0 %v1101
    %1258 = vmatpush1.msra.mxu0 %v1100
    %1259 = vmatprep.subr.mxu0 %v1097
    %1260 = vmatpush1.msra.mxu0 %v1096
    %1261 = vmatprep.subr.mxu0 0.0
    %1262 = vmatpush2.msra.mxu0 0.0
    %1263 = vmatprep.subr.mxu0 0.0
    %1264 = vmatpush2.msra.mxu0 0.0
    %1265 = vmatprep.subr.mxu0 0.0
    %1266 = vmatpush2.msra.mxu0 0.0
    %1267 = vmatprep.subr.mxu0 0.0
    %1268 = vmatpush2.msra.mxu0 0.0
    %1269 = vmatprep.subr.mxu0 0.0
    %1270 = vmatpush2.msra.mxu0 0.0
    %1271 = vmatprep.subr.mxu0 0.0
    %1272 = vmatpush2.msra.mxu0 0.0
    %1273 = vmatprep.subr.mxu0 0.0
    %1274 = vmatpush2.msra.mxu0 0.0
    %1275 = vmatprep.subr.mxu0 0.0
    %1276 = vmatpush2.msra.mxu0 0.0
    %1277 = vmatprep.subr.mxu0 0.0
    %1278 = vmatpush2.msra.mxu0 0.0
    %1279 = vmatprep.subr.mxu0 0.0
    %1280 = vmatpush2.msra.mxu0 0.0
    %1281 = vmatprep.subr.mxu0 0.0
    %1282 = vmatpush2.msra.mxu0 0.0
    %1283 = vmatprep.subr.mxu0 0.0
    %1284 = vmatpush2.msra.mxu0 0.0
    %1285 = vmatprep.subr.mxu0 0.0
    %1286 = vmatpush2.msra.mxu0 0.0
    %1287 = vmatprep.subr.mxu0 0.0
    %1288 = vmatpush2.msra.mxu0 0.0
    %1289 = vmatprep.subr.mxu0 0.0
    %1290 = vmatpush2.msra.mxu0 0.0
    %1291 = vmatprep.subr.mxu0 0.0
    %1292 = vmatpush2.msra.mxu0 0.0
    %1293 = vmatprep.mubr.f32.mxu0 0.0
    %1294 = vmatmul.mubr.f32.gmra.mxu0 %v1084
    %v1295 = vpop.f32.mrf.mxu0
    %v1296 = vadd.f32 0.0, %v1295
    %v1297 = vpop.f32.mrf.mxu0
    %v1298 = vadd.f32 0.0, %v1297
    %1299 = vdwg.mxu0
    %v1300 = vadd.f32 %v1090, %v1225
    %v1301 = vadd.f32 %v1091, %v1227
    %v1302 = vadd.f32 %v1092, %v1296
    %v1303 = vadd.f32 %v1093, %v1298
    %v1304 = vxor.u32 %v1300, 2147483648
    %v1305 = vmul.f32 %v1304, 1.442695
    %v1306 = vpow.pop %v1305
    %v1307 = vadd.f32 %v1306, 1.0
    %v1308 = vrcp.pop %v1307
    %v1309 = vmul.f32 1.0, %v1308
    %v1310 = vxor.u32 %v1301, 2147483648
    %v1311 = vmul.f32 %v1310, 1.442695
    %v1312 = vpow.pop %v1311
    %v1313 = vadd.f32 %v1312, 1.0
    %v1314 = vrcp.pop %v1313
    %v1315 = vmul.f32 1.0, %v1314
    %v1316 = vtanh.pop %v1302
    %v1317 = vxor.u32 %v1303, 2147483648
    %v1318 = vmul.f32 %v1317, 1.442695
    %v1319 = vpow.pop %v1318
    %v1320 = vadd.f32 %v1319, 1.0
    %v1321 = vrcp.pop %v1320
    %v1322 = vmul.f32 1.0, %v1321
    %v1323 = vmul.f32 %v1315, %v1082
    %v1324 = vmul.f32 %v1309, %v1316
    %v1325 = vadd.f32 %v1323, %v1324
    %v1326 = vtanh.pop %v1325
    %v1327 = vmul.f32 %v1322, %v1326
    %s1328 = scalar_lea.vmem %s4, 24
    %1329 = vst [vmem:[%s1328] sm:$0xff] %v1327
    %s1330 = smul.u32 4, 4
    %s1331 = smul.addr %s1330, 8
    %s1332 = scalar_lea.vmem [#allocation2], %s1331
    %v1333 = vld [vmem:[%s1332] sm:$0xff]
    %v1334 = vld [vmem:[%s1332 + $0x8] sm:$0xff]
    %v1335 = vld [vmem:[%s1332 + $0x10] sm:$0xff]
    %v1336 = vld [vmem:[%s1332 + $0x18] sm:$0xff]
    %v1337 = vld [vmem:[#allocation3] sm:$0xff]
    %v1338 = vld [vmem:[#allocation3 + $0x8] sm:$0xff]
    %v1339 = vld [vmem:[#allocation3 + $0x10] sm:$0xff]
    %v1340 = vld [vmem:[#allocation3 + $0x18] sm:$0xff]
    %v1341 = vld [vmem:[#allocation3 + $0x20] sm:$0xff]
    %v1342 = vld [vmem:[#allocation3 + $0x28] sm:$0xff]
    %v1343 = vld [vmem:[#allocation3 + $0x30] sm:$0xff]
    %v1344 = vld [vmem:[#allocation3 + $0x38] sm:$0xff]
    %v1345 = vld [vmem:[#allocation3 + $0x40] sm:$0xff]
    %v1346 = vld [vmem:[#allocation3 + $0x48] sm:$0xff]
    %v1347 = vld [vmem:[#allocation3 + $0x50] sm:$0xff]
    %v1348 = vld [vmem:[#allocation3 + $0x58] sm:$0xff]
    %v1349 = vld [vmem:[#allocation3 + $0x60] sm:$0xff]
    %v1350 = vld [vmem:[#allocation3 + $0x68] sm:$0xff]
    %v1351 = vld [vmem:[#allocation3 + $0x70] sm:$0xff]
    %v1352 = vld [vmem:[#allocation3 + $0x78] sm:$0xff]
    %v1353 = vld [vmem:[#allocation3 + $0x80] sm:$0xff]
    %v1354 = vld [vmem:[#allocation3 + $0x88] sm:$0xff]
    %v1355 = vld [vmem:[#allocation3 + $0x90] sm:$0xff]
    %v1356 = vld [vmem:[#allocation3 + $0x98] sm:$0xff]
    %v1357 = vld [vmem:[#allocation3 + $0xa0] sm:$0xff]
    %v1358 = vld [vmem:[#allocation3 + $0xa8] sm:$0xff]
    %v1359 = vld [vmem:[#allocation3 + $0xb0] sm:$0xff]
    %v1360 = vld [vmem:[#allocation3 + $0xb8] sm:$0xff]
    %v1361 = vld [vmem:[#allocation3 + $0xc0] sm:$0xff]
    %v1362 = vld [vmem:[#allocation3 + $0xc8] sm:$0xff]
    %v1363 = vld [vmem:[#allocation3 + $0xd0] sm:$0xff]
    %v1364 = vld [vmem:[#allocation3 + $0xd8] sm:$0xff]
    %v1365 = vld [vmem:[#allocation3 + $0xe0] sm:$0xff]
    %v1366 = vld [vmem:[#allocation3 + $0xe8] sm:$0xff]
    %v1367 = vld [vmem:[#allocation3 + $0xf0] sm:$0xff]
    %v1368 = vld [vmem:[#allocation3 + $0xf8] sm:$0xff]
    %v1369 = vld [vmem:[#allocation3 + $0x100] sm:$0xff]
    %v1370 = vld [vmem:[#allocation3 + $0x108] sm:$0xff]
    %v1371 = vld [vmem:[#allocation3 + $0x110] sm:$0xff]
    %v1372 = vld [vmem:[#allocation3 + $0x118] sm:$0xff]
    %v1373 = vld [vmem:[#allocation3 + $0x120] sm:$0xff]
    %v1374 = vld [vmem:[#allocation3 + $0x128] sm:$0xff]
    %v1375 = vld [vmem:[#allocation3 + $0x130] sm:$0xff]
    %v1376 = vld [vmem:[#allocation3 + $0x138] sm:$0xff]
    %v1377 = vld [vmem:[#allocation3 + $0x140] sm:$0xff]
    %v1378 = vld [vmem:[#allocation3 + $0x148] sm:$0xff]
    %v1379 = vld [vmem:[#allocation3 + $0x150] sm:$0xff]
    %v1380 = vld [vmem:[#allocation3 + $0x158] sm:$0xff]
    %v1381 = vld [vmem:[#allocation3 + $0x160] sm:$0xff]
    %v1382 = vld [vmem:[#allocation3 + $0x168] sm:$0xff]
    %v1383 = vld [vmem:[#allocation3 + $0x170] sm:$0xff]
    %v1384 = vld [vmem:[#allocation3 + $0x178] sm:$0xff]
    %v1385 = vld [vmem:[#allocation3 + $0x180] sm:$0xff]
    %v1386 = vld [vmem:[#allocation3 + $0x188] sm:$0xff]
    %v1387 = vld [vmem:[#allocation3 + $0x190] sm:$0xff]
    %v1388 = vld [vmem:[#allocation3 + $0x198] sm:$0xff]
    %v1389 = vld [vmem:[#allocation3 + $0x1a0] sm:$0xff]
    %v1390 = vld [vmem:[#allocation3 + $0x1a8] sm:$0xff]
    %v1391 = vld [vmem:[#allocation3 + $0x1b0] sm:$0xff]
    %v1392 = vld [vmem:[#allocation3 + $0x1b8] sm:$0xff]
    %v1393 = vld [vmem:[#allocation3 + $0x1c0] sm:$0xff]
    %v1394 = vld [vmem:[#allocation3 + $0x1c8] sm:$0xff]
    %v1395 = vld [vmem:[#allocation3 + $0x1d0] sm:$0xff]
    %v1396 = vld [vmem:[#allocation3 + $0x1d8] sm:$0xff]
    %v1397 = vld [vmem:[#allocation3 + $0x1e0] sm:$0xff]
    %v1398 = vld [vmem:[#allocation3 + $0x1e8] sm:$0xff]
    %v1399 = vld [vmem:[#allocation3 + $0x1f0] sm:$0xff]
    %v1400 = vld [vmem:[#allocation3 + $0x1f8] sm:$0xff]
    %1401 = vmatprep.subr.mxu0 %v1398
    %1402 = vmatpush1.msra.mxu0 %v1397
    %1403 = vmatprep.subr.mxu0 %v1394
    %1404 = vmatpush1.msra.mxu0 %v1393
    %1405 = vmatprep.subr.mxu0 %v1390
    %1406 = vmatpush1.msra.mxu0 %v1389
    %1407 = vmatprep.subr.mxu0 %v1386
    %1408 = vmatpush1.msra.mxu0 %v1385
    %1409 = vmatprep.subr.mxu0 %v1382
    %1410 = vmatpush1.msra.mxu0 %v1381
    %1411 = vmatprep.subr.mxu0 %v1378
    %1412 = vmatpush1.msra.mxu0 %v1377
    %1413 = vmatprep.subr.mxu0 %v1374
    %1414 = vmatpush1.msra.mxu0 %v1373
    %1415 = vmatprep.subr.mxu0 %v1370
    %1416 = vmatpush1.msra.mxu0 %v1369
    %1417 = vmatprep.subr.mxu0 %v1366
    %1418 = vmatpush1.msra.mxu0 %v1365
    %1419 = vmatprep.subr.mxu0 %v1362
    %1420 = vmatpush1.msra.mxu0 %v1361
    %1421 = vmatprep.subr.mxu0 %v1358
    %1422 = vmatpush1.msra.mxu0 %v1357
    %1423 = vmatprep.subr.mxu0 %v1354
    %1424 = vmatpush1.msra.mxu0 %v1353
    %1425 = vmatprep.subr.mxu0 %v1350
    %1426 = vmatpush1.msra.mxu0 %v1349
    %1427 = vmatprep.subr.mxu0 %v1346
    %1428 = vmatpush1.msra.mxu0 %v1345
    %1429 = vmatprep.subr.mxu0 %v1342
    %1430 = vmatpush1.msra.mxu0 %v1341
    %1431 = vmatprep.subr.mxu0 %v1338
    %1432 = vmatpush1.msra.mxu0 %v1337
    %1433 = vmatprep.subr.mxu0 0.0
    %1434 = vmatpush2.msra.mxu0 0.0
    %1435 = vmatprep.subr.mxu0 0.0
    %1436 = vmatpush2.msra.mxu0 0.0
    %1437 = vmatprep.subr.mxu0 0.0
    %1438 = vmatpush2.msra.mxu0 0.0
    %1439 = vmatprep.subr.mxu0 0.0
    %1440 = vmatpush2.msra.mxu0 0.0
    %1441 = vmatprep.subr.mxu0 0.0
    %1442 = vmatpush2.msra.mxu0 0.0
    %1443 = vmatprep.subr.mxu0 0.0
    %1444 = vmatpush2.msra.mxu0 0.0
    %1445 = vmatprep.subr.mxu0 0.0
    %1446 = vmatpush2.msra.mxu0 0.0
    %1447 = vmatprep.subr.mxu0 0.0
    %1448 = vmatpush2.msra.mxu0 0.0
    %1449 = vmatprep.subr.mxu0 0.0
    %1450 = vmatpush2.msra.mxu0 0.0
    %1451 = vmatprep.subr.mxu0 0.0
    %1452 = vmatpush2.msra.mxu0 0.0
    %1453 = vmatprep.subr.mxu0 0.0
    %1454 = vmatpush2.msra.mxu0 0.0
    %1455 = vmatprep.subr.mxu0 0.0
    %1456 = vmatpush2.msra.mxu0 0.0
    %1457 = vmatprep.subr.mxu0 0.0
    %1458 = vmatpush2.msra.mxu0 0.0
    %1459 = vmatprep.subr.mxu0 0.0
    %1460 = vmatpush2.msra.mxu0 0.0
    %1461 = vmatprep.subr.mxu0 0.0
    %1462 = vmatpush2.msra.mxu0 0.0
    %1463 = vmatprep.subr.mxu0 0.0
    %1464 = vmatpush2.msra.mxu0 0.0
    %1465 = vmatprep.mubr.f32.mxu0 0.0
    %1466 = vmatmul.mubr.f32.gmra.mxu0 %v1327
    %v1467 = vpop.f32.mrf.mxu0
    %v1468 = vadd.f32 0.0, %v1467
    %v1469 = vpop.f32.mrf.mxu0
    %v1470 = vadd.f32 0.0, %v1469
    %1471 = vdwg.mxu0
    %1472 = vmatprep.subr.mxu0 %v1400
    %1473 = vmatpush1.msra.mxu0 %v1399
    %1474 = vmatprep.subr.mxu0 %v1396
    %1475 = vmatpush1.msra.mxu0 %v1395
    %1476 = vmatprep.subr.mxu0 %v1392
    %1477 = vmatpush1.msra.mxu0 %v1391
    %1478 = vmatprep.subr.mxu0 %v1388
    %1479 = vmatpush1.msra.mxu0 %v1387
    %1480 = vmatprep.subr.mxu0 %v1384
    %1481 = vmatpush1.msra.mxu0 %v1383
    %1482 = vmatprep.subr.mxu0 %v1380
    %1483 = vmatpush1.msra.mxu0 %v1379
    %1484 = vmatprep.subr.mxu0 %v1376
    %1485 = vmatpush1.msra.mxu0 %v1375
    %1486 = vmatprep.subr.mxu0 %v1372
    %1487 = vmatpush1.msra.mxu0 %v1371
    %1488 = vmatprep.subr.mxu0 %v1368
    %1489 = vmatpush1.msra.mxu0 %v1367
    %1490 = vmatprep.subr.mxu0 %v1364
    %1491 = vmatpush1.msra.mxu0 %v1363
    %1492 = vmatprep.subr.mxu0 %v1360
    %1493 = vmatpush1.msra.mxu0 %v1359
    %1494 = vmatprep.subr.mxu0 %v1356
    %1495 = vmatpush1.msra.mxu0 %v1355
    %1496 = vmatprep.subr.mxu0 %v1352
    %1497 = vmatpush1.msra.mxu0 %v1351
    %1498 = vmatprep.subr.mxu0 %v1348
    %1499 = vmatpush1.msra.mxu0 %v1347
    %1500 = vmatprep.subr.mxu0 %v1344
    %1501 = vmatpush1.msra.mxu0 %v1343
    %1502 = vmatprep.subr.mxu0 %v1340
    %1503 = vmatpush1.msra.mxu0 %v1339
    %1504 = vmatprep.subr.mxu0 0.0
    %1505 = vmatpush2.msra.mxu0 0.0
    %1506 = vmatprep.subr.mxu0 0.0
    %1507 = vmatpush2.msra.mxu0 0.0
    %1508 = vmatprep.subr.mxu0 0.0
    %1509 = vmatpush2.msra.mxu0 0.0
    %1510 = vmatprep.subr.mxu0 0.0
    %1511 = vmatpush2.msra.mxu0 0.0
    %1512 = vmatprep.subr.mxu0 0.0
    %1513 = vmatpush2.msra.mxu0 0.0
    %1514 = vmatprep.subr.mxu0 0.0
    %1515 = vmatpush2.msra.mxu0 0.0
    %1516 = vmatprep.subr.mxu0 0.0
    %1517 = vmatpush2.msra.mxu0 0.0
    %1518 = vmatprep.subr.mxu0 0.0
    %1519 = vmatpush2.msra.mxu0 0.0
    %1520 = vmatprep.subr.mxu0 0.0
    %1521 = vmatpush2.msra.mxu0 0.0
    %1522 = vmatprep.subr.mxu0 0.0
    %1523 = vmatpush2.msra.mxu0 0.0
    %1524 = vmatprep.subr.mxu0 0.0
    %1525 = vmatpush2.msra.mxu0 0.0
    %1526 = vmatprep.subr.mxu0 0.0
    %1527 = vmatpush2.msra.mxu0 0.0
    %1528 = vmatprep.subr.mxu0 0.0
    %1529 = vmatpush2.msra.mxu0 0.0
    %1530 = vmatprep.subr.mxu0 0.0
    %1531 = vmatpush2.msra.mxu0 0.0
    %1532 = vmatprep.subr.mxu0 0.0
    %1533 = vmatpush2.msra.mxu0 0.0
    %1534 = vmatprep.subr.mxu0 0.0
    %1535 = vmatpush2.msra.mxu0 0.0
    %1536 = vmatprep.mubr.f32.mxu0 0.0
    %1537 = vmatmul.mubr.f32.gmra.mxu0 %v1327
    %v1538 = vpop.f32.mrf.mxu0
    %v1539 = vadd.f32 0.0, %v1538
    %v1540 = vpop.f32.mrf.mxu0
    %v1541 = vadd.f32 0.0, %v1540
    %1542 = vdwg.mxu0
    %v1543 = vadd.f32 %v1333, %v1468
    %v1544 = vadd.f32 %v1334, %v1470
    %v1545 = vadd.f32 %v1335, %v1539
    %v1546 = vadd.f32 %v1336, %v1541
    %v1547 = vxor.u32 %v1543, 2147483648
    %v1548 = vmul.f32 %v1547, 1.442695
    %v1549 = vpow.pop %v1548
    %v1550 = vadd.f32 %v1549, 1.0
    %v1551 = vrcp.pop %v1550
    %v1552 = vmul.f32 1.0, %v1551
    %v1553 = vxor.u32 %v1544, 2147483648
    %v1554 = vmul.f32 %v1553, 1.442695
    %v1555 = vpow.pop %v1554
    %v1556 = vadd.f32 %v1555, 1.0
    %v1557 = vrcp.pop %v1556
    %v1558 = vmul.f32 1.0, %v1557
    %v1559 = vtanh.pop %v1545
    %v1560 = vxor.u32 %v1546, 2147483648
    %v1561 = vmul.f32 %v1560, 1.442695
    %v1562 = vpow.pop %v1561
    %v1563 = vadd.f32 %v1562, 1.0
    %v1564 = vrcp.pop %v1563
    %v1565 = vmul.f32 1.0, %v1564
    %v1566 = vmul.f32 %v1558, %v1325
    %v1567 = vmul.f32 %v1552, %v1559
    %v1568 = vadd.f32 %v1566, %v1567
    %v1569 = vtanh.pop %v1568
    %v1570 = vmul.f32 %v1565, %v1569
    %s1571 = scalar_lea.vmem %s4, 32
    %1572 = vst [vmem:[%s1571] sm:$0xff] %v1570
    %s1573 = smul.u32 5, 4
    %s1574 = smul.addr %s1573, 8
    %s1575 = scalar_lea.vmem [#allocation2], %s1574
    %v1576 = vld [vmem:[%s1575] sm:$0xff]
    %v1577 = vld [vmem:[%s1575 + $0x8] sm:$0xff]
    %v1578 = vld [vmem:[%s1575 + $0x10] sm:$0xff]
    %v1579 = vld [vmem:[%s1575 + $0x18] sm:$0xff]
    %v1580 = vld [vmem:[#allocation3] sm:$0xff]
    %v1581 = vld [vmem:[#allocation3 + $0x8] sm:$0xff]
    %v1582 = vld [vmem:[#allocation3 + $0x10] sm:$0xff]
    %v1583 = vld [vmem:[#allocation3 + $0x18] sm:$0xff]
    %v1584 = vld [vmem:[#allocation3 + $0x20] sm:$0xff]
    %v1585 = vld [vmem:[#allocation3 + $0x28] sm:$0xff]
    %v1586 = vld [vmem:[#allocation3 + $0x30] sm:$0xff]
    %v1587 = vld [vmem:[#allocation3 + $0x38] sm:$0xff]
    %v1588 = vld [vmem:[#allocation3 + $0x40] sm:$0xff]
    %v1589 = vld [vmem:[#allocation3 + $0x48] sm:$0xff]
    %v1590 = vld [vmem:[#allocation3 + $0x50] sm:$0xff]
    %v1591 = vld [vmem:[#allocation3 + $0x58] sm:$0xff]
    %v1592 = vld [vmem:[#allocation3 + $0x60] sm:$0xff]
    %v1593 = vld [vmem:[#allocation3 + $0x68] sm:$0xff]
    %v1594 = vld [vmem:[#allocation3 + $0x70] sm:$0xff]
    %v1595 = vld [vmem:[#allocation3 + $0x78] sm:$0xff]
    %v1596 = vld [vmem:[#allocation3 + $0x80] sm:$0xff]
    %v1597 = vld [vmem:[#allocation3 + $0x88] sm:$0xff]
    %v1598 = vld [vmem:[#allocation3 + $0x90] sm:$0xff]
    %v1599 = vld [vmem:[#allocation3 + $0x98] sm:$0xff]
    %v1600 = vld [vmem:[#allocation3 + $0xa0] sm:$0xff]
    %v1601 = vld [vmem:[#allocation3 + $0xa8] sm:$0xff]
    %v1602 = vld [vmem:[#allocation3 + $0xb0] sm:$0xff]
    %v1603 = vld [vmem:[#allocation3 + $0xb8] sm:$0xff]
    %v1604 = vld [vmem:[#allocation3 + $0xc0] sm:$0xff]
    %v1605 = vld [vmem:[#allocation3 + $0xc8] sm:$0xff]
    %v1606 = vld [vmem:[#allocation3 + $0xd0] sm:$0xff]
    %v1607 = vld [vmem:[#allocation3 + $0xd8] sm:$0xff]
    %v1608 = vld [vmem:[#allocation3 + $0xe0] sm:$0xff]
    %v1609 = vld [vmem:[#allocation3 + $0xe8] sm:$0xff]
    %v1610 = vld [vmem:[#allocation3 + $0xf0] sm:$0xff]
    %v1611 = vld [vmem:[#allocation3 + $0xf8] sm:$0xff]
    %v1612 = vld [vmem:[#allocation3 + $0x100] sm:$0xff]
    %v1613 = vld [vmem:[#allocation3 + $0x108] sm:$0xff]
    %v1614 = vld [vmem:[#allocation3 + $0x110] sm:$0xff]
    %v1615 = vld [vmem:[#allocation3 + $0x118] sm:$0xff]
    %v1616 = vld [vmem:[#allocation3 + $0x120] sm:$0xff]
    %v1617 = vld [vmem:[#allocation3 + $0x128] sm:$0xff]
    %v1618 = vld [vmem:[#allocation3 + $0x130] sm:$0xff]
    %v1619 = vld [vmem:[#allocation3 + $0x138] sm:$0xff]
    %v1620 = vld [vmem:[#allocation3 + $0x140] sm:$0xff]
    %v1621 = vld [vmem:[#allocation3 + $0x148] sm:$0xff]
    %v1622 = vld [vmem:[#allocation3 + $0x150] sm:$0xff]
    %v1623 = vld [vmem:[#allocation3 + $0x158] sm:$0xff]
    %v1624 = vld [vmem:[#allocation3 + $0x160] sm:$0xff]
    %v1625 = vld [vmem:[#allocation3 + $0x168] sm:$0xff]
    %v1626 = vld [vmem:[#allocation3 + $0x170] sm:$0xff]
    %v1627 = vld [vmem:[#allocation3 + $0x178] sm:$0xff]
    %v1628 = vld [vmem:[#allocation3 + $0x180] sm:$0xff]
    %v1629 = vld [vmem:[#allocation3 + $0x188] sm:$0xff]
    %v1630 = vld [vmem:[#allocation3 + $0x190] sm:$0xff]
    %v1631 = vld [vmem:[#allocation3 + $0x198] sm:$0xff]
    %v1632 = vld [vmem:[#allocation3 + $0x1a0] sm:$0xff]
    %v1633 = vld [vmem:[#allocation3 + $0x1a8] sm:$0xff]
    %v1634 = vld [vmem:[#allocation3 + $0x1b0] sm:$0xff]
    %v1635 = vld [vmem:[#allocation3 + $0x1b8] sm:$0xff]
    %v1636 = vld [vmem:[#allocation3 + $0x1c0] sm:$0xff]
    %v1637 = vld [vmem:[#allocation3 + $0x1c8] sm:$0xff]
    %v1638 = vld [vmem:[#allocation3 + $0x1d0] sm:$0xff]
    %v1639 = vld [vmem:[#allocation3 + $0x1d8] sm:$0xff]
    %v1640 = vld [vmem:[#allocation3 + $0x1e0] sm:$0xff]
    %v1641 = vld [vmem:[#allocation3 + $0x1e8] sm:$0xff]
    %v1642 = vld [vmem:[#allocation3 + $0x1f0] sm:$0xff]
    %v1643 = vld [vmem:[#allocation3 + $0x1f8] sm:$0xff]
    %1644 = vmatprep.subr.mxu0 %v1641
    %1645 = vmatpush1.msra.mxu0 %v1640
    %1646 = vmatprep.subr.mxu0 %v1637
    %1647 = vmatpush1.msra.mxu0 %v1636
    %1648 = vmatprep.subr.mxu0 %v1633
    %1649 = vmatpush1.msra.mxu0 %v1632
    %1650 = vmatprep.subr.mxu0 %v1629
    %1651 = vmatpush1.msra.mxu0 %v1628
    %1652 = vmatprep.subr.mxu0 %v1625
    %1653 = vmatpush1.msra.mxu0 %v1624
    %1654 = vmatprep.subr.mxu0 %v1621
    %1655 = vmatpush1.msra.mxu0 %v1620
    %1656 = vmatprep.subr.mxu0 %v1617
    %1657 = vmatpush1.msra.mxu0 %v1616
    %1658 = vmatprep.subr.mxu0 %v1613
    %1659 = vmatpush1.msra.mxu0 %v1612
    %1660 = vmatprep.subr.mxu0 %v1609
    %1661 = vmatpush1.msra.mxu0 %v1608
    %1662 = vmatprep.subr.mxu0 %v1605
    %1663 = vmatpush1.msra.mxu0 %v1604
    %1664 = vmatprep.subr.mxu0 %v1601
    %1665 = vmatpush1.msra.mxu0 %v1600
    %1666 = vmatprep.subr.mxu0 %v1597
    %1667 = vmatpush1.msra.mxu0 %v1596
    %1668 = vmatprep.subr.mxu0 %v1593
    %1669 = vmatpush1.msra.mxu0 %v1592
    %1670 = vmatprep.subr.mxu0 %v1589
    %1671 = vmatpush1.msra.mxu0 %v1588
    %1672 = vmatprep.subr.mxu0 %v1585
    %1673 = vmatpush1.msra.mxu0 %v1584
    %1674 = vmatprep.subr.mxu0 %v1581
    %1675 = vmatpush1.msra.mxu0 %v1580
    %1676 = vmatprep.subr.mxu0 0.0
    %1677 = vmatpush2.msra.mxu0 0.0
    %1678 = vmatprep.subr.mxu0 0.0
    %1679 = vmatpush2.msra.mxu0 0.0
    %1680 = vmatprep.subr.mxu0 0.0
    %1681 = vmatpush2.msra.mxu0 0.0
    %1682 = vmatprep.subr.mxu0 0.0
    %1683 = vmatpush2.msra.mxu0 0.0
    %1684 = vmatprep.subr.mxu0 0.0
    %1685 = vmatpush2.msra.mxu0 0.0
    %1686 = vmatprep.subr.mxu0 0.0
    %1687 = vmatpush2.msra.mxu0 0.0
    %1688 = vmatprep.subr.mxu0 0.0
    %1689 = vmatpush2.msra.mxu0 0.0
    %1690 = vmatprep.subr.mxu0 0.0
    %1691 = vmatpush2.msra.mxu0 0.0
    %1692 = vmatprep.subr.mxu0 0.0
    %1693 = vmatpush2.msra.mxu0 0.0
    %1694 = vmatprep.subr.mxu0 0.0
    %1695 = vmatpush2.msra.mxu0 0.0
    %1696 = vmatprep.subr.mxu0 0.0
    %1697 = vmatpush2.msra.mxu0 0.0
    %1698 = vmatprep.subr.mxu0 0.0
    %1699 = vmatpush2.msra.mxu0 0.0
    %1700 = vmatprep.subr.mxu0 0.0
    %1701 = vmatpush2.msra.mxu0 0.0
    %1702 = vmatprep.subr.mxu0 0.0
    %1703 = vmatpush2.msra.mxu0 0.0
    %1704 = vmatprep.subr.mxu0 0.0
    %1705 = vmatpush2.msra.mxu0 0.0
    %1706 = vmatprep.subr.mxu0 0.0
    %1707 = vmatpush2.msra.mxu0 0.0
    %1708 = vmatprep.mubr.f32.mxu0 0.0
    %1709 = vmatmul.mubr.f32.gmra.mxu0 %v1570
    %v1710 = vpop.f32.mrf.mxu0
    %v1711 = vadd.f32 0.0, %v1710
    %v1712 = vpop.f32.mrf.mxu0
    %v1713 = vadd.f32 0.0, %v1712
    %1714 = vdwg.mxu0
    %1715 = vmatprep.subr.mxu0 %v1643
    %1716 = vmatpush1.msra.mxu0 %v1642
    %1717 = vmatprep.subr.mxu0 %v1639
    %1718 = vmatpush1.msra.mxu0 %v1638
    %1719 = vmatprep.subr.mxu0 %v1635
    %1720 = vmatpush1.msra.mxu0 %v1634
    %1721 = vmatprep.subr.mxu0 %v1631
    %1722 = vmatpush1.msra.mxu0 %v1630
    %1723 = vmatprep.subr.mxu0 %v1627
    %1724 = vmatpush1.msra.mxu0 %v1626
    %1725 = vmatprep.subr.mxu0 %v1623
    %1726 = vmatpush1.msra.mxu0 %v1622
    %1727 = vmatprep.subr.mxu0 %v1619
    %1728 = vmatpush1.msra.mxu0 %v1618
    %1729 = vmatprep.subr.mxu0 %v1615
    %1730 = vmatpush1.msra.mxu0 %v1614
    %1731 = vmatprep.subr.mxu0 %v1611
    %1732 = vmatpush1.msra.mxu0 %v1610
    %1733 = vmatprep.subr.mxu0 %v1607
    %1734 = vmatpush1.msra.mxu0 %v1606
    %1735 = vmatprep.subr.mxu0 %v1603
    %1736 = vmatpush1.msra.mxu0 %v1602
    %1737 = vmatprep.subr.mxu0 %v1599
    %1738 = vmatpush1.msra.mxu0 %v1598
    %1739 = vmatprep.subr.mxu0 %v1595
    %1740 = vmatpush1.msra.mxu0 %v1594
    %1741 = vmatprep.subr.mxu0 %v1591
    %1742 = vmatpush1.msra.mxu0 %v1590
    %1743 = vmatprep.subr.mxu0 %v1587
    %1744 = vmatpush1.msra.mxu0 %v1586
    %1745 = vmatprep.subr.mxu0 %v1583
    %1746 = vmatpush1.msra.mxu0 %v1582
    %1747 = vmatprep.subr.mxu0 0.0
    %1748 = vmatpush2.msra.mxu0 0.0
    %1749 = vmatprep.subr.mxu0 0.0
    %1750 = vmatpush2.msra.mxu0 0.0
    %1751 = vmatprep.subr.mxu0 0.0
    %1752 = vmatpush2.msra.mxu0 0.0
    %1753 = vmatprep.subr.mxu0 0.0
    %1754 = vmatpush2.msra.mxu0 0.0
    %1755 = vmatprep.subr.mxu0 0.0
    %1756 = vmatpush2.msra.mxu0 0.0
    %1757 = vmatprep.subr.mxu0 0.0
    %1758 = vmatpush2.msra.mxu0 0.0
    %1759 = vmatprep.subr.mxu0 0.0
    %1760 = vmatpush2.msra.mxu0 0.0
    %1761 = vmatprep.subr.mxu0 0.0
    %1762 = vmatpush2.msra.mxu0 0.0
    %1763 = vmatprep.subr.mxu0 0.0
    %1764 = vmatpush2.msra.mxu0 0.0
    %1765 = vmatprep.subr.mxu0 0.0
    %1766 = vmatpush2.msra.mxu0 0.0
    %1767 = vmatprep.subr.mxu0 0.0
    %1768 = vmatpush2.msra.mxu0 0.0
    %1769 = vmatprep.subr.mxu0 0.0
    %1770 = vmatpush2.msra.mxu0 0.0
    %1771 = vmatprep.subr.mxu0 0.0
    %1772 = vmatpush2.msra.mxu0 0.0
    %1773 = vmatprep.subr.mxu0 0.0
    %1774 = vmatpush2.msra.mxu0 0.0
    %1775 = vmatprep.subr.mxu0 0.0
    %1776 = vmatpush2.msra.mxu0 0.0
    %1777 = vmatprep.subr.mxu0 0.0
    %1778 = vmatpush2.msra.mxu0 0.0
    %1779 = vmatprep.mubr.f32.mxu0 0.0
    %1780 = vmatmul.mubr.f32.gmra.mxu0 %v1570
    %v1781 = vpop.f32.mrf.mxu0
    %v1782 = vadd.f32 0.0, %v1781
    %v1783 = vpop.f32.mrf.mxu0
    %v1784 = vadd.f32 0.0, %v1783
    %1785 = vdwg.mxu0
    %v1786 = vadd.f32 %v1576, %v1711
    %v1787 = vadd.f32 %v1577, %v1713
    %v1788 = vadd.f32 %v1578, %v1782
    %v1789 = vadd.f32 %v1579, %v1784
    %v1790 = vxor.u32 %v1786, 2147483648
    %v1791 = vmul.f32 %v1790, 1.442695
    %v1792 = vpow.pop %v1791
    %v1793 = vadd.f32 %v1792, 1.0
    %v1794 = vrcp.pop %v1793
    %v1795 = vmul.f32 1.0, %v1794
    %v1796 = vxor.u32 %v1787, 2147483648
    %v1797 = vmul.f32 %v1796, 1.442695
    %v1798 = vpow.pop %v1797
    %v1799 = vadd.f32 %v1798, 1.0
    %v1800 = vrcp.pop %v1799
    %v1801 = vmul.f32 1.0, %v1800
    %v1802 = vtanh.pop %v1788
    %v1803 = vxor.u32 %v1789, 2147483648
    %v1804 = vmul.f32 %v1803, 1.442695
    %v1805 = vpow.pop %v1804
    %v1806 = vadd.f32 %v1805, 1.0
    %v1807 = vrcp.pop %v1806
    %v1808 = vmul.f32 1.0, %v1807
    %v1809 = vmul.f32 %v1801, %v1568
    %v1810 = vmul.f32 %v1795, %v1802
    %v1811 = vadd.f32 %v1809, %v1810
    %v1812 = vtanh.pop %v1811
    %v1813 = vmul.f32 %v1808, %v1812
    %s1814 = scalar_lea.vmem %s4, 40
    %1815 = vst [vmem:[%s1814] sm:$0xff] %v1813
    %s1816 = smul.u32 6, 4
    %s1817 = smul.addr %s1816, 8
    %s1818 = scalar_lea.vmem [#allocation2], %s1817
    %v1819 = vld [vmem:[%s1818] sm:$0xff]
    %v1820 = vld [vmem:[%s1818 + $0x8] sm:$0xff]
    %v1821 = vld [vmem:[%s1818 + $0x10] sm:$0xff]
    %v1822 = vld [vmem:[%s1818 + $0x18] sm:$0xff]
    %v1823 = vld [vmem:[#allocation3] sm:$0xff]
    %v1824 = vld [vmem:[#allocation3 + $0x8] sm:$0xff]
    %v1825 = vld [vmem:[#allocation3 + $0x10] sm:$0xff]
    %v1826 = vld [vmem:[#allocation3 + $0x18] sm:$0xff]
    %v1827 = vld [vmem:[#allocation3 + $0x20] sm:$0xff]
    %v1828 = vld [vmem:[#allocation3 + $0x28] sm:$0xff]
    %v1829 = vld [vmem:[#allocation3 + $0x30] sm:$0xff]
    %v1830 = vld [vmem:[#allocation3 + $0x38] sm:$0xff]
    %v1831 = vld [vmem:[#allocation3 + $0x40] sm:$0xff]
    %v1832 = vld [vmem:[#allocation3 + $0x48] sm:$0xff]
    %v1833 = vld [vmem:[#allocation3 + $0x50] sm:$0xff]
    %v1834 = vld [vmem:[#allocation3 + $0x58] sm:$0xff]
    %v1835 = vld [vmem:[#allocation3 + $0x60] sm:$0xff]
    %v1836 = vld [vmem:[#allocation3 + $0x68] sm:$0xff]
    %v1837 = vld [vmem:[#allocation3 + $0x70] sm:$0xff]
    %v1838 = vld [vmem:[#allocation3 + $0x78] sm:$0xff]
    %v1839 = vld [vmem:[#allocation3 + $0x80] sm:$0xff]
    %v1840 = vld [vmem:[#allocation3 + $0x88] sm:$0xff]
    %v1841 = vld [vmem:[#allocation3 + $0x90] sm:$0xff]
    %v1842 = vld [vmem:[#allocation3 + $0x98] sm:$0xff]
    %v1843 = vld [vmem:[#allocation3 + $0xa0] sm:$0xff]
    %v1844 = vld [vmem:[#allocation3 + $0xa8] sm:$0xff]
    %v1845 = vld [vmem:[#allocation3 + $0xb0] sm:$0xff]
    %v1846 = vld [vmem:[#allocation3 + $0xb8] sm:$0xff]
    %v1847 = vld [vmem:[#allocation3 + $0xc0] sm:$0xff]
    %v1848 = vld [vmem:[#allocation3 + $0xc8] sm:$0xff]
    %v1849 = vld [vmem:[#allocation3 + $0xd0] sm:$0xff]
    %v1850 = vld [vmem:[#allocation3 + $0xd8] sm:$0xff]
    %v1851 = vld [vmem:[#allocation3 + $0xe0] sm:$0xff]
    %v1852 = vld [vmem:[#allocation3 + $0xe8] sm:$0xff]
    %v1853 = vld [vmem:[#allocation3 + $0xf0] sm:$0xff]
    %v1854 = vld [vmem:[#allocation3 + $0xf8] sm:$0xff]
    %v1855 = vld [vmem:[#allocation3 + $0x100] sm:$0xff]
    %v1856 = vld [vmem:[#allocation3 + $0x108] sm:$0xff]
    %v1857 = vld [vmem:[#allocation3 + $0x110] sm:$0xff]
    %v1858 = vld [vmem:[#allocation3 + $0x118] sm:$0xff]
    %v1859 = vld [vmem:[#allocation3 + $0x120] sm:$0xff]
    %v1860 = vld [vmem:[#allocation3 + $0x128] sm:$0xff]
    %v1861 = vld [vmem:[#allocation3 + $0x130] sm:$0xff]
    %v1862 = vld [vmem:[#allocation3 + $0x138] sm:$0xff]
    %v1863 = vld [vmem:[#allocation3 + $0x140] sm:$0xff]
    %v1864 = vld [vmem:[#allocation3 + $0x148] sm:$0xff]
    %v1865 = vld [vmem:[#allocation3 + $0x150] sm:$0xff]
    %v1866 = vld [vmem:[#allocation3 + $0x158] sm:$0xff]
    %v1867 = vld [vmem:[#allocation3 + $0x160] sm:$0xff]
    %v1868 = vld [vmem:[#allocation3 + $0x168] sm:$0xff]
    %v1869 = vld [vmem:[#allocation3 + $0x170] sm:$0xff]
    %v1870 = vld [vmem:[#allocation3 + $0x178] sm:$0xff]
    %v1871 = vld [vmem:[#allocation3 + $0x180] sm:$0xff]
    %v1872 = vld [vmem:[#allocation3 + $0x188] sm:$0xff]
    %v1873 = vld [vmem:[#allocation3 + $0x190] sm:$0xff]
    %v1874 = vld [vmem:[#allocation3 + $0x198] sm:$0xff]
    %v1875 = vld [vmem:[#allocation3 + $0x1a0] sm:$0xff]
    %v1876 = vld [vmem:[#allocation3 + $0x1a8] sm:$0xff]
    %v1877 = vld [vmem:[#allocation3 + $0x1b0] sm:$0xff]
    %v1878 = vld [vmem:[#allocation3 + $0x1b8] sm:$0xff]
    %v1879 = vld [vmem:[#allocation3 + $0x1c0] sm:$0xff]
    %v1880 = vld [vmem:[#allocation3 + $0x1c8] sm:$0xff]
    %v1881 = vld [vmem:[#allocation3 + $0x1d0] sm:$0xff]
    %v1882 = vld [vmem:[#allocation3 + $0x1d8] sm:$0xff]
    %v1883 = vld [vmem:[#allocation3 + $0x1e0] sm:$0xff]
    %v1884 = vld [vmem:[#allocation3 + $0x1e8] sm:$0xff]
    %v1885 = vld [vmem:[#allocation3 + $0x1f0] sm:$0xff]
    %v1886 = vld [vmem:[#allocation3 + $0x1f8] sm:$0xff]
    %1887 = vmatprep.subr.mxu0 %v1884
    %1888 = vmatpush1.msra.mxu0 %v1883
    %1889 = vmatprep.subr.mxu0 %v1880
    %1890 = vmatpush1.msra.mxu0 %v1879
    %1891 = vmatprep.subr.mxu0 %v1876
    %1892 = vmatpush1.msra.mxu0 %v1875
    %1893 = vmatprep.subr.mxu0 %v1872
    %1894 = vmatpush1.msra.mxu0 %v1871
    %1895 = vmatprep.subr.mxu0 %v1868
    %1896 = vmatpush1.msra.mxu0 %v1867
    %1897 = vmatprep.subr.mxu0 %v1864
    %1898 = vmatpush1.msra.mxu0 %v1863
    %1899 = vmatprep.subr.mxu0 %v1860
    %1900 = vmatpush1.msra.mxu0 %v1859
    %1901 = vmatprep.subr.mxu0 %v1856
    %1902 = vmatpush1.msra.mxu0 %v1855
    %1903 = vmatprep.subr.mxu0 %v1852
    %1904 = vmatpush1.msra.mxu0 %v1851
    %1905 = vmatprep.subr.mxu0 %v1848
    %1906 = vmatpush1.msra.mxu0 %v1847
    %1907 = vmatprep.subr.mxu0 %v1844
    %1908 = vmatpush1.msra.mxu0 %v1843
    %1909 = vmatprep.subr.mxu0 %v1840
    %1910 = vmatpush1.msra.mxu0 %v1839
    %1911 = vmatprep.subr.mxu0 %v1836
    %1912 = vmatpush1.msra.mxu0 %v1835
    %1913 = vmatprep.subr.mxu0 %v1832
    %1914 = vmatpush1.msra.mxu0 %v1831
    %1915 = vmatprep.subr.mxu0 %v1828
    %1916 = vmatpush1.msra.mxu0 %v1827
    %1917 = vmatprep.subr.mxu0 %v1824
    %1918 = vmatpush1.msra.mxu0 %v1823
    %1919 = vmatprep.subr.mxu0 0.0
    %1920 = vmatpush2.msra.mxu0 0.0
    %1921 = vmatprep.subr.mxu0 0.0
    %1922 = vmatpush2.msra.mxu0 0.0
    %1923 = vmatprep.subr.mxu0 0.0
    %1924 = vmatpush2.msra.mxu0 0.0
    %1925 = vmatprep.subr.mxu0 0.0
    %1926 = vmatpush2.msra.mxu0 0.0
    %1927 = vmatprep.subr.mxu0 0.0
    %1928 = vmatpush2.msra.mxu0 0.0
    %1929 = vmatprep.subr.mxu0 0.0
    %1930 = vmatpush2.msra.mxu0 0.0
    %1931 = vmatprep.subr.mxu0 0.0
    %1932 = vmatpush2.msra.mxu0 0.0
    %1933 = vmatprep.subr.mxu0 0.0
    %1934 = vmatpush2.msra.mxu0 0.0
    %1935 = vmatprep.subr.mxu0 0.0
    %1936 = vmatpush2.msra.mxu0 0.0
    %1937 = vmatprep.subr.mxu0 0.0
    %1938 = vmatpush2.msra.mxu0 0.0
    %1939 = vmatprep.subr.mxu0 0.0
    %1940 = vmatpush2.msra.mxu0 0.0
    %1941 = vmatprep.subr.mxu0 0.0
    %1942 = vmatpush2.msra.mxu0 0.0
    %1943 = vmatprep.subr.mxu0 0.0
    %1944 = vmatpush2.msra.mxu0 0.0
    %1945 = vmatprep.subr.mxu0 0.0
    %1946 = vmatpush2.msra.mxu0 0.0
    %1947 = vmatprep.subr.mxu0 0.0
    %1948 = vmatpush2.msra.mxu0 0.0
    %1949 = vmatprep.subr.mxu0 0.0
    %1950 = vmatpush2.msra.mxu0 0.0
    %1951 = vmatprep.mubr.f32.mxu0 0.0
    %1952 = vmatmul.mubr.f32.gmra.mxu0 %v1813
    %v1953 = vpop.f32.mrf.mxu0
    %v1954 = vadd.f32 0.0, %v1953
    %v1955 = vpop.f32.mrf.mxu0
    %v1956 = vadd.f32 0.0, %v1955
    %1957 = vdwg.mxu0
    %1958 = vmatprep.subr.mxu0 %v1886
    %1959 = vmatpush1.msra.mxu0 %v1885
    %1960 = vmatprep.subr.mxu0 %v1882
    %1961 = vmatpush1.msra.mxu0 %v1881
    %1962 = vmatprep.subr.mxu0 %v1878
    %1963 = vmatpush1.msra.mxu0 %v1877
    %1964 = vmatprep.subr.mxu0 %v1874
    %1965 = vmatpush1.msra.mxu0 %v1873
    %1966 = vmatprep.subr.mxu0 %v1870
    %1967 = vmatpush1.msra.mxu0 %v1869
    %1968 = vmatprep.subr.mxu0 %v1866
    %1969 = vmatpush1.msra.mxu0 %v1865
    %1970 = vmatprep.subr.mxu0 %v1862
    %1971 = vmatpush1.msra.mxu0 %v1861
    %1972 = vmatprep.subr.mxu0 %v1858
    %1973 = vmatpush1.msra.mxu0 %v1857
    %1974 = vmatprep.subr.mxu0 %v1854
    %1975 = vmatpush1.msra.mxu0 %v1853
    %1976 = vmatprep.subr.mxu0 %v1850
    %1977 = vmatpush1.msra.mxu0 %v1849
    %1978 = vmatprep.subr.mxu0 %v1846
    %1979 = vmatpush1.msra.mxu0 %v1845
    %1980 = vmatprep.subr.mxu0 %v1842
    %1981 = vmatpush1.msra.mxu0 %v1841
    %1982 = vmatprep.subr.mxu0 %v1838
    %1983 = vmatpush1.msra.mxu0 %v1837
    %1984 = vmatprep.subr.mxu0 %v1834
    %1985 = vmatpush1.msra.mxu0 %v1833
    %1986 = vmatprep.subr.mxu0 %v1830
    %1987 = vmatpush1.msra.mxu0 %v1829
    %1988 = vmatprep.subr.mxu0 %v1826
    %1989 = vmatpush1.msra.mxu0 %v1825
    %1990 = vmatprep.subr.mxu0 0.0
    %1991 = vmatpush2.msra.mxu0 0.0
    %1992 = vmatprep.subr.mxu0 0.0
    %1993 = vmatpush2.msra.mxu0 0.0
    %1994 = vmatprep.subr.mxu0 0.0
    %1995 = vmatpush2.msra.mxu0 0.0
    %1996 = vmatprep.subr.mxu0 0.0
    %1997 = vmatpush2.msra.mxu0 0.0
    %1998 = vmatprep.subr.mxu0 0.0
    %1999 = vmatpush2.msra.mxu0 0.0
    %2000 = vmatprep.subr.mxu0 0.0
    %2001 = vmatpush2.msra.mxu0 0.0
    %2002 = vmatprep.subr.mxu0 0.0
    %2003 = vmatpush2.msra.mxu0 0.0
    %2004 = vmatprep.subr.mxu0 0.0
    %2005 = vmatpush2.msra.mxu0 0.0
    %2006 = vmatprep.subr.mxu0 0.0
    %2007 = vmatpush2.msra.mxu0 0.0
    %2008 = vmatprep.subr.mxu0 0.0
    %2009 = vmatpush2.msra.mxu0 0.0
    %2010 = vmatprep.subr.mxu0 0.0
    %2011 = vmatpush2.msra.mxu0 0.0
    %2012 = vmatprep.subr.mxu0 0.0
    %2013 = vmatpush2.msra.mxu0 0.0
    %2014 = vmatprep.subr.mxu0 0.0
    %2015 = vmatpush2.msra.mxu0 0.0
    %2016 = vmatprep.subr.mxu0 0.0
    %2017 = vmatpush2.msra.mxu0 0.0
    %2018 = vmatprep.subr.mxu0 0.0
    %2019 = vmatpush2.msra.mxu0 0.0
    %2020 = vmatprep.subr.mxu0 0.0
    %2021 = vmatpush2.msra.mxu0 0.0
    %2022 = vmatprep.mubr.f32.mxu0 0.0
    %2023 = vmatmul.mubr.f32.gmra.mxu0 %v1813
    %v2024 = vpop.f32.mrf.mxu0
    %v2025 = vadd.f32 0.0, %v2024
    %v2026 = vpop.f32.mrf.mxu0
    %v2027 = vadd.f32 0.0, %v2026
    %2028 = vdwg.mxu0
    %v2029 = vadd.f32 %v1819, %v1954
    %v2030 = vadd.f32 %v1820, %v1956
    %v2031 = vadd.f32 %v1821, %v2025
    %v2032 = vadd.f32 %v1822, %v2027
    %v2033 = vxor.u32 %v2029, 2147483648
    %v2034 = vmul.f32 %v2033, 1.442695
    %v2035 = vpow.pop %v2034
    %v2036 = vadd.f32 %v2035, 1.0
    %v2037 = vrcp.pop %v2036
    %v2038 = vmul.f32 1.0, %v2037
    %v2039 = vxor.u32 %v2030, 2147483648
    %v2040 = vmul.f32 %v2039, 1.442695
    %v2041 = vpow.pop %v2040
    %v2042 = vadd.f32 %v2041, 1.0
    %v2043 = vrcp.pop %v2042
    %v2044 = vmul.f32 1.0, %v2043
    %v2045 = vtanh.pop %v2031
    %v2046 = vxor.u32 %v2032, 2147483648
    %v2047 = vmul.f32 %v2046, 1.442695
    %v2048 = vpow.pop %v2047
    %v2049 = vadd.f32 %v2048, 1.0
    %v2050 = vrcp.pop %v2049
    %v2051 = vmul.f32 1.0, %v2050
    %v2052 = vmul.f32 %v2044, %v1811
    %v2053 = vmul.f32 %v2038, %v2045
    %v2054 = vadd.f32 %v2052, %v2053
    %v2055 = vtanh.pop %v2054
    %v2056 = vmul.f32 %v2051, %v2055
    %s2057 = scalar_lea.vmem %s4, 48
    %2058 = vst [vmem:[%s2057] sm:$0xff] %v2056
    %s2059 = smul.u32 7, 4
    %s2060 = smul.addr %s2059, 8
    %s2061 = scalar_lea.vmem [#allocation2], %s2060
    %v2062 = vld [vmem:[%s2061] sm:$0xff]
    %v2063 = vld [vmem:[%s2061 + $0x8] sm:$0xff]
    %v2064 = vld [vmem:[%s2061 + $0x10] sm:$0xff]
    %v2065 = vld [vmem:[%s2061 + $0x18] sm:$0xff]
    %v2066 = vld [vmem:[#allocation3] sm:$0xff]
    %v2067 = vld [vmem:[#allocation3 + $0x8] sm:$0xff]
    %v2068 = vld [vmem:[#allocation3 + $0x10] sm:$0xff]
    %v2069 = vld [vmem:[#allocation3 + $0x18] sm:$0xff]
    %v2070 = vld [vmem:[#allocation3 + $0x20] sm:$0xff]
    %v2071 = vld [vmem:[#allocation3 + $0x28] sm:$0xff]
    %v2072 = vld [vmem:[#allocation3 + $0x30] sm:$0xff]
    %v2073 = vld [vmem:[#allocation3 + $0x38] sm:$0xff]
    %v2074 = vld [vmem:[#allocation3 + $0x40] sm:$0xff]
    %v2075 = vld [vmem:[#allocation3 + $0x48] sm:$0xff]
    %v2076 = vld [vmem:[#allocation3 + $0x50] sm:$0xff]
    %v2077 = vld [vmem:[#allocation3 + $0x58] sm:$0xff]
    %v2078 = vld [vmem:[#allocation3 + $0x60] sm:$0xff]
    %v2079 = vld [vmem:[#allocation3 + $0x68] sm:$0xff]
    %v2080 = vld [vmem:[#allocation3 + $0x70] sm:$0xff]
    %v2081 = vld [vmem:[#allocation3 + $0x78] sm:$0xff]
    %v2082 = vld [vmem:[#allocation3 + $0x80] sm:$0xff]
    %v2083 = vld [vmem:[#allocation3 + $0x88] sm:$0xff]
    %v2084 = vld [vmem:[#allocation3 + $0x90] sm:$0xff]
    %v2085 = vld [vmem:[#allocation3 + $0x98] sm:$0xff]
    %v2086 = vld [vmem:[#allocation3 + $0xa0] sm:$0xff]
    %v2087 = vld [vmem:[#allocation3 + $0xa8] sm:$0xff]
    %v2088 = vld [vmem:[#allocation3 + $0xb0] sm:$0xff]
    %v2089 = vld [vmem:[#allocation3 + $0xb8] sm:$0xff]
    %v2090 = vld [vmem:[#allocation3 + $0xc0] sm:$0xff]
    %v2091 = vld [vmem:[#allocation3 + $0xc8] sm:$0xff]
    %v2092 = vld [vmem:[#allocation3 + $0xd0] sm:$0xff]
    %v2093 = vld [vmem:[#allocation3 + $0xd8] sm:$0xff]
    %v2094 = vld [vmem:[#allocation3 + $0xe0] sm:$0xff]
    %v2095 = vld [vmem:[#allocation3 + $0xe8] sm:$0xff]
    %v2096 = vld [vmem:[#allocation3 + $0xf0] sm:$0xff]
    %v2097 = vld [vmem:[#allocation3 + $0xf8] sm:$0xff]
    %v2098 = vld [vmem:[#allocation3 + $0x100] sm:$0xff]
    %v2099 = vld [vmem:[#allocation3 + $0x108] sm:$0xff]
    %v2100 = vld [vmem:[#allocation3 + $0x110] sm:$0xff]
    %v2101 = vld [vmem:[#allocation3 + $0x118] sm:$0xff]
    %v2102 = vld [vmem:[#allocation3 + $0x120] sm:$0xff]
    %v2103 = vld [vmem:[#allocation3 + $0x128] sm:$0xff]
    %v2104 = vld [vmem:[#allocation3 + $0x130] sm:$0xff]
    %v2105 = vld [vmem:[#allocation3 + $0x138] sm:$0xff]
    %v2106 = vld [vmem:[#allocation3 + $0x140] sm:$0xff]
    %v2107 = vld [vmem:[#allocation3 + $0x148] sm:$0xff]
    %v2108 = vld [vmem:[#allocation3 + $0x150] sm:$0xff]
    %v2109 = vld [vmem:[#allocation3 + $0x158] sm:$0xff]
    %v2110 = vld [vmem:[#allocation3 + $0x160] sm:$0xff]
    %v2111 = vld [vmem:[#allocation3 + $0x168] sm:$0xff]
    %v2112 = vld [vmem:[#allocation3 + $0x170] sm:$0xff]
    %v2113 = vld [vmem:[#allocation3 + $0x178] sm:$0xff]
    %v2114 = vld [vmem:[#allocation3 + $0x180] sm:$0xff]
    %v2115 = vld [vmem:[#allocation3 + $0x188] sm:$0xff]
    %v2116 = vld [vmem:[#allocation3 + $0x190] sm:$0xff]
    %v2117 = vld [vmem:[#allocation3 + $0x198] sm:$0xff]
    %v2118 = vld [vmem:[#allocation3 + $0x1a0] sm:$0xff]
    %v2119 = vld [vmem:[#allocation3 + $0x1a8] sm:$0xff]
    %v2120 = vld [vmem:[#allocation3 + $0x1b0] sm:$0xff]
    %v2121 = vld [vmem:[#allocation3 + $0x1b8] sm:$0xff]
    %v2122 = vld [vmem:[#allocation3 + $0x1c0] sm:$0xff]
    %v2123 = vld [vmem:[#allocation3 + $0x1c8] sm:$0xff]
    %v2124 = vld [vmem:[#allocation3 + $0x1d0] sm:$0xff]
    %v2125 = vld [vmem:[#allocation3 + $0x1d8] sm:$0xff]
    %v2126 = vld [vmem:[#allocation3 + $0x1e0] sm:$0xff]
    %v2127 = vld [vmem:[#allocation3 + $0x1e8] sm:$0xff]
    %v2128 = vld [vmem:[#allocation3 + $0x1f0] sm:$0xff]
    %v2129 = vld [vmem:[#allocation3 + $0x1f8] sm:$0xff]
    %2130 = vmatprep.subr.mxu0 %v2127
    %2131 = vmatpush1.msra.mxu0 %v2126
    %2132 = vmatprep.subr.mxu0 %v2123
    %2133 = vmatpush1.msra.mxu0 %v2122
    %2134 = vmatprep.subr.mxu0 %v2119
    %2135 = vmatpush1.msra.mxu0 %v2118
    %2136 = vmatprep.subr.mxu0 %v2115
    %2137 = vmatpush1.msra.mxu0 %v2114
    %2138 = vmatprep.subr.mxu0 %v2111
    %2139 = vmatpush1.msra.mxu0 %v2110
    %2140 = vmatprep.subr.mxu0 %v2107
    %2141 = vmatpush1.msra.mxu0 %v2106
    %2142 = vmatprep.subr.mxu0 %v2103
    %2143 = vmatpush1.msra.mxu0 %v2102
    %2144 = vmatprep.subr.mxu0 %v2099
    %2145 = vmatpush1.msra.mxu0 %v2098
    %2146 = vmatprep.subr.mxu0 %v2095
    %2147 = vmatpush1.msra.mxu0 %v2094
    %2148 = vmatprep.subr.mxu0 %v2091
    %2149 = vmatpush1.msra.mxu0 %v2090
    %2150 = vmatprep.subr.mxu0 %v2087
    %2151 = vmatpush1.msra.mxu0 %v2086
    %2152 = vmatprep.subr.mxu0 %v2083
    %2153 = vmatpush1.msra.mxu0 %v2082
    %2154 = vmatprep.subr.mxu0 %v2079
    %2155 = vmatpush1.msra.mxu0 %v2078
    %2156 = vmatprep.subr.mxu0 %v2075
    %2157 = vmatpush1.msra.mxu0 %v2074
    %2158 = vmatprep.subr.mxu0 %v2071
    %2159 = vmatpush1.msra.mxu0 %v2070
    %2160 = vmatprep.subr.mxu0 %v2067
    %2161 = vmatpush1.msra.mxu0 %v2066
    %2162 = vmatprep.subr.mxu0 0.0
    %2163 = vmatpush2.msra.mxu0 0.0
    %2164 = vmatprep.subr.mxu0 0.0
    %2165 = vmatpush2.msra.mxu0 0.0
    %2166 = vmatprep.subr.mxu0 0.0
    %2167 = vmatpush2.msra.mxu0 0.0
    %2168 = vmatprep.subr.mxu0 0.0
    %2169 = vmatpush2.msra.mxu0 0.0
    %2170 = vmatprep.subr.mxu0 0.0
    %2171 = vmatpush2.msra.mxu0 0.0
    %2172 = vmatprep.subr.mxu0 0.0
    %2173 = vmatpush2.msra.mxu0 0.0
    %2174 = vmatprep.subr.mxu0 0.0
    %2175 = vmatpush2.msra.mxu0 0.0
    %2176 = vmatprep.subr.mxu0 0.0
    %2177 = vmatpush2.msra.mxu0 0.0
    %2178 = vmatprep.subr.mxu0 0.0
    %2179 = vmatpush2.msra.mxu0 0.0
    %2180 = vmatprep.subr.mxu0 0.0
    %2181 = vmatpush2.msra.mxu0 0.0
    %2182 = vmatprep.subr.mxu0 0.0
    %2183 = vmatpush2.msra.mxu0 0.0
    %2184 = vmatprep.subr.mxu0 0.0
    %2185 = vmatpush2.msra.mxu0 0.0
    %2186 = vmatprep.subr.mxu0 0.0
    %2187 = vmatpush2.msra.mxu0 0.0
    %2188 = vmatprep.subr.mxu0 0.0
    %2189 = vmatpush2.msra.mxu0 0.0
    %2190 = vmatprep.subr.mxu0 0.0
    %2191 = vmatpush2.msra.mxu0 0.0
    %2192 = vmatprep.subr.mxu0 0.0
    %2193 = vmatpush2.msra.mxu0 0.0
    %2194 = vmatprep.mubr.f32.mxu0 0.0
    %2195 = vmatmul.mubr.f32.gmra.mxu0 %v2056
    %v2196 = vpop.f32.mrf.mxu0
    %v2197 = vadd.f32 0.0, %v2196
    %v2198 = vpop.f32.mrf.mxu0
    %v2199 = vadd.f32 0.0, %v2198
    %2200 = vdwg.mxu0
    %2201 = vmatprep.subr.mxu0 %v2129
    %2202 = vmatpush1.msra.mxu0 %v2128
    %2203 = vmatprep.subr.mxu0 %v2125
    %2204 = vmatpush1.msra.mxu0 %v2124
    %2205 = vmatprep.subr.mxu0 %v2121
    %2206 = vmatpush1.msra.mxu0 %v2120
    %2207 = vmatprep.subr.mxu0 %v2117
    %2208 = vmatpush1.msra.mxu0 %v2116
    %2209 = vmatprep.subr.mxu0 %v2113
    %2210 = vmatpush1.msra.mxu0 %v2112
    %2211 = vmatprep.subr.mxu0 %v2109
    %2212 = vmatpush1.msra.mxu0 %v2108
    %2213 = vmatprep.subr.mxu0 %v2105
    %2214 = vmatpush1.msra.mxu0 %v2104
    %2215 = vmatprep.subr.mxu0 %v2101
    %2216 = vmatpush1.msra.mxu0 %v2100
    %2217 = vmatprep.subr.mxu0 %v2097
    %2218 = vmatpush1.msra.mxu0 %v2096
    %2219 = vmatprep.subr.mxu0 %v2093
    %2220 = vmatpush1.msra.mxu0 %v2092
    %2221 = vmatprep.subr.mxu0 %v2089
    %2222 = vmatpush1.msra.mxu0 %v2088
    %2223 = vmatprep.subr.mxu0 %v2085
    %2224 = vmatpush1.msra.mxu0 %v2084
    %2225 = vmatprep.subr.mxu0 %v2081
    %2226 = vmatpush1.msra.mxu0 %v2080
    %2227 = vmatprep.subr.mxu0 %v2077
    %2228 = vmatpush1.msra.mxu0 %v2076
    %2229 = vmatprep.subr.mxu0 %v2073
    %2230 = vmatpush1.msra.mxu0 %v2072
    %2231 = vmatprep.subr.mxu0 %v2069
    %2232 = vmatpush1.msra.mxu0 %v2068
    %2233 = vmatprep.subr.mxu0 0.0
    %2234 = vmatpush2.msra.mxu0 0.0
    %2235 = vmatprep.subr.mxu0 0.0
    %2236 = vmatpush2.msra.mxu0 0.0
    %2237 = vmatprep.subr.mxu0 0.0
    %2238 = vmatpush2.msra.mxu0 0.0
    %2239 = vmatprep.subr.mxu0 0.0
    %2240 = vmatpush2.msra.mxu0 0.0
    %2241 = vmatprep.subr.mxu0 0.0
    %2242 = vmatpush2.msra.mxu0 0.0
    %2243 = vmatprep.subr.mxu0 0.0
    %2244 = vmatpush2.msra.mxu0 0.0
    %2245 = vmatprep.subr.mxu0 0.0
    %2246 = vmatpush2.msra.mxu0 0.0
    %2247 = vmatprep.subr.mxu0 0.0
    %2248 = vmatpush2.msra.mxu0 0.0
    %2249 = vmatprep.subr.mxu0 0.0
    %2250 = vmatpush2.msra.mxu0 0.0
    %2251 = vmatprep.subr.mxu0 0.0
    %2252 = vmatpush2.msra.mxu0 0.0
    %2253 = vmatprep.subr.mxu0 0.0
    %2254 = vmatpush2.msra.mxu0 0.0
    %2255 = vmatprep.subr.mxu0 0.0
    %2256 = vmatpush2.msra.mxu0 0.0
    %2257 = vmatprep.subr.mxu0 0.0
    %2258 = vmatpush2.msra.mxu0 0.0
    %2259 = vmatprep.subr.mxu0 0.0
    %2260 = vmatpush2.msra.mxu0 0.0
    %2261 = vmatprep.subr.mxu0 0.0
    %2262 = vmatpush2.msra.mxu0 0.0
    %2263 = vmatprep.subr.mxu0 0.0
    %2264 = vmatpush2.msra.mxu0 0.0
    %2265 = vmatprep.mubr.f32.mxu0 0.0
    %2266 = vmatmul.mubr.f32.gmra.mxu0 %v2056
    %v2267 = vpop.f32.mrf.mxu0
    %v2268 = vadd.f32 0.0, %v2267
    %v2269 = vpop.f32.mrf.mxu0
    %v2270 = vadd.f32 0.0, %v2269
    %2271 = vdwg.mxu0
    %v2272 = vadd.f32 %v2062, %v2197
    %v2273 = vadd.f32 %v2063, %v2199
    %v2274 = vadd.f32 %v2064, %v2268
    %v2275 = vadd.f32 %v2065, %v2270
    %v2276 = vxor.u32 %v2272, 2147483648
    %v2277 = vmul.f32 %v2276, 1.442695
    %v2278 = vpow.pop %v2277
    %v2279 = vadd.f32 %v2278, 1.0
    %v2280 = vrcp.pop %v2279
    %v2281 = vmul.f32 1.0, %v2280
    %v2282 = vxor.u32 %v2273, 2147483648
    %v2283 = vmul.f32 %v2282, 1.442695
    %v2284 = vpow.pop %v2283
    %v2285 = vadd.f32 %v2284, 1.0
    %v2286 = vrcp.pop %v2285
    %v2287 = vmul.f32 1.0, %v2286
    %v2288 = vtanh.pop %v2274
    %v2289 = vxor.u32 %v2275, 2147483648
    %v2290 = vmul.f32 %v2289, 1.442695
    %v2291 = vpow.pop %v2290
    %v2292 = vadd.f32 %v2291, 1.0
    %v2293 = vrcp.pop %v2292
    %v2294 = vmul.f32 1.0, %v2293
    %v2295 = vmul.f32 %v2287, %v2054
    %v2296 = vmul.f32 %v2281, %v2288
    %v2297 = vadd.f32 %v2295, %v2296
    %v2298 = vtanh.pop %v2297
    %v2299 = vmul.f32 %v2294, %v2298
    %s2300 = scalar_lea.vmem %s4, 56
    %2301 = vst [vmem:[%s2300] sm:$0xff] %v2299
    %2302 = vst [vmem:[%s5] sm:$0xff] %v2299
    %2303 = vst [vmem:[%s6] sm:$0xff] %v2297
    // Predicated region
    $region26: #{a_call__.2} parent=1 // pred_check
      _
    $region27: #{a_call__.2} parent=1 // pred_check_branch
      %2305 = sbr.rel (0) target = $region29
    $region28: #{a_call__.2} parent=1 // pred_region
      _
    $region29: #{a_call__.2} parent=1 // pred_fallthru
      _
    // Predicated region
    $region30: #{a_call__.2} parent=1 // pred_check
      _
    $region31: #{a_call__.2} parent=1 // pred_check_branch
      %2307 = sbr.rel (0) target = $region33
    $region32: #{a_call__.2} parent=1 // pred_region
      _
    $region33: #{a_call__.2} parent=1 // pred_fallthru
      _
    // Predicated region
    $region34: #{a_call__.2} parent=1 // pred_check
      _
    $region35: #{a_call__.2} parent=1 // pred_check_branch
      %2309 = sbr.rel (0) target = $region37
    $region36: #{a_call__.2} parent=1 // pred_region
      _
    $region37: #{a_call__.2} parent=1 // pred_fallthru
      _
    // Predicated region
    $region38: #{a_call__.2} parent=1 // pred_check
      _
    $region39: #{a_call__.2} parent=1 // pred_check_branch
      %2311 = sbr.rel (0) target = $region41
    $region40: #{a_call__.2} parent=1 // pred_region
      _
    $region41: #{a_call__.2} parent=1 // pred_fallthru
      _
    // Predicated region
    $region42: #{a_call__.2} parent=1 // pred_check
      _
    $region43: #{a_call__.2} parent=1 // pred_check_branch
      %2313 = sbr.rel (0) target = $region45
    $region44: #{a_call__.2} parent=1 // pred_region
      _
    $region45: #{a_call__.2} parent=1 // pred_fallthru
      _
    // Predicated region
    $region46: #{a_call__.2} parent=1 // pred_check
      _
    $region47: #{a_call__.2} parent=1 // pred_check_branch
      %2315 = sbr.rel (0) target = $region49
    $region48: #{a_call__.2} parent=1 // pred_region
      _
    $region49: #{a_call__.2} parent=1 // pred_fallthru
      _
    %2316 = vsyncpa [#allocation4], 1

// kernel: a_call__.3
$region0: #{a_call__.3}
  #allocation0 [shape = 'u32[]', space=smem, size = 0x4, offset = 0x4, fixed_abs, tag = 'smem constant byte address 0x4 - core index']
  #allocation1 [shape = 'u32[144,128]{1,0:T(1,128)}', space=vmem, size = 0x12000, scoped, tag = 'internal scratch']
  #allocation2 [shape = 'f32[64,512]{1,0:T(8,128)}', space=vmem, size = 0x20000, scoped, tag = 'scratch operand']
  %s0 = inlined_call_operand.vmem [shape: f32[64,128], index: 0, kind: input, shape index: {}]
  %s1 = inlined_call_operand.hbm [shape: f32[128,512], index: 1, kind: input, shape index: {}]
  %s2 = inlined_call_operand.vmem [shape: f32[128,512], index: 2, kind: input, shape index: {}]
  %s3 = inlined_call_operand.vmem [shape: f32[1,512], index: 3, kind: input, shape index: {}]
  %s4 = inlined_call_operand.hbm [shape: f32[64,128], index: 4, kind: output, shape index: {0}]
  %s5 = inlined_call_operand.vmem [shape: f32[8,128], index: 5, kind: output, shape index: {1}]
  %s6 = inlined_call_operand.vmem [shape: f32[8,128], index: 6, kind: output, shape index: {2}]
  %7 = xla_tuple %s4, %s5, %s6
  %s8 = sld [smem:[#allocation0]]
  $region50: #{a_call__.3} parent=0
    _
  %s10 = ssub.s32 1, %s8
  %s11 = scalar_select 0, %s10, %s8
  $region1: #{a_call__.3} parent=0
    #allocation3 [shape = 'u8[262144]{0}', space=vmem, size = 0x40000, scoped, tag = 'input window, operand 1, single buffered']
    #allocation4 [shape = 's32[1]{0}', space=sflag, size = 0x4, scoped, tag = 'scoped memory for a_call__.3']
    #allocation5 [shape = 's32[1]{0}', space=sflag, size = 0x4, scoped, tag = 'scoped memory for a_call__.3']
    #allocation6 [shape = 'u8[32768]{0}', space=vmem, size = 0x8000, scoped, tag = 'output window, operand 0, single buffered']
    %12 = vsyncpa [#allocation4], 0
    %13 = vsyncpa [#allocation5], 0
    // Predicated region
    $region2: #{a_call__.3} parent=1 // pred_check
      _
    $region3: #{a_call__.3} parent=1 // pred_check_branch
      %15 = sbr.rel (0) target = $region5
    $region4: #{a_call__.3} parent=1 // pred_region
      _
    $region5: #{a_call__.3} parent=1 // pred_fallthru
      _
    // Predicated region
    $region6: #{a_call__.3} parent=1 // pred_check
      _
    $region7: #{a_call__.3} parent=1 // pred_check_branch
      %17 = sbr.rel (0) target = $region9
    $region8: #{a_call__.3} parent=1 // pred_region
      %s19 = ssub.s32 8192, 8192
      %20 = vsyncadd [#allocation4], %s19
      %s21 = sshll.u32 [#allocation3], 4
      %s22 = int_to_ptr.vmem [resolvable:$true] %s21
      %27 = dma.hbm_to_vmem [thread:$0]  %s1, 8192, %s22, [#allocation4], 512, 512, 32
    $region9: #{a_call__.3} parent=1 // pred_fallthru
      _
    // Predicated region
    $region10: #{a_call__.3} parent=1 // pred_check
      _
    $region11: #{a_call__.3} parent=1 // pred_check_branch
      %29 = sbr.rel (0) target = $region13
    $region12: #{a_call__.3} parent=1 // pred_region
      _
    $region13: #{a_call__.3} parent=1 // pred_fallthru
      _
    // Predicated region
    $region14: #{a_call__.3} parent=1 // pred_check
      _
    $region15: #{a_call__.3} parent=1 // pred_check_branch
      %31 = sbr.rel (0) target = $region17
    $region16: #{a_call__.3} parent=1 // pred_region
      _
    $region17: #{a_call__.3} parent=1 // pred_fallthru
      _
    // Predicated region
    $region18: #{a_call__.3} parent=1 // pred_check
      _
    $region19: #{a_call__.3} parent=1 // pred_check_branch
      %33 = sbr.rel (0) target = $region21
    $region20: #{a_call__.3} parent=1 // pred_region
      %34 = dma.done [#allocation4], 8192
    $region21: #{a_call__.3} parent=1 // pred_fallthru
      _
    %p35 = scmp.eq.s32.totalorder 0, 0
    // Predicated region
    $region22: #{a_call__.3} parent=1 // pred_check
      %p36 = pneg %p35
    $region23: #{a_call__.3} parent=1 // pred_check_branch
      %38 = sbr.rel (%p36) target = $region25
    $region24: #{a_call__.3} parent=1 // pred_region
      %39 = vst [vmem:[%s5] sm:$0xff] 0.0
      %40 = vst [vmem:[%s6] sm:$0xff] 0.0
    $region25: #{a_call__.3} parent=1 // pred_fallthru
      _
    %v41 = vld [vmem:[%s0] sm:$0xff]
    %v42 = vld [vmem:[%s0 + $0x8] sm:$0xff]
    %v43 = vld [vmem:[%s0 + $0x10] sm:$0xff]
    %v44 = vld [vmem:[%s0 + $0x18] sm:$0xff]
    %v45 = vld [vmem:[%s0 + $0x20] sm:$0xff]
    %v46 = vld [vmem:[%s0 + $0x28] sm:$0xff]
    %v47 = vld [vmem:[%s0 + $0x30] sm:$0xff]
    %v48 = vld [vmem:[%s0 + $0x38] sm:$0xff]
    %v49 = vld [vmem:[#allocation3] sm:$0xff]
    %v50 = vld [vmem:[#allocation3 + $0x8] sm:$0xff]
    %v51 = vld [vmem:[#allocation3 + $0x10] sm:$0xff]
    %v52 = vld [vmem:[#allocation3 + $0x18] sm:$0xff]
    %v53 = vld [vmem:[#allocation3 + $0x20] sm:$0xff]
    %v54 = vld [vmem:[#allocation3 + $0x28] sm:$0xff]
    %v55 = vld [vmem:[#allocation3 + $0x30] sm:$0xff]
    %v56 = vld [vmem:[#allocation3 + $0x38] sm:$0xff]
    %v57 = vld [vmem:[#allocation3 + $0x40] sm:$0xff]
    %v58 = vld [vmem:[#allocation3 + $0x48] sm:$0xff]
    %v59 = vld [vmem:[#allocation3 + $0x50] sm:$0xff]
    %v60 = vld [vmem:[#allocation3 + $0x58] sm:$0xff]
    %v61 = vld [vmem:[#allocation3 + $0x60] sm:$0xff]
    %v62 = vld [vmem:[#allocation3 + $0x68] sm:$0xff]
    %v63 = vld [vmem:[#allocation3 + $0x70] sm:$0xff]
    %v64 = vld [vmem:[#allocation3 + $0x78] sm:$0xff]
    %v65 = vld [vmem:[#allocation3 + $0x80] sm:$0xff]
    %v66 = vld [vmem:[#allocation3 + $0x88] sm:$0xff]
    %v67 = vld [vmem:[#allocation3 + $0x90] sm:$0xff]
    %v68 = vld [vmem:[#allocation3 + $0x98] sm:$0xff]
    %v69 = vld [vmem:[#allocation3 + $0xa0] sm:$0xff]
    %v70 = vld [vmem:[#allocation3 + $0xa8] sm:$0xff]
    %v71 = vld [vmem:[#allocation3 + $0xb0] sm:$0xff]
    %v72 = vld [vmem:[#allocation3 + $0xb8] sm:$0xff]
    %v73 = vld [vmem:[#allocation3 + $0xc0] sm:$0xff]
    %v74 = vld [vmem:[#allocation3 + $0xc8] sm:$0xff]
    %v75 = vld [vmem:[#allocation3 + $0xd0] sm:$0xff]
    %v76 = vld [vmem:[#allocation3 + $0xd8] sm:$0xff]
    %v77 = vld [vmem:[#allocation3 + $0xe0] sm:$0xff]
    %v78 = vld [vmem:[#allocation3 + $0xe8] sm:$0xff]
    %v79 = vld [vmem:[#allocation3 + $0xf0] sm:$0xff]
    %v80 = vld [vmem:[#allocation3 + $0xf8] sm:$0xff]
    %v81 = vld [vmem:[#allocation3 + $0x100] sm:$0xff]
    %v82 = vld [vmem:[#allocation3 + $0x108] sm:$0xff]
    %v83 = vld [vmem:[#allocation3 + $0x110] sm:$0xff]
    %v84 = vld [vmem:[#allocation3 + $0x118] sm:$0xff]
    %v85 = vld [vmem:[#allocation3 + $0x120] sm:$0xff]
    %v86 = vld [vmem:[#allocation3 + $0x128] sm:$0xff]
    %v87 = vld [vmem:[#allocation3 + $0x130] sm:$0xff]
    %v88 = vld [vmem:[#allocation3 + $0x138] sm:$0xff]
    %v89 = vld [vmem:[#allocation3 + $0x140] sm:$0xff]
    %v90 = vld [vmem:[#allocation3 + $0x148] sm:$0xff]
    %v91 = vld [vmem:[#allocation3 + $0x150] sm:$0xff]
    %v92 = vld [vmem:[#allocation3 + $0x158] sm:$0xff]
    %v93 = vld [vmem:[#allocation3 + $0x160] sm:$0xff]
    %v94 = vld [vmem:[#allocation3 + $0x168] sm:$0xff]
    %v95 = vld [vmem:[#allocation3 + $0x170] sm:$0xff]
    %v96 = vld [vmem:[#allocation3 + $0x178] sm:$0xff]
    %v97 = vld [vmem:[#allocation3 + $0x180] sm:$0xff]
    %v98 = vld [vmem:[#allocation3 + $0x188] sm:$0xff]
    %v99 = vld [vmem:[#allocation3 + $0x190] sm:$0xff]
    %v100 = vld [vmem:[#allocation3 + $0x198] sm:$0xff]
    %v101 = vld [vmem:[#allocation3 + $0x1a0] sm:$0xff]
    %v102 = vld [vmem:[#allocation3 + $0x1a8] sm:$0xff]
    %v103 = vld [vmem:[#allocation3 + $0x1b0] sm:$0xff]
    %v104 = vld [vmem:[#allocation3 + $0x1b8] sm:$0xff]
    %v105 = vld [vmem:[#allocation3 + $0x1c0] sm:$0xff]
    %v106 = vld [vmem:[#allocation3 + $0x1c8] sm:$0xff]
    %v107 = vld [vmem:[#allocation3 + $0x1d0] sm:$0xff]
    %v108 = vld [vmem:[#allocation3 + $0x1d8] sm:$0xff]
    %v109 = vld [vmem:[#allocation3 + $0x1e0] sm:$0xff]
    %v110 = vld [vmem:[#allocation3 + $0x1e8] sm:$0xff]
    %v111 = vld [vmem:[#allocation3 + $0x1f0] sm:$0xff]
    %v112 = vld [vmem:[#allocation3 + $0x1f8] sm:$0xff]
    %v113 = vld [vmem:[%s3] sm:$0xf]
    %v115 = vlaneseq
    %v116 = vshrl.u32 %v115, 7
    %v117 = vsub.s32 0, %v116
    %v118 = vrot.slane %v113, %v117
    %v119 = vlaneseq
    %v120 = vshrl.u32 %v119, 7
    %v121 = vsub.s32 1, %v120
    %v122 = vrot.slane %v113, %v121
    %v123 = vlaneseq
    %v124 = vshrl.u32 %v123, 7
    %v125 = vsub.s32 2, %v124
    %v126 = vrot.slane %v113, %v125
    %v127 = vlaneseq
    %v128 = vshrl.u32 %v127, 7
    %v129 = vsub.s32 3, %v128
    %v130 = vrot.slane %v113, %v129
    %135 = vmatprep.subr.mxu0 %v110
    %136 = vmatpush1.msra.mxu0 %v109
    %137 = vmatprep.subr.mxu0 %v106
    %138 = vmatpush1.msra.mxu0 %v105
    %139 = vmatprep.subr.mxu0 %v102
    %140 = vmatpush1.msra.mxu0 %v101
    %141 = vmatprep.subr.mxu0 %v98
    %142 = vmatpush1.msra.mxu0 %v97
    %143 = vmatprep.subr.mxu0 %v94
    %144 = vmatpush1.msra.mxu0 %v93
    %145 = vmatprep.subr.mxu0 %v90
    %146 = vmatpush1.msra.mxu0 %v89
    %147 = vmatprep.subr.mxu0 %v86
    %148 = vmatpush1.msra.mxu0 %v85
    %149 = vmatprep.subr.mxu0 %v82
    %150 = vmatpush1.msra.mxu0 %v81
    %151 = vmatprep.subr.mxu0 %v78
    %152 = vmatpush1.msra.mxu0 %v77
    %153 = vmatprep.subr.mxu0 %v74
    %154 = vmatpush1.msra.mxu0 %v73
    %155 = vmatprep.subr.mxu0 %v70
    %156 = vmatpush1.msra.mxu0 %v69
    %157 = vmatprep.subr.mxu0 %v66
    %158 = vmatpush1.msra.mxu0 %v65
    %159 = vmatprep.subr.mxu0 %v62
    %160 = vmatpush1.msra.mxu0 %v61
    %161 = vmatprep.subr.mxu0 %v58
    %162 = vmatpush1.msra.mxu0 %v57
    %163 = vmatprep.subr.mxu0 %v54
    %164 = vmatpush1.msra.mxu0 %v53
    %165 = vmatprep.subr.mxu0 %v50
    %166 = vmatpush1.msra.mxu0 %v49
    %167 = vmatprep.subr.mxu0 0.0
    %168 = vmatpush2.msra.mxu0 0.0
    %169 = vmatprep.subr.mxu0 0.0
    %170 = vmatpush2.msra.mxu0 0.0
    %171 = vmatprep.subr.mxu0 0.0
    %172 = vmatpush2.msra.mxu0 0.0
    %173 = vmatprep.subr.mxu0 0.0
    %174 = vmatpush2.msra.mxu0 0.0
    %175 = vmatprep.subr.mxu0 0.0
    %176 = vmatpush2.msra.mxu0 0.0
    %177 = vmatprep.subr.mxu0 0.0
    %178 = vmatpush2.msra.mxu0 0.0
    %179 = vmatprep.subr.mxu0 0.0
    %180 = vmatpush2.msra.mxu0 0.0
    %181 = vmatprep.subr.mxu0 0.0
    %182 = vmatpush2.msra.mxu0 0.0
    %183 = vmatprep.subr.mxu0 0.0
    %184 = vmatpush2.msra.mxu0 0.0
    %185 = vmatprep.subr.mxu0 0.0
    %186 = vmatpush2.msra.mxu0 0.0
    %187 = vmatprep.subr.mxu0 0.0
    %188 = vmatpush2.msra.mxu0 0.0
    %189 = vmatprep.subr.mxu0 0.0
    %190 = vmatpush2.msra.mxu0 0.0
    %191 = vmatprep.subr.mxu0 0.0
    %192 = vmatpush2.msra.mxu0 0.0
    %193 = vmatprep.subr.mxu0 0.0
    %194 = vmatpush2.msra.mxu0 0.0
    %195 = vmatprep.subr.mxu0 0.0
    %196 = vmatpush2.msra.mxu0 0.0
    %197 = vmatprep.subr.mxu0 0.0
    %198 = vmatpush2.msra.mxu0 0.0
    %199 = vmatprep.mubr.f32.mxu0 0.0
    %200 = vmatmul.mubr.f32.gmra.mxu0 %v41
    %v201 = vpop.f32.mrf.mxu0
    %v202 = vadd.f32 %v118, %v201
    %v203 = vpop.f32.mrf.mxu0
    %v204 = vadd.f32 %v122, %v203
    %205 = vmatprep.mubr.f32.mxu0 0.0
    %206 = vmatmul.mubr.f32.gmra.mxu0 %v42
    %v207 = vpop.f32.mrf.mxu0
    %v208 = vadd.f32 %v118, %v207
    %v209 = vpop.f32.mrf.mxu0
    %v210 = vadd.f32 %v122, %v209
    %211 = vmatprep.mubr.f32.mxu0 0.0
    %212 = vmatmul.mubr.f32.gmra.mxu0 %v43
    %v213 = vpop.f32.mrf.mxu0
    %v214 = vadd.f32 %v118, %v213
    %v215 = vpop.f32.mrf.mxu0
    %v216 = vadd.f32 %v122, %v215
    %217 = vmatprep.mubr.f32.mxu0 0.0
    %218 = vmatmul.mubr.f32.gmra.mxu0 %v44
    %v219 = vpop.f32.mrf.mxu0
    %v220 = vadd.f32 %v118, %v219
    %v221 = vpop.f32.mrf.mxu0
    %v222 = vadd.f32 %v122, %v221
    %223 = vmatprep.mubr.f32.mxu0 0.0
    %224 = vmatmul.mubr.f32.gmra.mxu0 %v45
    %v225 = vpop.f32.mrf.mxu0
    %v226 = vadd.f32 %v118, %v225
    %v227 = vpop.f32.mrf.mxu0
    %v228 = vadd.f32 %v122, %v227
    %229 = vmatprep.mubr.f32.mxu0 0.0
    %230 = vmatmul.mubr.f32.gmra.mxu0 %v46
    %v231 = vpop.f32.mrf.mxu0
    %v232 = vadd.f32 %v118, %v231
    %v233 = vpop.f32.mrf.mxu0
    %v234 = vadd.f32 %v122, %v233
    %235 = vmatprep.mubr.f32.mxu0 0.0
    %236 = vmatmul.mubr.f32.gmra.mxu0 %v47
    %v237 = vpop.f32.mrf.mxu0
    %v238 = vadd.f32 %v118, %v237
    %v239 = vpop.f32.mrf.mxu0
    %v240 = vadd.f32 %v122, %v239
    %241 = vmatprep.mubr.f32.mxu0 0.0
    %242 = vmatmul.mubr.f32.gmra.mxu0 %v48
    %v243 = vpop.f32.mrf.mxu0
    %v244 = vadd.f32 %v118, %v243
    %v245 = vpop.f32.mrf.mxu0
    %v246 = vadd.f32 %v122, %v245
    %247 = vdwg.mxu0
    %248 = vmatprep.subr.mxu0 %v112
    %249 = vmatpush1.msra.mxu0 %v111
    %250 = vmatprep.subr.mxu0 %v108
    %251 = vmatpush1.msra.mxu0 %v107
    %252 = vmatprep.subr.mxu0 %v104
    %253 = vmatpush1.msra.mxu0 %v103
    %254 = vmatprep.subr.mxu0 %v100
    %255 = vmatpush1.msra.mxu0 %v99
    %256 = vmatprep.subr.mxu0 %v96
    %257 = vmatpush1.msra.mxu0 %v95
    %258 = vmatprep.subr.mxu0 %v92
    %259 = vmatpush1.msra.mxu0 %v91
    %260 = vmatprep.subr.mxu0 %v88
    %261 = vmatpush1.msra.mxu0 %v87
    %262 = vmatprep.subr.mxu0 %v84
    %263 = vmatpush1.msra.mxu0 %v83
    %264 = vmatprep.subr.mxu0 %v80
    %265 = vmatpush1.msra.mxu0 %v79
    %266 = vmatprep.subr.mxu0 %v76
    %267 = vmatpush1.msra.mxu0 %v75
    %268 = vmatprep.subr.mxu0 %v72
    %269 = vmatpush1.msra.mxu0 %v71
    %270 = vmatprep.subr.mxu0 %v68
    %271 = vmatpush1.msra.mxu0 %v67
    %272 = vmatprep.subr.mxu0 %v64
    %273 = vmatpush1.msra.mxu0 %v63
    %274 = vmatprep.subr.mxu0 %v60
    %275 = vmatpush1.msra.mxu0 %v59
    %276 = vmatprep.subr.mxu0 %v56
    %277 = vmatpush1.msra.mxu0 %v55
    %278 = vmatprep.subr.mxu0 %v52
    %279 = vmatpush1.msra.mxu0 %v51
    %280 = vmatprep.subr.mxu0 0.0
    %281 = vmatpush2.msra.mxu0 0.0
    %282 = vmatprep.subr.mxu0 0.0
    %283 = vmatpush2.msra.mxu0 0.0
    %284 = vmatprep.subr.mxu0 0.0
    %285 = vmatpush2.msra.mxu0 0.0
    %286 = vmatprep.subr.mxu0 0.0
    %287 = vmatpush2.msra.mxu0 0.0
    %288 = vmatprep.subr.mxu0 0.0
    %289 = vmatpush2.msra.mxu0 0.0
    %290 = vmatprep.subr.mxu0 0.0
    %291 = vmatpush2.msra.mxu0 0.0
    %292 = vmatprep.subr.mxu0 0.0
    %293 = vmatpush2.msra.mxu0 0.0
    %294 = vmatprep.subr.mxu0 0.0
    %295 = vmatpush2.msra.mxu0 0.0
    %296 = vmatprep.subr.mxu0 0.0
    %297 = vmatpush2.msra.mxu0 0.0
    %298 = vmatprep.subr.mxu0 0.0
    %299 = vmatpush2.msra.mxu0 0.0
    %300 = vmatprep.subr.mxu0 0.0
    %301 = vmatpush2.msra.mxu0 0.0
    %302 = vmatprep.subr.mxu0 0.0
    %303 = vmatpush2.msra.mxu0 0.0
    %304 = vmatprep.subr.mxu0 0.0
    %305 = vmatpush2.msra.mxu0 0.0
    %306 = vmatprep.subr.mxu0 0.0
    %307 = vmatpush2.msra.mxu0 0.0
    %308 = vmatprep.subr.mxu0 0.0
    %309 = vmatpush2.msra.mxu0 0.0
    %310 = vmatprep.subr.mxu0 0.0
    %311 = vmatpush2.msra.mxu0 0.0
    %312 = vmatprep.mubr.f32.mxu0 0.0
    %313 = vmatmul.mubr.f32.gmra.mxu0 %v41
    %v314 = vpop.f32.mrf.mxu0
    %v315 = vadd.f32 %v126, %v314
    %v316 = vpop.f32.mrf.mxu0
    %v317 = vadd.f32 %v130, %v316
    %318 = vmatprep.mubr.f32.mxu0 0.0
    %319 = vmatmul.mubr.f32.gmra.mxu0 %v42
    %v320 = vpop.f32.mrf.mxu0
    %v321 = vadd.f32 %v126, %v320
    %v322 = vpop.f32.mrf.mxu0
    %v323 = vadd.f32 %v130, %v322
    %324 = vmatprep.mubr.f32.mxu0 0.0
    %325 = vmatmul.mubr.f32.gmra.mxu0 %v43
    %v326 = vpop.f32.mrf.mxu0
    %v327 = vadd.f32 %v126, %v326
    %v328 = vpop.f32.mrf.mxu0
    %v329 = vadd.f32 %v130, %v328
    %330 = vmatprep.mubr.f32.mxu0 0.0
    %331 = vmatmul.mubr.f32.gmra.mxu0 %v44
    %v332 = vpop.f32.mrf.mxu0
    %v333 = vadd.f32 %v126, %v332
    %v334 = vpop.f32.mrf.mxu0
    %v335 = vadd.f32 %v130, %v334
    %336 = vmatprep.mubr.f32.mxu0 0.0
    %337 = vmatmul.mubr.f32.gmra.mxu0 %v45
    %v338 = vpop.f32.mrf.mxu0
    %v339 = vadd.f32 %v126, %v338
    %v340 = vpop.f32.mrf.mxu0
    %v341 = vadd.f32 %v130, %v340
    %342 = vmatprep.mubr.f32.mxu0 0.0
    %343 = vmatmul.mubr.f32.gmra.mxu0 %v46
    %v344 = vpop.f32.mrf.mxu0
    %v345 = vadd.f32 %v126, %v344
    %v346 = vpop.f32.mrf.mxu0
    %v347 = vadd.f32 %v130, %v346
    %348 = vmatprep.mubr.f32.mxu0 0.0
    %349 = vmatmul.mubr.f32.gmra.mxu0 %v47
    %v350 = vpop.f32.mrf.mxu0
    %v351 = vadd.f32 %v126, %v350
    %v352 = vpop.f32.mrf.mxu0
    %v353 = vadd.f32 %v130, %v352
    %354 = vmatprep.mubr.f32.mxu0 0.0
    %355 = vmatmul.mubr.f32.gmra.mxu0 %v48
    %v356 = vpop.f32.mrf.mxu0
    %v357 = vadd.f32 %v126, %v356
    %v358 = vpop.f32.mrf.mxu0
    %v359 = vadd.f32 %v130, %v358
    %360 = vdwg.mxu0
    %361 = vst [vmem:[#allocation2] sm:$0xff] %v202
    %362 = vst [vmem:[#allocation2 + $0x8] sm:$0xff] %v204
    %363 = vst [vmem:[#allocation2 + $0x10] sm:$0xff] %v315
    %364 = vst [vmem:[#allocation2 + $0x18] sm:$0xff] %v317
    %365 = vst [vmem:[#allocation2 + $0x20] sm:$0xff] %v208
    %366 = vst [vmem:[#allocation2 + $0x28] sm:$0xff] %v210
    %367 = vst [vmem:[#allocation2 + $0x30] sm:$0xff] %v321
    %368 = vst [vmem:[#allocation2 + $0x38] sm:$0xff] %v323
    %369 = vst [vmem:[#allocation2 + $0x40] sm:$0xff] %v214
    %370 = vst [vmem:[#allocation2 + $0x48] sm:$0xff] %v216
    %371 = vst [vmem:[#allocation2 + $0x50] sm:$0xff] %v327
    %372 = vst [vmem:[#allocation2 + $0x58] sm:$0xff] %v329
    %373 = vst [vmem:[#allocation2 + $0x60] sm:$0xff] %v220
    %374 = vst [vmem:[#allocation2 + $0x68] sm:$0xff] %v222
    %375 = vst [vmem:[#allocation2 + $0x70] sm:$0xff] %v333
    %376 = vst [vmem:[#allocation2 + $0x78] sm:$0xff] %v335
    %377 = vst [vmem:[#allocation2 + $0x80] sm:$0xff] %v226
    %378 = vst [vmem:[#allocation2 + $0x88] sm:$0xff] %v228
    %379 = vst [vmem:[#allocation2 + $0x90] sm:$0xff] %v339
    %380 = vst [vmem:[#allocation2 + $0x98] sm:$0xff] %v341
    %381 = vst [vmem:[#allocation2 + $0xa0] sm:$0xff] %v232
    %382 = vst [vmem:[#allocation2 + $0xa8] sm:$0xff] %v234
    %383 = vst [vmem:[#allocation2 + $0xb0] sm:$0xff] %v345
    %384 = vst [vmem:[#allocation2 + $0xb8] sm:$0xff] %v347
    %385 = vst [vmem:[#allocation2 + $0xc0] sm:$0xff] %v238
    %386 = vst [vmem:[#allocation2 + $0xc8] sm:$0xff] %v240
    %387 = vst [vmem:[#allocation2 + $0xd0] sm:$0xff] %v351
    %388 = vst [vmem:[#allocation2 + $0xd8] sm:$0xff] %v353
    %389 = vst [vmem:[#allocation2 + $0xe0] sm:$0xff] %v244
    %390 = vst [vmem:[#allocation2 + $0xe8] sm:$0xff] %v246
    %391 = vst [vmem:[#allocation2 + $0xf0] sm:$0xff] %v357
    %392 = vst [vmem:[#allocation2 + $0xf8] sm:$0xff] %v359
    %v393 = vld [vmem:[%s5] sm:$0xff]
    %v394 = vld [vmem:[%s6] sm:$0xff]
    %s395 = smul.u32 0, 4
    %s396 = smul.addr %s395, 8
    %s397 = scalar_lea.vmem [#allocation2], %s396
    %v398 = vld [vmem:[%s397] sm:$0xff]
    %v399 = vld [vmem:[%s397 + $0x8] sm:$0xff]
    %v400 = vld [vmem:[%s397 + $0x10] sm:$0xff]
    %v401 = vld [vmem:[%s397 + $0x18] sm:$0xff]
    %v402 = vld [vmem:[%s2] sm:$0xff]
    %v403 = vld [vmem:[%s2 + $0x8] sm:$0xff]
    %v404 = vld [vmem:[%s2 + $0x10] sm:$0xff]
    %v405 = vld [vmem:[%s2 + $0x18] sm:$0xff]
    %v406 = vld [vmem:[%s2 + $0x20] sm:$0xff]
    %v407 = vld [vmem:[%s2 + $0x28] sm:$0xff]
    %v408 = vld [vmem:[%s2 + $0x30] sm:$0xff]
    %v409 = vld [vmem:[%s2 + $0x38] sm:$0xff]
    %v410 = vld [vmem:[%s2 + $0x40] sm:$0xff]
    %v411 = vld [vmem:[%s2 + $0x48] sm:$0xff]
    %v412 = vld [vmem:[%s2 + $0x50] sm:$0xff]
    %v413 = vld [vmem:[%s2 + $0x58] sm:$0xff]
    %v414 = vld [vmem:[%s2 + $0x60] sm:$0xff]
    %v415 = vld [vmem:[%s2 + $0x68] sm:$0xff]
    %v416 = vld [vmem:[%s2 + $0x70] sm:$0xff]
    %v417 = vld [vmem:[%s2 + $0x78] sm:$0xff]
    %v418 = vld [vmem:[%s2 + $0x80] sm:$0xff]
    %v419 = vld [vmem:[%s2 + $0x88] sm:$0xff]
    %v420 = vld [vmem:[%s2 + $0x90] sm:$0xff]
    %v421 = vld [vmem:[%s2 + $0x98] sm:$0xff]
    %v422 = vld [vmem:[%s2 + $0xa0] sm:$0xff]
    %v423 = vld [vmem:[%s2 + $0xa8] sm:$0xff]
    %v424 = vld [vmem:[%s2 + $0xb0] sm:$0xff]
    %v425 = vld [vmem:[%s2 + $0xb8] sm:$0xff]
    %v426 = vld [vmem:[%s2 + $0xc0] sm:$0xff]
    %v427 = vld [vmem:[%s2 + $0xc8] sm:$0xff]
    %v428 = vld [vmem:[%s2 + $0xd0] sm:$0xff]
    %v429 = vld [vmem:[%s2 + $0xd8] sm:$0xff]
    %v430 = vld [vmem:[%s2 + $0xe0] sm:$0xff]
    %v431 = vld [vmem:[%s2 + $0xe8] sm:$0xff]
    %v432 = vld [vmem:[%s2 + $0xf0] sm:$0xff]
    %v433 = vld [vmem:[%s2 + $0xf8] sm:$0xff]
    %v434 = vld [vmem:[%s2 + $0x100] sm:$0xff]
    %v435 = vld [vmem:[%s2 + $0x108] sm:$0xff]
    %v436 = vld [vmem:[%s2 + $0x110] sm:$0xff]
    %v437 = vld [vmem:[%s2 + $0x118] sm:$0xff]
    %v438 = vld [vmem:[%s2 + $0x120] sm:$0xff]
    %v439 = vld [vmem:[%s2 + $0x128] sm:$0xff]
    %v440 = vld [vmem:[%s2 + $0x130] sm:$0xff]
    %v441 = vld [vmem:[%s2 + $0x138] sm:$0xff]
    %v442 = vld [vmem:[%s2 + $0x140] sm:$0xff]
    %v443 = vld [vmem:[%s2 + $0x148] sm:$0xff]
    %v444 = vld [vmem:[%s2 + $0x150] sm:$0xff]
    %v445 = vld [vmem:[%s2 + $0x158] sm:$0xff]
    %v446 = vld [vmem:[%s2 + $0x160] sm:$0xff]
    %v447 = vld [vmem:[%s2 + $0x168] sm:$0xff]
    %v448 = vld [vmem:[%s2 + $0x170] sm:$0xff]
    %v449 = vld [vmem:[%s2 + $0x178] sm:$0xff]
    %v450 = vld [vmem:[%s2 + $0x180] sm:$0xff]
    %v451 = vld [vmem:[%s2 + $0x188] sm:$0xff]
    %v452 = vld [vmem:[%s2 + $0x190] sm:$0xff]
    %v453 = vld [vmem:[%s2 + $0x198] sm:$0xff]
    %v454 = vld [vmem:[%s2 + $0x1a0] sm:$0xff]
    %v455 = vld [vmem:[%s2 + $0x1a8] sm:$0xff]
    %v456 = vld [vmem:[%s2 + $0x1b0] sm:$0xff]
    %v457 = vld [vmem:[%s2 + $0x1b8] sm:$0xff]
    %v458 = vld [vmem:[%s2 + $0x1c0] sm:$0xff]
    %v459 = vld [vmem:[%s2 + $0x1c8] sm:$0xff]
    %v460 = vld [vmem:[%s2 + $0x1d0] sm:$0xff]
    %v461 = vld [vmem:[%s2 + $0x1d8] sm:$0xff]
    %v462 = vld [vmem:[%s2 + $0x1e0] sm:$0xff]
    %v463 = vld [vmem:[%s2 + $0x1e8] sm:$0xff]
    %v464 = vld [vmem:[%s2 + $0x1f0] sm:$0xff]
    %v465 = vld [vmem:[%s2 + $0x1f8] sm:$0xff]
    %466 = vmatprep.subr.mxu0 %v463
    %467 = vmatpush1.msra.mxu0 %v462
    %468 = vmatprep.subr.mxu0 %v459
    %469 = vmatpush1.msra.mxu0 %v458
    %470 = vmatprep.subr.mxu0 %v455
    %471 = vmatpush1.msra.mxu0 %v454
    %472 = vmatprep.subr.mxu0 %v451
    %473 = vmatpush1.msra.mxu0 %v450
    %474 = vmatprep.subr.mxu0 %v447
    %475 = vmatpush1.msra.mxu0 %v446
    %476 = vmatprep.subr.mxu0 %v443
    %477 = vmatpush1.msra.mxu0 %v442
    %478 = vmatprep.subr.mxu0 %v439
    %479 = vmatpush1.msra.mxu0 %v438
    %480 = vmatprep.subr.mxu0 %v435
    %481 = vmatpush1.msra.mxu0 %v434
    %482 = vmatprep.subr.mxu0 %v431
    %483 = vmatpush1.msra.mxu0 %v430
    %484 = vmatprep.subr.mxu0 %v427
    %485 = vmatpush1.msra.mxu0 %v426
    %486 = vmatprep.subr.mxu0 %v423
    %487 = vmatpush1.msra.mxu0 %v422
    %488 = vmatprep.subr.mxu0 %v419
    %489 = vmatpush1.msra.mxu0 %v418
    %490 = vmatprep.subr.mxu0 %v415
    %491 = vmatpush1.msra.mxu0 %v414
    %492 = vmatprep.subr.mxu0 %v411
    %493 = vmatpush1.msra.mxu0 %v410
    %494 = vmatprep.subr.mxu0 %v407
    %495 = vmatpush1.msra.mxu0 %v406
    %496 = vmatprep.subr.mxu0 %v403
    %497 = vmatpush1.msra.mxu0 %v402
    %498 = vmatprep.subr.mxu0 0.0
    %499 = vmatpush2.msra.mxu0 0.0
    %500 = vmatprep.subr.mxu0 0.0
    %501 = vmatpush2.msra.mxu0 0.0
    %502 = vmatprep.subr.mxu0 0.0
    %503 = vmatpush2.msra.mxu0 0.0
    %504 = vmatprep.subr.mxu0 0.0
    %505 = vmatpush2.msra.mxu0 0.0
    %506 = vmatprep.subr.mxu0 0.0
    %507 = vmatpush2.msra.mxu0 0.0
    %508 = vmatprep.subr.mxu0 0.0
    %509 = vmatpush2.msra.mxu0 0.0
    %510 = vmatprep.subr.mxu0 0.0
    %511 = vmatpush2.msra.mxu0 0.0
    %512 = vmatprep.subr.mxu0 0.0
    %513 = vmatpush2.msra.mxu0 0.0
    %514 = vmatprep.subr.mxu0 0.0
    %515 = vmatpush2.msra.mxu0 0.0
    %516 = vmatprep.subr.mxu0 0.0
    %517 = vmatpush2.msra.mxu0 0.0
    %518 = vmatprep.subr.mxu0 0.0
    %519 = vmatpush2.msra.mxu0 0.0
    %520 = vmatprep.subr.mxu0 0.0
    %521 = vmatpush2.msra.mxu0 0.0
    %522 = vmatprep.subr.mxu0 0.0
    %523 = vmatpush2.msra.mxu0 0.0
    %524 = vmatprep.subr.mxu0 0.0
    %525 = vmatpush2.msra.mxu0 0.0
    %526 = vmatprep.subr.mxu0 0.0
    %527 = vmatpush2.msra.mxu0 0.0
    %528 = vmatprep.subr.mxu0 0.0
    %529 = vmatpush2.msra.mxu0 0.0
    %530 = vmatprep.mubr.f32.mxu0 0.0
    %531 = vmatmul.mubr.f32.gmra.mxu0 %v393
    %v532 = vpop.f32.mrf.mxu0
    %v533 = vadd.f32 0.0, %v532
    %v534 = vpop.f32.mrf.mxu0
    %v535 = vadd.f32 0.0, %v534
    %536 = vdwg.mxu0
    %537 = vmatprep.subr.mxu0 %v465
    %538 = vmatpush1.msra.mxu0 %v464
    %539 = vmatprep.subr.mxu0 %v461
    %540 = vmatpush1.msra.mxu0 %v460
    %541 = vmatprep.subr.mxu0 %v457
    %542 = vmatpush1.msra.mxu0 %v456
    %543 = vmatprep.subr.mxu0 %v453
    %544 = vmatpush1.msra.mxu0 %v452
    %545 = vmatprep.subr.mxu0 %v449
    %546 = vmatpush1.msra.mxu0 %v448
    %547 = vmatprep.subr.mxu0 %v445
    %548 = vmatpush1.msra.mxu0 %v444
    %549 = vmatprep.subr.mxu0 %v441
    %550 = vmatpush1.msra.mxu0 %v440
    %551 = vmatprep.subr.mxu0 %v437
    %552 = vmatpush1.msra.mxu0 %v436
    %553 = vmatprep.subr.mxu0 %v433
    %554 = vmatpush1.msra.mxu0 %v432
    %555 = vmatprep.subr.mxu0 %v429
    %556 = vmatpush1.msra.mxu0 %v428
    %557 = vmatprep.subr.mxu0 %v425
    %558 = vmatpush1.msra.mxu0 %v424
    %559 = vmatprep.subr.mxu0 %v421
    %560 = vmatpush1.msra.mxu0 %v420
    %561 = vmatprep.subr.mxu0 %v417
    %562 = vmatpush1.msra.mxu0 %v416
    %563 = vmatprep.subr.mxu0 %v413
    %564 = vmatpush1.msra.mxu0 %v412
    %565 = vmatprep.subr.mxu0 %v409
    %566 = vmatpush1.msra.mxu0 %v408
    %567 = vmatprep.subr.mxu0 %v405
    %568 = vmatpush1.msra.mxu0 %v404
    %569 = vmatprep.subr.mxu0 0.0
    %570 = vmatpush2.msra.mxu0 0.0
    %571 = vmatprep.subr.mxu0 0.0
    %572 = vmatpush2.msra.mxu0 0.0
    %573 = vmatprep.subr.mxu0 0.0
    %574 = vmatpush2.msra.mxu0 0.0
    %575 = vmatprep.subr.mxu0 0.0
    %576 = vmatpush2.msra.mxu0 0.0
    %577 = vmatprep.subr.mxu0 0.0
    %578 = vmatpush2.msra.mxu0 0.0
    %579 = vmatprep.subr.mxu0 0.0
    %580 = vmatpush2.msra.mxu0 0.0
    %581 = vmatprep.subr.mxu0 0.0
    %582 = vmatpush2.msra.mxu0 0.0
    %583 = vmatprep.subr.mxu0 0.0
    %584 = vmatpush2.msra.mxu0 0.0
    %585 = vmatprep.subr.mxu0 0.0
    %586 = vmatpush2.msra.mxu0 0.0
    %587 = vmatprep.subr.mxu0 0.0
    %588 = vmatpush2.msra.mxu0 0.0
    %589 = vmatprep.subr.mxu0 0.0
    %590 = vmatpush2.msra.mxu0 0.0
    %591 = vmatprep.subr.mxu0 0.0
    %592 = vmatpush2.msra.mxu0 0.0
    %593 = vmatprep.subr.mxu0 0.0
    %594 = vmatpush2.msra.mxu0 0.0
    %595 = vmatprep.subr.mxu0 0.0
    %596 = vmatpush2.msra.mxu0 0.0
    %597 = vmatprep.subr.mxu0 0.0
    %598 = vmatpush2.msra.mxu0 0.0
    %599 = vmatprep.subr.mxu0 0.0
    %600 = vmatpush2.msra.mxu0 0.0
    %601 = vmatprep.mubr.f32.mxu0 0.0
    %602 = vmatmul.mubr.f32.gmra.mxu0 %v393
    %v603 = vpop.f32.mrf.mxu0
    %v604 = vadd.f32 0.0, %v603
    %v605 = vpop.f32.mrf.mxu0
    %v606 = vadd.f32 0.0, %v605
    %607 = vdwg.mxu0
    %v608 = vadd.f32 %v398, %v533
    %v609 = vadd.f32 %v399, %v535
    %v610 = vadd.f32 %v400, %v604
    %v611 = vadd.f32 %v401, %v606
    %v612 = vxor.u32 %v608, 2147483648
    %v613 = vmul.f32 %v612, 1.442695
    %v614 = vpow.pop %v613
    %v615 = vadd.f32 %v614, 1.0
    %v616 = vrcp.pop %v615
    %v617 = vmul.f32 1.0, %v616
    %v618 = vxor.u32 %v609, 2147483648
    %v619 = vmul.f32 %v618, 1.442695
    %v620 = vpow.pop %v619
    %v621 = vadd.f32 %v620, 1.0
    %v622 = vrcp.pop %v621
    %v623 = vmul.f32 1.0, %v622
    %v624 = vtanh.pop %v610
    %v625 = vxor.u32 %v611, 2147483648
    %v626 = vmul.f32 %v625, 1.442695
    %v627 = vpow.pop %v626
    %v628 = vadd.f32 %v627, 1.0
    %v629 = vrcp.pop %v628
    %v630 = vmul.f32 1.0, %v629
    %v631 = vmul.f32 %v623, %v394
    %v632 = vmul.f32 %v617, %v624
    %v633 = vadd.f32 %v631, %v632
    %v634 = vtanh.pop %v633
    %v635 = vmul.f32 %v630, %v634
    %636 = vst [vmem:[#allocation6] sm:$0xff] %v635
    %s637 = smul.u32 1, 4
    %s638 = smul.addr %s637, 8
    %s639 = scalar_lea.vmem [#allocation2], %s638
    %v640 = vld [vmem:[%s639] sm:$0xff]
    %v641 = vld [vmem:[%s639 + $0x8] sm:$0xff]
    %v642 = vld [vmem:[%s639 + $0x10] sm:$0xff]
    %v643 = vld [vmem:[%s639 + $0x18] sm:$0xff]
    %v644 = vld [vmem:[%s2] sm:$0xff]
    %v645 = vld [vmem:[%s2 + $0x8] sm:$0xff]
    %v646 = vld [vmem:[%s2 + $0x10] sm:$0xff]
    %v647 = vld [vmem:[%s2 + $0x18] sm:$0xff]
    %v648 = vld [vmem:[%s2 + $0x20] sm:$0xff]
    %v649 = vld [vmem:[%s2 + $0x28] sm:$0xff]
    %v650 = vld [vmem:[%s2 + $0x30] sm:$0xff]
    %v651 = vld [vmem:[%s2 + $0x38] sm:$0xff]
    %v652 = vld [vmem:[%s2 + $0x40] sm:$0xff]
    %v653 = vld [vmem:[%s2 + $0x48] sm:$0xff]
    %v654 = vld [vmem:[%s2 + $0x50] sm:$0xff]
    %v655 = vld [vmem:[%s2 + $0x58] sm:$0xff]
    %v656 = vld [vmem:[%s2 + $0x60] sm:$0xff]
    %v657 = vld [vmem:[%s2 + $0x68] sm:$0xff]
    %v658 = vld [vmem:[%s2 + $0x70] sm:$0xff]
    %v659 = vld [vmem:[%s2 + $0x78] sm:$0xff]
    %v660 = vld [vmem:[%s2 + $0x80] sm:$0xff]
    %v661 = vld [vmem:[%s2 + $0x88] sm:$0xff]
    %v662 = vld [vmem:[%s2 + $0x90] sm:$0xff]
    %v663 = vld [vmem:[%s2 + $0x98] sm:$0xff]
    %v664 = vld [vmem:[%s2 + $0xa0] sm:$0xff]
    %v665 = vld [vmem:[%s2 + $0xa8] sm:$0xff]
    %v666 = vld [vmem:[%s2 + $0xb0] sm:$0xff]
    %v667 = vld [vmem:[%s2 + $0xb8] sm:$0xff]
    %v668 = vld [vmem:[%s2 + $0xc0] sm:$0xff]
    %v669 = vld [vmem:[%s2 + $0xc8] sm:$0xff]
    %v670 = vld [vmem:[%s2 + $0xd0] sm:$0xff]
    %v671 = vld [vmem:[%s2 + $0xd8] sm:$0xff]
    %v672 = vld [vmem:[%s2 + $0xe0] sm:$0xff]
    %v673 = vld [vmem:[%s2 + $0xe8] sm:$0xff]
    %v674 = vld [vmem:[%s2 + $0xf0] sm:$0xff]
    %v675 = vld [vmem:[%s2 + $0xf8] sm:$0xff]
    %v676 = vld [vmem:[%s2 + $0x100] sm:$0xff]
    %v677 = vld [vmem:[%s2 + $0x108] sm:$0xff]
    %v678 = vld [vmem:[%s2 + $0x110] sm:$0xff]
    %v679 = vld [vmem:[%s2 + $0x118] sm:$0xff]
    %v680 = vld [vmem:[%s2 + $0x120] sm:$0xff]
    %v681 = vld [vmem:[%s2 + $0x128] sm:$0xff]
    %v682 = vld [vmem:[%s2 + $0x130] sm:$0xff]
    %v683 = vld [vmem:[%s2 + $0x138] sm:$0xff]
    %v684 = vld [vmem:[%s2 + $0x140] sm:$0xff]
    %v685 = vld [vmem:[%s2 + $0x148] sm:$0xff]
    %v686 = vld [vmem:[%s2 + $0x150] sm:$0xff]
    %v687 = vld [vmem:[%s2 + $0x158] sm:$0xff]
    %v688 = vld [vmem:[%s2 + $0x160] sm:$0xff]
    %v689 = vld [vmem:[%s2 + $0x168] sm:$0xff]
    %v690 = vld [vmem:[%s2 + $0x170] sm:$0xff]
    %v691 = vld [vmem:[%s2 + $0x178] sm:$0xff]
    %v692 = vld [vmem:[%s2 + $0x180] sm:$0xff]
    %v693 = vld [vmem:[%s2 + $0x188] sm:$0xff]
    %v694 = vld [vmem:[%s2 + $0x190] sm:$0xff]
    %v695 = vld [vmem:[%s2 + $0x198] sm:$0xff]
    %v696 = vld [vmem:[%s2 + $0x1a0] sm:$0xff]
    %v697 = vld [vmem:[%s2 + $0x1a8] sm:$0xff]
    %v698 = vld [vmem:[%s2 + $0x1b0] sm:$0xff]
    %v699 = vld [vmem:[%s2 + $0x1b8] sm:$0xff]
    %v700 = vld [vmem:[%s2 + $0x1c0] sm:$0xff]
    %v701 = vld [vmem:[%s2 + $0x1c8] sm:$0xff]
    %v702 = vld [vmem:[%s2 + $0x1d0] sm:$0xff]
    %v703 = vld [vmem:[%s2 + $0x1d8] sm:$0xff]
    %v704 = vld [vmem:[%s2 + $0x1e0] sm:$0xff]
    %v705 = vld [vmem:[%s2 + $0x1e8] sm:$0xff]
    %v706 = vld [vmem:[%s2 + $0x1f0] sm:$0xff]
    %v707 = vld [vmem:[%s2 + $0x1f8] sm:$0xff]
    %708 = vmatprep.subr.mxu0 %v705
    %709 = vmatpush1.msra.mxu0 %v704
    %710 = vmatprep.subr.mxu0 %v701
    %711 = vmatpush1.msra.mxu0 %v700
    %712 = vmatprep.subr.mxu0 %v697
    %713 = vmatpush1.msra.mxu0 %v696
    %714 = vmatprep.subr.mxu0 %v693
    %715 = vmatpush1.msra.mxu0 %v692
    %716 = vmatprep.subr.mxu0 %v689
    %717 = vmatpush1.msra.mxu0 %v688
    %718 = vmatprep.subr.mxu0 %v685
    %719 = vmatpush1.msra.mxu0 %v684
    %720 = vmatprep.subr.mxu0 %v681
    %721 = vmatpush1.msra.mxu0 %v680
    %722 = vmatprep.subr.mxu0 %v677
    %723 = vmatpush1.msra.mxu0 %v676
    %724 = vmatprep.subr.mxu0 %v673
    %725 = vmatpush1.msra.mxu0 %v672
    %726 = vmatprep.subr.mxu0 %v669
    %727 = vmatpush1.msra.mxu0 %v668
    %728 = vmatprep.subr.mxu0 %v665
    %729 = vmatpush1.msra.mxu0 %v664
    %730 = vmatprep.subr.mxu0 %v661
    %731 = vmatpush1.msra.mxu0 %v660
    %732 = vmatprep.subr.mxu0 %v657
    %733 = vmatpush1.msra.mxu0 %v656
    %734 = vmatprep.subr.mxu0 %v653
    %735 = vmatpush1.msra.mxu0 %v652
    %736 = vmatprep.subr.mxu0 %v649
    %737 = vmatpush1.msra.mxu0 %v648
    %738 = vmatprep.subr.mxu0 %v645
    %739 = vmatpush1.msra.mxu0 %v644
    %740 = vmatprep.subr.mxu0 0.0
    %741 = vmatpush2.msra.mxu0 0.0
    %742 = vmatprep.subr.mxu0 0.0
    %743 = vmatpush2.msra.mxu0 0.0
    %744 = vmatprep.subr.mxu0 0.0
    %745 = vmatpush2.msra.mxu0 0.0
    %746 = vmatprep.subr.mxu0 0.0
    %747 = vmatpush2.msra.mxu0 0.0
    %748 = vmatprep.subr.mxu0 0.0
    %749 = vmatpush2.msra.mxu0 0.0
    %750 = vmatprep.subr.mxu0 0.0
    %751 = vmatpush2.msra.mxu0 0.0
    %752 = vmatprep.subr.mxu0 0.0
    %753 = vmatpush2.msra.mxu0 0.0
    %754 = vmatprep.subr.mxu0 0.0
    %755 = vmatpush2.msra.mxu0 0.0
    %756 = vmatprep.subr.mxu0 0.0
    %757 = vmatpush2.msra.mxu0 0.0
    %758 = vmatprep.subr.mxu0 0.0
    %759 = vmatpush2.msra.mxu0 0.0
    %760 = vmatprep.subr.mxu0 0.0
    %761 = vmatpush2.msra.mxu0 0.0
    %762 = vmatprep.subr.mxu0 0.0
    %763 = vmatpush2.msra.mxu0 0.0
    %764 = vmatprep.subr.mxu0 0.0
    %765 = vmatpush2.msra.mxu0 0.0
    %766 = vmatprep.subr.mxu0 0.0
    %767 = vmatpush2.msra.mxu0 0.0
    %768 = vmatprep.subr.mxu0 0.0
    %769 = vmatpush2.msra.mxu0 0.0
    %770 = vmatprep.subr.mxu0 0.0
    %771 = vmatpush2.msra.mxu0 0.0
    %772 = vmatprep.mubr.f32.mxu0 0.0
    %773 = vmatmul.mubr.f32.gmra.mxu0 %v635
    %v774 = vpop.f32.mrf.mxu0
    %v775 = vadd.f32 0.0, %v774
    %v776 = vpop.f32.mrf.mxu0
    %v777 = vadd.f32 0.0, %v776
    %778 = vdwg.mxu0
    %779 = vmatprep.subr.mxu0 %v707
    %780 = vmatpush1.msra.mxu0 %v706
    %781 = vmatprep.subr.mxu0 %v703
    %782 = vmatpush1.msra.mxu0 %v702
    %783 = vmatprep.subr.mxu0 %v699
    %784 = vmatpush1.msra.mxu0 %v698
    %785 = vmatprep.subr.mxu0 %v695
    %786 = vmatpush1.msra.mxu0 %v694
    %787 = vmatprep.subr.mxu0 %v691
    %788 = vmatpush1.msra.mxu0 %v690
    %789 = vmatprep.subr.mxu0 %v687
    %790 = vmatpush1.msra.mxu0 %v686
    %791 = vmatprep.subr.mxu0 %v683
    %792 = vmatpush1.msra.mxu0 %v682
    %793 = vmatprep.subr.mxu0 %v679
    %794 = vmatpush1.msra.mxu0 %v678
    %795 = vmatprep.subr.mxu0 %v675
    %796 = vmatpush1.msra.mxu0 %v674
    %797 = vmatprep.subr.mxu0 %v671
    %798 = vmatpush1.msra.mxu0 %v670
    %799 = vmatprep.subr.mxu0 %v667
    %800 = vmatpush1.msra.mxu0 %v666
    %801 = vmatprep.subr.mxu0 %v663
    %802 = vmatpush1.msra.mxu0 %v662
    %803 = vmatprep.subr.mxu0 %v659
    %804 = vmatpush1.msra.mxu0 %v658
    %805 = vmatprep.subr.mxu0 %v655
    %806 = vmatpush1.msra.mxu0 %v654
    %807 = vmatprep.subr.mxu0 %v651
    %808 = vmatpush1.msra.mxu0 %v650
    %809 = vmatprep.subr.mxu0 %v647
    %810 = vmatpush1.msra.mxu0 %v646
    %811 = vmatprep.subr.mxu0 0.0
    %812 = vmatpush2.msra.mxu0 0.0
    %813 = vmatprep.subr.mxu0 0.0
    %814 = vmatpush2.msra.mxu0 0.0
    %815 = vmatprep.subr.mxu0 0.0
    %816 = vmatpush2.msra.mxu0 0.0
    %817 = vmatprep.subr.mxu0 0.0
    %818 = vmatpush2.msra.mxu0 0.0
    %819 = vmatprep.subr.mxu0 0.0
    %820 = vmatpush2.msra.mxu0 0.0
    %821 = vmatprep.subr.mxu0 0.0
    %822 = vmatpush2.msra.mxu0 0.0
    %823 = vmatprep.subr.mxu0 0.0
    %824 = vmatpush2.msra.mxu0 0.0
    %825 = vmatprep.subr.mxu0 0.0
    %826 = vmatpush2.msra.mxu0 0.0
    %827 = vmatprep.subr.mxu0 0.0
    %828 = vmatpush2.msra.mxu0 0.0
    %829 = vmatprep.subr.mxu0 0.0
    %830 = vmatpush2.msra.mxu0 0.0
    %831 = vmatprep.subr.mxu0 0.0
    %832 = vmatpush2.msra.mxu0 0.0
    %833 = vmatprep.subr.mxu0 0.0
    %834 = vmatpush2.msra.mxu0 0.0
    %835 = vmatprep.subr.mxu0 0.0
    %836 = vmatpush2.msra.mxu0 0.0
    %837 = vmatprep.subr.mxu0 0.0
    %838 = vmatpush2.msra.mxu0 0.0
    %839 = vmatprep.subr.mxu0 0.0
    %840 = vmatpush2.msra.mxu0 0.0
    %841 = vmatprep.subr.mxu0 0.0
    %842 = vmatpush2.msra.mxu0 0.0
    %843 = vmatprep.mubr.f32.mxu0 0.0
    %844 = vmatmul.mubr.f32.gmra.mxu0 %v635
    %v845 = vpop.f32.mrf.mxu0
    %v846 = vadd.f32 0.0, %v845
    %v847 = vpop.f32.mrf.mxu0
    %v848 = vadd.f32 0.0, %v847
    %849 = vdwg.mxu0
    %v850 = vadd.f32 %v640, %v775
    %v851 = vadd.f32 %v641, %v777
    %v852 = vadd.f32 %v642, %v846
    %v853 = vadd.f32 %v643, %v848
    %v854 = vxor.u32 %v850, 2147483648
    %v855 = vmul.f32 %v854, 1.442695
    %v856 = vpow.pop %v855
    %v857 = vadd.f32 %v856, 1.0
    %v858 = vrcp.pop %v857
    %v859 = vmul.f32 1.0, %v858
    %v860 = vxor.u32 %v851, 2147483648
    %v861 = vmul.f32 %v860, 1.442695
    %v862 = vpow.pop %v861
    %v863 = vadd.f32 %v862, 1.0
    %v864 = vrcp.pop %v863
    %v865 = vmul.f32 1.0, %v864
    %v866 = vtanh.pop %v852
    %v867 = vxor.u32 %v853, 2147483648
    %v868 = vmul.f32 %v867, 1.442695
    %v869 = vpow.pop %v868
    %v870 = vadd.f32 %v869, 1.0
    %v871 = vrcp.pop %v870
    %v872 = vmul.f32 1.0, %v871
    %v873 = vmul.f32 %v865, %v633
    %v874 = vmul.f32 %v859, %v866
    %v875 = vadd.f32 %v873, %v874
    %v876 = vtanh.pop %v875
    %v877 = vmul.f32 %v872, %v876
    %s878 = scalar_lea.vmem [#allocation6], 8
    %879 = vst [vmem:[%s878] sm:$0xff] %v877
    %s880 = smul.u32 2, 4
    %s881 = smul.addr %s880, 8
    %s882 = scalar_lea.vmem [#allocation2], %s881
    %v883 = vld [vmem:[%s882] sm:$0xff]
    %v884 = vld [vmem:[%s882 + $0x8] sm:$0xff]
    %v885 = vld [vmem:[%s882 + $0x10] sm:$0xff]
    %v886 = vld [vmem:[%s882 + $0x18] sm:$0xff]
    %v887 = vld [vmem:[%s2] sm:$0xff]
    %v888 = vld [vmem:[%s2 + $0x8] sm:$0xff]
    %v889 = vld [vmem:[%s2 + $0x10] sm:$0xff]
    %v890 = vld [vmem:[%s2 + $0x18] sm:$0xff]
    %v891 = vld [vmem:[%s2 + $0x20] sm:$0xff]
    %v892 = vld [vmem:[%s2 + $0x28] sm:$0xff]
    %v893 = vld [vmem:[%s2 + $0x30] sm:$0xff]
    %v894 = vld [vmem:[%s2 + $0x38] sm:$0xff]
    %v895 = vld [vmem:[%s2 + $0x40] sm:$0xff]
    %v896 = vld [vmem:[%s2 + $0x48] sm:$0xff]
    %v897 = vld [vmem:[%s2 + $0x50] sm:$0xff]
    %v898 = vld [vmem:[%s2 + $0x58] sm:$0xff]
    %v899 = vld [vmem:[%s2 + $0x60] sm:$0xff]
    %v900 = vld [vmem:[%s2 + $0x68] sm:$0xff]
    %v901 = vld [vmem:[%s2 + $0x70] sm:$0xff]
    %v902 = vld [vmem:[%s2 + $0x78] sm:$0xff]
    %v903 = vld [vmem:[%s2 + $0x80] sm:$0xff]
    %v904 = vld [vmem:[%s2 + $0x88] sm:$0xff]
    %v905 = vld [vmem:[%s2 + $0x90] sm:$0xff]
    %v906 = vld [vmem:[%s2 + $0x98] sm:$0xff]
    %v907 = vld [vmem:[%s2 + $0xa0] sm:$0xff]
    %v908 = vld [vmem:[%s2 + $0xa8] sm:$0xff]
    %v909 = vld [vmem:[%s2 + $0xb0] sm:$0xff]
    %v910 = vld [vmem:[%s2 + $0xb8] sm:$0xff]
    %v911 = vld [vmem:[%s2 + $0xc0] sm:$0xff]
    %v912 = vld [vmem:[%s2 + $0xc8] sm:$0xff]
    %v913 = vld [vmem:[%s2 + $0xd0] sm:$0xff]
    %v914 = vld [vmem:[%s2 + $0xd8] sm:$0xff]
    %v915 = vld [vmem:[%s2 + $0xe0] sm:$0xff]
    %v916 = vld [vmem:[%s2 + $0xe8] sm:$0xff]
    %v917 = vld [vmem:[%s2 + $0xf0] sm:$0xff]
    %v918 = vld [vmem:[%s2 + $0xf8] sm:$0xff]
    %v919 = vld [vmem:[%s2 + $0x100] sm:$0xff]
    %v920 = vld [vmem:[%s2 + $0x108] sm:$0xff]
    %v921 = vld [vmem:[%s2 + $0x110] sm:$0xff]
    %v922 = vld [vmem:[%s2 + $0x118] sm:$0xff]
    %v923 = vld [vmem:[%s2 + $0x120] sm:$0xff]
    %v924 = vld [vmem:[%s2 + $0x128] sm:$0xff]
    %v925 = vld [vmem:[%s2 + $0x130] sm:$0xff]
    %v926 = vld [vmem:[%s2 + $0x138] sm:$0xff]
    %v927 = vld [vmem:[%s2 + $0x140] sm:$0xff]
    %v928 = vld [vmem:[%s2 + $0x148] sm:$0xff]
    %v929 = vld [vmem:[%s2 + $0x150] sm:$0xff]
    %v930 = vld [vmem:[%s2 + $0x158] sm:$0xff]
    %v931 = vld [vmem:[%s2 + $0x160] sm:$0xff]
    %v932 = vld [vmem:[%s2 + $0x168] sm:$0xff]
    %v933 = vld [vmem:[%s2 + $0x170] sm:$0xff]
    %v934 = vld [vmem:[%s2 + $0x178] sm:$0xff]
    %v935 = vld [vmem:[%s2 + $0x180] sm:$0xff]
    %v936 = vld [vmem:[%s2 + $0x188] sm:$0xff]
    %v937 = vld [vmem:[%s2 + $0x190] sm:$0xff]
    %v938 = vld [vmem:[%s2 + $0x198] sm:$0xff]
    %v939 = vld [vmem:[%s2 + $0x1a0] sm:$0xff]
    %v940 = vld [vmem:[%s2 + $0x1a8] sm:$0xff]
    %v941 = vld [vmem:[%s2 + $0x1b0] sm:$0xff]
    %v942 = vld [vmem:[%s2 + $0x1b8] sm:$0xff]
    %v943 = vld [vmem:[%s2 + $0x1c0] sm:$0xff]
    %v944 = vld [vmem:[%s2 + $0x1c8] sm:$0xff]
    %v945 = vld [vmem:[%s2 + $0x1d0] sm:$0xff]
    %v946 = vld [vmem:[%s2 + $0x1d8] sm:$0xff]
    %v947 = vld [vmem:[%s2 + $0x1e0] sm:$0xff]
    %v948 = vld [vmem:[%s2 + $0x1e8] sm:$0xff]
    %v949 = vld [vmem:[%s2 + $0x1f0] sm:$0xff]
    %v950 = vld [vmem:[%s2 + $0x1f8] sm:$0xff]
    %951 = vmatprep.subr.mxu0 %v948
    %952 = vmatpush1.msra.mxu0 %v947
    %953 = vmatprep.subr.mxu0 %v944
    %954 = vmatpush1.msra.mxu0 %v943
    %955 = vmatprep.subr.mxu0 %v940
    %956 = vmatpush1.msra.mxu0 %v939
    %957 = vmatprep.subr.mxu0 %v936
    %958 = vmatpush1.msra.mxu0 %v935
    %959 = vmatprep.subr.mxu0 %v932
    %960 = vmatpush1.msra.mxu0 %v931
    %961 = vmatprep.subr.mxu0 %v928
    %962 = vmatpush1.msra.mxu0 %v927
    %963 = vmatprep.subr.mxu0 %v924
    %964 = vmatpush1.msra.mxu0 %v923
    %965 = vmatprep.subr.mxu0 %v920
    %966 = vmatpush1.msra.mxu0 %v919
    %967 = vmatprep.subr.mxu0 %v916
    %968 = vmatpush1.msra.mxu0 %v915
    %969 = vmatprep.subr.mxu0 %v912
    %970 = vmatpush1.msra.mxu0 %v911
    %971 = vmatprep.subr.mxu0 %v908
    %972 = vmatpush1.msra.mxu0 %v907
    %973 = vmatprep.subr.mxu0 %v904
    %974 = vmatpush1.msra.mxu0 %v903
    %975 = vmatprep.subr.mxu0 %v900
    %976 = vmatpush1.msra.mxu0 %v899
    %977 = vmatprep.subr.mxu0 %v896
    %978 = vmatpush1.msra.mxu0 %v895
    %979 = vmatprep.subr.mxu0 %v892
    %980 = vmatpush1.msra.mxu0 %v891
    %981 = vmatprep.subr.mxu0 %v888
    %982 = vmatpush1.msra.mxu0 %v887
    %983 = vmatprep.subr.mxu0 0.0
    %984 = vmatpush2.msra.mxu0 0.0
    %985 = vmatprep.subr.mxu0 0.0
    %986 = vmatpush2.msra.mxu0 0.0
    %987 = vmatprep.subr.mxu0 0.0
    %988 = vmatpush2.msra.mxu0 0.0
    %989 = vmatprep.subr.mxu0 0.0
    %990 = vmatpush2.msra.mxu0 0.0
    %991 = vmatprep.subr.mxu0 0.0
    %992 = vmatpush2.msra.mxu0 0.0
    %993 = vmatprep.subr.mxu0 0.0
    %994 = vmatpush2.msra.mxu0 0.0
    %995 = vmatprep.subr.mxu0 0.0
    %996 = vmatpush2.msra.mxu0 0.0
    %997 = vmatprep.subr.mxu0 0.0
    %998 = vmatpush2.msra.mxu0 0.0
    %999 = vmatprep.subr.mxu0 0.0
    %1000 = vmatpush2.msra.mxu0 0.0
    %1001 = vmatprep.subr.mxu0 0.0
    %1002 = vmatpush2.msra.mxu0 0.0
    %1003 = vmatprep.subr.mxu0 0.0
    %1004 = vmatpush2.msra.mxu0 0.0
    %1005 = vmatprep.subr.mxu0 0.0
    %1006 = vmatpush2.msra.mxu0 0.0
    %1007 = vmatprep.subr.mxu0 0.0
    %1008 = vmatpush2.msra.mxu0 0.0
    %1009 = vmatprep.subr.mxu0 0.0
    %1010 = vmatpush2.msra.mxu0 0.0
    %1011 = vmatprep.subr.mxu0 0.0
    %1012 = vmatpush2.msra.mxu0 0.0
    %1013 = vmatprep.subr.mxu0 0.0
    %1014 = vmatpush2.msra.mxu0 0.0
    %1015 = vmatprep.mubr.f32.mxu0 0.0
    %1016 = vmatmul.mubr.f32.gmra.mxu0 %v877
    %v1017 = vpop.f32.mrf.mxu0
    %v1018 = vadd.f32 0.0, %v1017
    %v1019 = vpop.f32.mrf.mxu0
    %v1020 = vadd.f32 0.0, %v1019
    %1021 = vdwg.mxu0
    %1022 = vmatprep.subr.mxu0 %v950
    %1023 = vmatpush1.msra.mxu0 %v949
    %1024 = vmatprep.subr.mxu0 %v946
    %1025 = vmatpush1.msra.mxu0 %v945
    %1026 = vmatprep.subr.mxu0 %v942
    %1027 = vmatpush1.msra.mxu0 %v941
    %1028 = vmatprep.subr.mxu0 %v938
    %1029 = vmatpush1.msra.mxu0 %v937
    %1030 = vmatprep.subr.mxu0 %v934
    %1031 = vmatpush1.msra.mxu0 %v933
    %1032 = vmatprep.subr.mxu0 %v930
    %1033 = vmatpush1.msra.mxu0 %v929
    %1034 = vmatprep.subr.mxu0 %v926
    %1035 = vmatpush1.msra.mxu0 %v925
    %1036 = vmatprep.subr.mxu0 %v922
    %1037 = vmatpush1.msra.mxu0 %v921
    %1038 = vmatprep.subr.mxu0 %v918
    %1039 = vmatpush1.msra.mxu0 %v917
    %1040 = vmatprep.subr.mxu0 %v914
    %1041 = vmatpush1.msra.mxu0 %v913
    %1042 = vmatprep.subr.mxu0 %v910
    %1043 = vmatpush1.msra.mxu0 %v909
    %1044 = vmatprep.subr.mxu0 %v906
    %1045 = vmatpush1.msra.mxu0 %v905
    %1046 = vmatprep.subr.mxu0 %v902
    %1047 = vmatpush1.msra.mxu0 %v901
    %1048 = vmatprep.subr.mxu0 %v898
    %1049 = vmatpush1.msra.mxu0 %v897
    %1050 = vmatprep.subr.mxu0 %v894
    %1051 = vmatpush1.msra.mxu0 %v893
    %1052 = vmatprep.subr.mxu0 %v890
    %1053 = vmatpush1.msra.mxu0 %v889
    %1054 = vmatprep.subr.mxu0 0.0
    %1055 = vmatpush2.msra.mxu0 0.0
    %1056 = vmatprep.subr.mxu0 0.0
    %1057 = vmatpush2.msra.mxu0 0.0
    %1058 = vmatprep.subr.mxu0 0.0
    %1059 = vmatpush2.msra.mxu0 0.0
    %1060 = vmatprep.subr.mxu0 0.0
    %1061 = vmatpush2.msra.mxu0 0.0
    %1062 = vmatprep.subr.mxu0 0.0
    %1063 = vmatpush2.msra.mxu0 0.0
    %1064 = vmatprep.subr.mxu0 0.0
    %1065 = vmatpush2.msra.mxu0 0.0
    %1066 = vmatprep.subr.mxu0 0.0
    %1067 = vmatpush2.msra.mxu0 0.0
    %1068 = vmatprep.subr.mxu0 0.0
    %1069 = vmatpush2.msra.mxu0 0.0
    %1070 = vmatprep.subr.mxu0 0.0
    %1071 = vmatpush2.msra.mxu0 0.0
    %1072 = vmatprep.subr.mxu0 0.0
    %1073 = vmatpush2.msra.mxu0 0.0
    %1074 = vmatprep.subr.mxu0 0.0
    %1075 = vmatpush2.msra.mxu0 0.0
    %1076 = vmatprep.subr.mxu0 0.0
    %1077 = vmatpush2.msra.mxu0 0.0
    %1078 = vmatprep.subr.mxu0 0.0
    %1079 = vmatpush2.msra.mxu0 0.0
    %1080 = vmatprep.subr.mxu0 0.0
    %1081 = vmatpush2.msra.mxu0 0.0
    %1082 = vmatprep.subr.mxu0 0.0
    %1083 = vmatpush2.msra.mxu0 0.0
    %1084 = vmatprep.subr.mxu0 0.0
    %1085 = vmatpush2.msra.mxu0 0.0
    %1086 = vmatprep.mubr.f32.mxu0 0.0
    %1087 = vmatmul.mubr.f32.gmra.mxu0 %v877
    %v1088 = vpop.f32.mrf.mxu0
    %v1089 = vadd.f32 0.0, %v1088
    %v1090 = vpop.f32.mrf.mxu0
    %v1091 = vadd.f32 0.0, %v1090
    %1092 = vdwg.mxu0
    %v1093 = vadd.f32 %v883, %v1018
    %v1094 = vadd.f32 %v884, %v1020
    %v1095 = vadd.f32 %v885, %v1089
    %v1096 = vadd.f32 %v886, %v1091
    %v1097 = vxor.u32 %v1093, 2147483648
    %v1098 = vmul.f32 %v1097, 1.442695
    %v1099 = vpow.pop %v1098
    %v1100 = vadd.f32 %v1099, 1.0
    %v1101 = vrcp.pop %v1100
    %v1102 = vmul.f32 1.0, %v1101
    %v1103 = vxor.u32 %v1094, 2147483648
    %v1104 = vmul.f32 %v1103, 1.442695
    %v1105 = vpow.pop %v1104
    %v1106 = vadd.f32 %v1105, 1.0
    %v1107 = vrcp.pop %v1106
    %v1108 = vmul.f32 1.0, %v1107
    %v1109 = vtanh.pop %v1095
    %v1110 = vxor.u32 %v1096, 2147483648
    %v1111 = vmul.f32 %v1110, 1.442695
    %v1112 = vpow.pop %v1111
    %v1113 = vadd.f32 %v1112, 1.0
    %v1114 = vrcp.pop %v1113
    %v1115 = vmul.f32 1.0, %v1114
    %v1116 = vmul.f32 %v1108, %v875
    %v1117 = vmul.f32 %v1102, %v1109
    %v1118 = vadd.f32 %v1116, %v1117
    %v1119 = vtanh.pop %v1118
    %v1120 = vmul.f32 %v1115, %v1119
    %s1121 = scalar_lea.vmem [#allocation6], 16
    %1122 = vst [vmem:[%s1121] sm:$0xff] %v1120
    %s1123 = smul.u32 3, 4
    %s1124 = smul.addr %s1123, 8
    %s1125 = scalar_lea.vmem [#allocation2], %s1124
    %v1126 = vld [vmem:[%s1125] sm:$0xff]
    %v1127 = vld [vmem:[%s1125 + $0x8] sm:$0xff]
    %v1128 = vld [vmem:[%s1125 + $0x10] sm:$0xff]
    %v1129 = vld [vmem:[%s1125 + $0x18] sm:$0xff]
    %v1130 = vld [vmem:[%s2] sm:$0xff]
    %v1131 = vld [vmem:[%s2 + $0x8] sm:$0xff]
    %v1132 = vld [vmem:[%s2 + $0x10] sm:$0xff]
    %v1133 = vld [vmem:[%s2 + $0x18] sm:$0xff]
    %v1134 = vld [vmem:[%s2 + $0x20] sm:$0xff]
    %v1135 = vld [vmem:[%s2 + $0x28] sm:$0xff]
    %v1136 = vld [vmem:[%s2 + $0x30] sm:$0xff]
    %v1137 = vld [vmem:[%s2 + $0x38] sm:$0xff]
    %v1138 = vld [vmem:[%s2 + $0x40] sm:$0xff]
    %v1139 = vld [vmem:[%s2 + $0x48] sm:$0xff]
    %v1140 = vld [vmem:[%s2 + $0x50] sm:$0xff]
    %v1141 = vld [vmem:[%s2 + $0x58] sm:$0xff]
    %v1142 = vld [vmem:[%s2 + $0x60] sm:$0xff]
    %v1143 = vld [vmem:[%s2 + $0x68] sm:$0xff]
    %v1144 = vld [vmem:[%s2 + $0x70] sm:$0xff]
    %v1145 = vld [vmem:[%s2 + $0x78] sm:$0xff]
    %v1146 = vld [vmem:[%s2 + $0x80] sm:$0xff]
    %v1147 = vld [vmem:[%s2 + $0x88] sm:$0xff]
    %v1148 = vld [vmem:[%s2 + $0x90] sm:$0xff]
    %v1149 = vld [vmem:[%s2 + $0x98] sm:$0xff]
    %v1150 = vld [vmem:[%s2 + $0xa0] sm:$0xff]
    %v1151 = vld [vmem:[%s2 + $0xa8] sm:$0xff]
    %v1152 = vld [vmem:[%s2 + $0xb0] sm:$0xff]
    %v1153 = vld [vmem:[%s2 + $0xb8] sm:$0xff]
    %v1154 = vld [vmem:[%s2 + $0xc0] sm:$0xff]
    %v1155 = vld [vmem:[%s2 + $0xc8] sm:$0xff]
    %v1156 = vld [vmem:[%s2 + $0xd0] sm:$0xff]
    %v1157 = vld [vmem:[%s2 + $0xd8] sm:$0xff]
    %v1158 = vld [vmem:[%s2 + $0xe0] sm:$0xff]
    %v1159 = vld [vmem:[%s2 + $0xe8] sm:$0xff]
    %v1160 = vld [vmem:[%s2 + $0xf0] sm:$0xff]
    %v1161 = vld [vmem:[%s2 + $0xf8] sm:$0xff]
    %v1162 = vld [vmem:[%s2 + $0x100] sm:$0xff]
    %v1163 = vld [vmem:[%s2 + $0x108] sm:$0xff]
    %v1164 = vld [vmem:[%s2 + $0x110] sm:$0xff]
    %v1165 = vld [vmem:[%s2 + $0x118] sm:$0xff]
    %v1166 = vld [vmem:[%s2 + $0x120] sm:$0xff]
    %v1167 = vld [vmem:[%s2 + $0x128] sm:$0xff]
    %v1168 = vld [vmem:[%s2 + $0x130] sm:$0xff]
    %v1169 = vld [vmem:[%s2 + $0x138] sm:$0xff]
    %v1170 = vld [vmem:[%s2 + $0x140] sm:$0xff]
    %v1171 = vld [vmem:[%s2 + $0x148] sm:$0xff]
    %v1172 = vld [vmem:[%s2 + $0x150] sm:$0xff]
    %v1173 = vld [vmem:[%s2 + $0x158] sm:$0xff]
    %v1174 = vld [vmem:[%s2 + $0x160] sm:$0xff]
    %v1175 = vld [vmem:[%s2 + $0x168] sm:$0xff]
    %v1176 = vld [vmem:[%s2 + $0x170] sm:$0xff]
    %v1177 = vld [vmem:[%s2 + $0x178] sm:$0xff]
    %v1178 = vld [vmem:[%s2 + $0x180] sm:$0xff]
    %v1179 = vld [vmem:[%s2 + $0x188] sm:$0xff]
    %v1180 = vld [vmem:[%s2 + $0x190] sm:$0xff]
    %v1181 = vld [vmem:[%s2 + $0x198] sm:$0xff]
    %v1182 = vld [vmem:[%s2 + $0x1a0] sm:$0xff]
    %v1183 = vld [vmem:[%s2 + $0x1a8] sm:$0xff]
    %v1184 = vld [vmem:[%s2 + $0x1b0] sm:$0xff]
    %v1185 = vld [vmem:[%s2 + $0x1b8] sm:$0xff]
    %v1186 = vld [vmem:[%s2 + $0x1c0] sm:$0xff]
    %v1187 = vld [vmem:[%s2 + $0x1c8] sm:$0xff]
    %v1188 = vld [vmem:[%s2 + $0x1d0] sm:$0xff]
    %v1189 = vld [vmem:[%s2 + $0x1d8] sm:$0xff]
    %v1190 = vld [vmem:[%s2 + $0x1e0] sm:$0xff]
    %v1191 = vld [vmem:[%s2 + $0x1e8] sm:$0xff]
    %v1192 = vld [vmem:[%s2 + $0x1f0] sm:$0xff]
    %v1193 = vld [vmem:[%s2 + $0x1f8] sm:$0xff]
    %1194 = vmatprep.subr.mxu0 %v1191
    %1195 = vmatpush1.msra.mxu0 %v1190
    %1196 = vmatprep.subr.mxu0 %v1187
    %1197 = vmatpush1.msra.mxu0 %v1186
    %1198 = vmatprep.subr.mxu0 %v1183
    %1199 = vmatpush1.msra.mxu0 %v1182
    %1200 = vmatprep.subr.mxu0 %v1179
    %1201 = vmatpush1.msra.mxu0 %v1178
    %1202 = vmatprep.subr.mxu0 %v1175
    %1203 = vmatpush1.msra.mxu0 %v1174
    %1204 = vmatprep.subr.mxu0 %v1171
    %1205 = vmatpush1.msra.mxu0 %v1170
    %1206 = vmatprep.subr.mxu0 %v1167
    %1207 = vmatpush1.msra.mxu0 %v1166
    %1208 = vmatprep.subr.mxu0 %v1163
    %1209 = vmatpush1.msra.mxu0 %v1162
    %1210 = vmatprep.subr.mxu0 %v1159
    %1211 = vmatpush1.msra.mxu0 %v1158
    %1212 = vmatprep.subr.mxu0 %v1155
    %1213 = vmatpush1.msra.mxu0 %v1154
    %1214 = vmatprep.subr.mxu0 %v1151
    %1215 = vmatpush1.msra.mxu0 %v1150
    %1216 = vmatprep.subr.mxu0 %v1147
    %1217 = vmatpush1.msra.mxu0 %v1146
    %1218 = vmatprep.subr.mxu0 %v1143
    %1219 = vmatpush1.msra.mxu0 %v1142
    %1220 = vmatprep.subr.mxu0 %v1139
    %1221 = vmatpush1.msra.mxu0 %v1138
    %1222 = vmatprep.subr.mxu0 %v1135
    %1223 = vmatpush1.msra.mxu0 %v1134
    %1224 = vmatprep.subr.mxu0 %v1131
    %1225 = vmatpush1.msra.mxu0 %v1130
    %1226 = vmatprep.subr.mxu0 0.0
    %1227 = vmatpush2.msra.mxu0 0.0
    %1228 = vmatprep.subr.mxu0 0.0
    %1229 = vmatpush2.msra.mxu0 0.0
    %1230 = vmatprep.subr.mxu0 0.0
    %1231 = vmatpush2.msra.mxu0 0.0
    %1232 = vmatprep.subr.mxu0 0.0
    %1233 = vmatpush2.msra.mxu0 0.0
    %1234 = vmatprep.subr.mxu0 0.0
    %1235 = vmatpush2.msra.mxu0 0.0
    %1236 = vmatprep.subr.mxu0 0.0
    %1237 = vmatpush2.msra.mxu0 0.0
    %1238 = vmatprep.subr.mxu0 0.0
    %1239 = vmatpush2.msra.mxu0 0.0
    %1240 = vmatprep.subr.mxu0 0.0
    %1241 = vmatpush2.msra.mxu0 0.0
    %1242 = vmatprep.subr.mxu0 0.0
    %1243 = vmatpush2.msra.mxu0 0.0
    %1244 = vmatprep.subr.mxu0 0.0
    %1245 = vmatpush2.msra.mxu0 0.0
    %1246 = vmatprep.subr.mxu0 0.0
    %1247 = vmatpush2.msra.mxu0 0.0
    %1248 = vmatprep.subr.mxu0 0.0
    %1249 = vmatpush2.msra.mxu0 0.0
    %1250 = vmatprep.subr.mxu0 0.0
    %1251 = vmatpush2.msra.mxu0 0.0
    %1252 = vmatprep.subr.mxu0 0.0
    %1253 = vmatpush2.msra.mxu0 0.0
    %1254 = vmatprep.subr.mxu0 0.0
    %1255 = vmatpush2.msra.mxu0 0.0
    %1256 = vmatprep.subr.mxu0 0.0
    %1257 = vmatpush2.msra.mxu0 0.0
    %1258 = vmatprep.mubr.f32.mxu0 0.0
    %1259 = vmatmul.mubr.f32.gmra.mxu0 %v1120
    %v1260 = vpop.f32.mrf.mxu0
    %v1261 = vadd.f32 0.0, %v1260
    %v1262 = vpop.f32.mrf.mxu0
    %v1263 = vadd.f32 0.0, %v1262
    %1264 = vdwg.mxu0
    %1265 = vmatprep.subr.mxu0 %v1193
    %1266 = vmatpush1.msra.mxu0 %v1192
    %1267 = vmatprep.subr.mxu0 %v1189
    %1268 = vmatpush1.msra.mxu0 %v1188
    %1269 = vmatprep.subr.mxu0 %v1185
    %1270 = vmatpush1.msra.mxu0 %v1184
    %1271 = vmatprep.subr.mxu0 %v1181
    %1272 = vmatpush1.msra.mxu0 %v1180
    %1273 = vmatprep.subr.mxu0 %v1177
    %1274 = vmatpush1.msra.mxu0 %v1176
    %1275 = vmatprep.subr.mxu0 %v1173
    %1276 = vmatpush1.msra.mxu0 %v1172
    %1277 = vmatprep.subr.mxu0 %v1169
    %1278 = vmatpush1.msra.mxu0 %v1168
    %1279 = vmatprep.subr.mxu0 %v1165
    %1280 = vmatpush1.msra.mxu0 %v1164
    %1281 = vmatprep.subr.mxu0 %v1161
    %1282 = vmatpush1.msra.mxu0 %v1160
    %1283 = vmatprep.subr.mxu0 %v1157
    %1284 = vmatpush1.msra.mxu0 %v1156
    %1285 = vmatprep.subr.mxu0 %v1153
    %1286 = vmatpush1.msra.mxu0 %v1152
    %1287 = vmatprep.subr.mxu0 %v1149
    %1288 = vmatpush1.msra.mxu0 %v1148
    %1289 = vmatprep.subr.mxu0 %v1145
    %1290 = vmatpush1.msra.mxu0 %v1144
    %1291 = vmatprep.subr.mxu0 %v1141
    %1292 = vmatpush1.msra.mxu0 %v1140
    %1293 = vmatprep.subr.mxu0 %v1137
    %1294 = vmatpush1.msra.mxu0 %v1136
    %1295 = vmatprep.subr.mxu0 %v1133
    %1296 = vmatpush1.msra.mxu0 %v1132
    %1297 = vmatprep.subr.mxu0 0.0
    %1298 = vmatpush2.msra.mxu0 0.0
    %1299 = vmatprep.subr.mxu0 0.0
    %1300 = vmatpush2.msra.mxu0 0.0
    %1301 = vmatprep.subr.mxu0 0.0
    %1302 = vmatpush2.msra.mxu0 0.0
    %1303 = vmatprep.subr.mxu0 0.0
    %1304 = vmatpush2.msra.mxu0 0.0
    %1305 = vmatprep.subr.mxu0 0.0
    %1306 = vmatpush2.msra.mxu0 0.0
    %1307 = vmatprep.subr.mxu0 0.0
    %1308 = vmatpush2.msra.mxu0 0.0
    %1309 = vmatprep.subr.mxu0 0.0
    %1310 = vmatpush2.msra.mxu0 0.0
    %1311 = vmatprep.subr.mxu0 0.0
    %1312 = vmatpush2.msra.mxu0 0.0
    %1313 = vmatprep.subr.mxu0 0.0
    %1314 = vmatpush2.msra.mxu0 0.0
    %1315 = vmatprep.subr.mxu0 0.0
    %1316 = vmatpush2.msra.mxu0 0.0
    %1317 = vmatprep.subr.mxu0 0.0
    %1318 = vmatpush2.msra.mxu0 0.0
    %1319 = vmatprep.subr.mxu0 0.0
    %1320 = vmatpush2.msra.mxu0 0.0
    %1321 = vmatprep.subr.mxu0 0.0
    %1322 = vmatpush2.msra.mxu0 0.0
    %1323 = vmatprep.subr.mxu0 0.0
    %1324 = vmatpush2.msra.mxu0 0.0
    %1325 = vmatprep.subr.mxu0 0.0
    %1326 = vmatpush2.msra.mxu0 0.0
    %1327 = vmatprep.subr.mxu0 0.0
    %1328 = vmatpush2.msra.mxu0 0.0
    %1329 = vmatprep.mubr.f32.mxu0 0.0
    %1330 = vmatmul.mubr.f32.gmra.mxu0 %v1120
    %v1331 = vpop.f32.mrf.mxu0
    %v1332 = vadd.f32 0.0, %v1331
    %v1333 = vpop.f32.mrf.mxu0
    %v1334 = vadd.f32 0.0, %v1333
    %1335 = vdwg.mxu0
    %v1336 = vadd.f32 %v1126, %v1261
    %v1337 = vadd.f32 %v1127, %v1263
    %v1338 = vadd.f32 %v1128, %v1332
    %v1339 = vadd.f32 %v1129, %v1334
    %v1340 = vxor.u32 %v1336, 2147483648
    %v1341 = vmul.f32 %v1340, 1.442695
    %v1342 = vpow.pop %v1341
    %v1343 = vadd.f32 %v1342, 1.0
    %v1344 = vrcp.pop %v1343
    %v1345 = vmul.f32 1.0, %v1344
    %v1346 = vxor.u32 %v1337, 2147483648
    %v1347 = vmul.f32 %v1346, 1.442695
    %v1348 = vpow.pop %v1347
    %v1349 = vadd.f32 %v1348, 1.0
    %v1350 = vrcp.pop %v1349
    %v1351 = vmul.f32 1.0, %v1350
    %v1352 = vtanh.pop %v1338
    %v1353 = vxor.u32 %v1339, 2147483648
    %v1354 = vmul.f32 %v1353, 1.442695
    %v1355 = vpow.pop %v1354
    %v1356 = vadd.f32 %v1355, 1.0
    %v1357 = vrcp.pop %v1356
    %v1358 = vmul.f32 1.0, %v1357
    %v1359 = vmul.f32 %v1351, %v1118
    %v1360 = vmul.f32 %v1345, %v1352
    %v1361 = vadd.f32 %v1359, %v1360
    %v1362 = vtanh.pop %v1361
    %v1363 = vmul.f32 %v1358, %v1362
    %s1364 = scalar_lea.vmem [#allocation6], 24
    %1365 = vst [vmem:[%s1364] sm:$0xff] %v1363
    %s1366 = smul.u32 4, 4
    %s1367 = smul.addr %s1366, 8
    %s1368 = scalar_lea.vmem [#allocation2], %s1367
    %v1369 = vld [vmem:[%s1368] sm:$0xff]
    %v1370 = vld [vmem:[%s1368 + $0x8] sm:$0xff]
    %v1371 = vld [vmem:[%s1368 + $0x10] sm:$0xff]
    %v1372 = vld [vmem:[%s1368 + $0x18] sm:$0xff]
    %v1373 = vld [vmem:[%s2] sm:$0xff]
    %v1374 = vld [vmem:[%s2 + $0x8] sm:$0xff]
    %v1375 = vld [vmem:[%s2 + $0x10] sm:$0xff]
    %v1376 = vld [vmem:[%s2 + $0x18] sm:$0xff]
    %v1377 = vld [vmem:[%s2 + $0x20] sm:$0xff]
    %v1378 = vld [vmem:[%s2 + $0x28] sm:$0xff]
    %v1379 = vld [vmem:[%s2 + $0x30] sm:$0xff]
    %v1380 = vld [vmem:[%s2 + $0x38] sm:$0xff]
    %v1381 = vld [vmem:[%s2 + $0x40] sm:$0xff]
    %v1382 = vld [vmem:[%s2 + $0x48] sm:$0xff]
    %v1383 = vld [vmem:[%s2 + $0x50] sm:$0xff]
    %v1384 = vld [vmem:[%s2 + $0x58] sm:$0xff]
    %v1385 = vld [vmem:[%s2 + $0x60] sm:$0xff]
    %v1386 = vld [vmem:[%s2 + $0x68] sm:$0xff]
    %v1387 = vld [vmem:[%s2 + $0x70] sm:$0xff]
    %v1388 = vld [vmem:[%s2 + $0x78] sm:$0xff]
    %v1389 = vld [vmem:[%s2 + $0x80] sm:$0xff]
    %v1390 = vld [vmem:[%s2 + $0x88] sm:$0xff]
    %v1391 = vld [vmem:[%s2 + $0x90] sm:$0xff]
    %v1392 = vld [vmem:[%s2 + $0x98] sm:$0xff]
    %v1393 = vld [vmem:[%s2 + $0xa0] sm:$0xff]
    %v1394 = vld [vmem:[%s2 + $0xa8] sm:$0xff]
    %v1395 = vld [vmem:[%s2 + $0xb0] sm:$0xff]
    %v1396 = vld [vmem:[%s2 + $0xb8] sm:$0xff]
    %v1397 = vld [vmem:[%s2 + $0xc0] sm:$0xff]
    %v1398 = vld [vmem:[%s2 + $0xc8] sm:$0xff]
    %v1399 = vld [vmem:[%s2 + $0xd0] sm:$0xff]
    %v1400 = vld [vmem:[%s2 + $0xd8] sm:$0xff]
    %v1401 = vld [vmem:[%s2 + $0xe0] sm:$0xff]
    %v1402 = vld [vmem:[%s2 + $0xe8] sm:$0xff]
    %v1403 = vld [vmem:[%s2 + $0xf0] sm:$0xff]
    %v1404 = vld [vmem:[%s2 + $0xf8] sm:$0xff]
    %v1405 = vld [vmem:[%s2 + $0x100] sm:$0xff]
    %v1406 = vld [vmem:[%s2 + $0x108] sm:$0xff]
    %v1407 = vld [vmem:[%s2 + $0x110] sm:$0xff]
    %v1408 = vld [vmem:[%s2 + $0x118] sm:$0xff]
    %v1409 = vld [vmem:[%s2 + $0x120] sm:$0xff]
    %v1410 = vld [vmem:[%s2 + $0x128] sm:$0xff]
    %v1411 = vld [vmem:[%s2 + $0x130] sm:$0xff]
    %v1412 = vld [vmem:[%s2 + $0x138] sm:$0xff]
    %v1413 = vld [vmem:[%s2 + $0x140] sm:$0xff]
    %v1414 = vld [vmem:[%s2 + $0x148] sm:$0xff]
    %v1415 = vld [vmem:[%s2 + $0x150] sm:$0xff]
    %v1416 = vld [vmem:[%s2 + $0x158] sm:$0xff]
    %v1417 = vld [vmem:[%s2 + $0x160] sm:$0xff]
    %v1418 = vld [vmem:[%s2 + $0x168] sm:$0xff]
    %v1419 = vld [vmem:[%s2 + $0x170] sm:$0xff]
    %v1420 = vld [vmem:[%s2 + $0x178] sm:$0xff]
    %v1421 = vld [vmem:[%s2 + $0x180] sm:$0xff]
    %v1422 = vld [vmem:[%s2 + $0x188] sm:$0xff]
    %v1423 = vld [vmem:[%s2 + $0x190] sm:$0xff]
    %v1424 = vld [vmem:[%s2 + $0x198] sm:$0xff]
    %v1425 = vld [vmem:[%s2 + $0x1a0] sm:$0xff]
    %v1426 = vld [vmem:[%s2 + $0x1a8] sm:$0xff]
    %v1427 = vld [vmem:[%s2 + $0x1b0] sm:$0xff]
    %v1428 = vld [vmem:[%s2 + $0x1b8] sm:$0xff]
    %v1429 = vld [vmem:[%s2 + $0x1c0] sm:$0xff]
    %v1430 = vld [vmem:[%s2 + $0x1c8] sm:$0xff]
    %v1431 = vld [vmem:[%s2 + $0x1d0] sm:$0xff]
    %v1432 = vld [vmem:[%s2 + $0x1d8] sm:$0xff]
    %v1433 = vld [vmem:[%s2 + $0x1e0] sm:$0xff]
    %v1434 = vld [vmem:[%s2 + $0x1e8] sm:$0xff]
    %v1435 = vld [vmem:[%s2 + $0x1f0] sm:$0xff]
    %v1436 = vld [vmem:[%s2 + $0x1f8] sm:$0xff]
    %1437 = vmatprep.subr.mxu0 %v1434
    %1438 = vmatpush1.msra.mxu0 %v1433
    %1439 = vmatprep.subr.mxu0 %v1430
    %1440 = vmatpush1.msra.mxu0 %v1429
    %1441 = vmatprep.subr.mxu0 %v1426
    %1442 = vmatpush1.msra.mxu0 %v1425
    %1443 = vmatprep.subr.mxu0 %v1422
    %1444 = vmatpush1.msra.mxu0 %v1421
    %1445 = vmatprep.subr.mxu0 %v1418
    %1446 = vmatpush1.msra.mxu0 %v1417
    %1447 = vmatprep.subr.mxu0 %v1414
    %1448 = vmatpush1.msra.mxu0 %v1413
    %1449 = vmatprep.subr.mxu0 %v1410
    %1450 = vmatpush1.msra.mxu0 %v1409
    %1451 = vmatprep.subr.mxu0 %v1406
    %1452 = vmatpush1.msra.mxu0 %v1405
    %1453 = vmatprep.subr.mxu0 %v1402
    %1454 = vmatpush1.msra.mxu0 %v1401
    %1455 = vmatprep.subr.mxu0 %v1398
    %1456 = vmatpush1.msra.mxu0 %v1397
    %1457 = vmatprep.subr.mxu0 %v1394
    %1458 = vmatpush1.msra.mxu0 %v1393
    %1459 = vmatprep.subr.mxu0 %v1390
    %1460 = vmatpush1.msra.mxu0 %v1389
    %1461 = vmatprep.subr.mxu0 %v1386
    %1462 = vmatpush1.msra.mxu0 %v1385
    %1463 = vmatprep.subr.mxu0 %v1382
    %1464 = vmatpush1.msra.mxu0 %v1381
    %1465 = vmatprep.subr.mxu0 %v1378
    %1466 = vmatpush1.msra.mxu0 %v1377
    %1467 = vmatprep.subr.mxu0 %v1374
    %1468 = vmatpush1.msra.mxu0 %v1373
    %1469 = vmatprep.subr.mxu0 0.0
    %1470 = vmatpush2.msra.mxu0 0.0
    %1471 = vmatprep.subr.mxu0 0.0
    %1472 = vmatpush2.msra.mxu0 0.0
    %1473 = vmatprep.subr.mxu0 0.0
    %1474 = vmatpush2.msra.mxu0 0.0
    %1475 = vmatprep.subr.mxu0 0.0
    %1476 = vmatpush2.msra.mxu0 0.0
    %1477 = vmatprep.subr.mxu0 0.0
    %1478 = vmatpush2.msra.mxu0 0.0
    %1479 = vmatprep.subr.mxu0 0.0
    %1480 = vmatpush2.msra.mxu0 0.0
    %1481 = vmatprep.subr.mxu0 0.0
    %1482 = vmatpush2.msra.mxu0 0.0
    %1483 = vmatprep.subr.mxu0 0.0
    %1484 = vmatpush2.msra.mxu0 0.0
    %1485 = vmatprep.subr.mxu0 0.0
    %1486 = vmatpush2.msra.mxu0 0.0
    %1487 = vmatprep.subr.mxu0 0.0
    %1488 = vmatpush2.msra.mxu0 0.0
    %1489 = vmatprep.subr.mxu0 0.0
    %1490 = vmatpush2.msra.mxu0 0.0
    %1491 = vmatprep.subr.mxu0 0.0
    %1492 = vmatpush2.msra.mxu0 0.0
    %1493 = vmatprep.subr.mxu0 0.0
    %1494 = vmatpush2.msra.mxu0 0.0
    %1495 = vmatprep.subr.mxu0 0.0
    %1496 = vmatpush2.msra.mxu0 0.0
    %1497 = vmatprep.subr.mxu0 0.0
    %1498 = vmatpush2.msra.mxu0 0.0
    %1499 = vmatprep.subr.mxu0 0.0
    %1500 = vmatpush2.msra.mxu0 0.0
    %1501 = vmatprep.mubr.f32.mxu0 0.0
    %1502 = vmatmul.mubr.f32.gmra.mxu0 %v1363
    %v1503 = vpop.f32.mrf.mxu0
    %v1504 = vadd.f32 0.0, %v1503
    %v1505 = vpop.f32.mrf.mxu0
    %v1506 = vadd.f32 0.0, %v1505
    %1507 = vdwg.mxu0
    %1508 = vmatprep.subr.mxu0 %v1436
    %1509 = vmatpush1.msra.mxu0 %v1435
    %1510 = vmatprep.subr.mxu0 %v1432
    %1511 = vmatpush1.msra.mxu0 %v1431
    %1512 = vmatprep.subr.mxu0 %v1428
    %1513 = vmatpush1.msra.mxu0 %v1427
    %1514 = vmatprep.subr.mxu0 %v1424
    %1515 = vmatpush1.msra.mxu0 %v1423
    %1516 = vmatprep.subr.mxu0 %v1420
    %1517 = vmatpush1.msra.mxu0 %v1419
    %1518 = vmatprep.subr.mxu0 %v1416
    %1519 = vmatpush1.msra.mxu0 %v1415
    %1520 = vmatprep.subr.mxu0 %v1412
    %1521 = vmatpush1.msra.mxu0 %v1411
    %1522 = vmatprep.subr.mxu0 %v1408
    %1523 = vmatpush1.msra.mxu0 %v1407
    %1524 = vmatprep.subr.mxu0 %v1404
    %1525 = vmatpush1.msra.mxu0 %v1403
    %1526 = vmatprep.subr.mxu0 %v1400
    %1527 = vmatpush1.msra.mxu0 %v1399
    %1528 = vmatprep.subr.mxu0 %v1396
    %1529 = vmatpush1.msra.mxu0 %v1395
    %1530 = vmatprep.subr.mxu0 %v1392
    %1531 = vmatpush1.msra.mxu0 %v1391
    %1532 = vmatprep.subr.mxu0 %v1388
    %1533 = vmatpush1.msra.mxu0 %v1387
    %1534 = vmatprep.subr.mxu0 %v1384
    %1535 = vmatpush1.msra.mxu0 %v1383
    %1536 = vmatprep.subr.mxu0 %v1380
    %1537 = vmatpush1.msra.mxu0 %v1379
    %1538 = vmatprep.subr.mxu0 %v1376
    %1539 = vmatpush1.msra.mxu0 %v1375
    %1540 = vmatprep.subr.mxu0 0.0
    %1541 = vmatpush2.msra.mxu0 0.0
    %1542 = vmatprep.subr.mxu0 0.0
    %1543 = vmatpush2.msra.mxu0 0.0
    %1544 = vmatprep.subr.mxu0 0.0
    %1545 = vmatpush2.msra.mxu0 0.0
    %1546 = vmatprep.subr.mxu0 0.0
    %1547 = vmatpush2.msra.mxu0 0.0
    %1548 = vmatprep.subr.mxu0 0.0
    %1549 = vmatpush2.msra.mxu0 0.0
    %1550 = vmatprep.subr.mxu0 0.0
    %1551 = vmatpush2.msra.mxu0 0.0
    %1552 = vmatprep.subr.mxu0 0.0
    %1553 = vmatpush2.msra.mxu0 0.0
    %1554 = vmatprep.subr.mxu0 0.0
    %1555 = vmatpush2.msra.mxu0 0.0
    %1556 = vmatprep.subr.mxu0 0.0
    %1557 = vmatpush2.msra.mxu0 0.0
    %1558 = vmatprep.subr.mxu0 0.0
    %1559 = vmatpush2.msra.mxu0 0.0
    %1560 = vmatprep.subr.mxu0 0.0
    %1561 = vmatpush2.msra.mxu0 0.0
    %1562 = vmatprep.subr.mxu0 0.0
    %1563 = vmatpush2.msra.mxu0 0.0
    %1564 = vmatprep.subr.mxu0 0.0
    %1565 = vmatpush2.msra.mxu0 0.0
    %1566 = vmatprep.subr.mxu0 0.0
    %1567 = vmatpush2.msra.mxu0 0.0
    %1568 = vmatprep.subr.mxu0 0.0
    %1569 = vmatpush2.msra.mxu0 0.0
    %1570 = vmatprep.subr.mxu0 0.0
    %1571 = vmatpush2.msra.mxu0 0.0
    %1572 = vmatprep.mubr.f32.mxu0 0.0
    %1573 = vmatmul.mubr.f32.gmra.mxu0 %v1363
    %v1574 = vpop.f32.mrf.mxu0
    %v1575 = vadd.f32 0.0, %v1574
    %v1576 = vpop.f32.mrf.mxu0
    %v1577 = vadd.f32 0.0, %v1576
    %1578 = vdwg.mxu0
    %v1579 = vadd.f32 %v1369, %v1504
    %v1580 = vadd.f32 %v1370, %v1506
    %v1581 = vadd.f32 %v1371, %v1575
    %v1582 = vadd.f32 %v1372, %v1577
    %v1583 = vxor.u32 %v1579, 2147483648
    %v1584 = vmul.f32 %v1583, 1.442695
    %v1585 = vpow.pop %v1584
    %v1586 = vadd.f32 %v1585, 1.0
    %v1587 = vrcp.pop %v1586
    %v1588 = vmul.f32 1.0, %v1587
    %v1589 = vxor.u32 %v1580, 2147483648
    %v1590 = vmul.f32 %v1589, 1.442695
    %v1591 = vpow.pop %v1590
    %v1592 = vadd.f32 %v1591, 1.0
    %v1593 = vrcp.pop %v1592
    %v1594 = vmul.f32 1.0, %v1593
    %v1595 = vtanh.pop %v1581
    %v1596 = vxor.u32 %v1582, 2147483648
    %v1597 = vmul.f32 %v1596, 1.442695
    %v1598 = vpow.pop %v1597
    %v1599 = vadd.f32 %v1598, 1.0
    %v1600 = vrcp.pop %v1599
    %v1601 = vmul.f32 1.0, %v1600
    %v1602 = vmul.f32 %v1594, %v1361
    %v1603 = vmul.f32 %v1588, %v1595
    %v1604 = vadd.f32 %v1602, %v1603
    %v1605 = vtanh.pop %v1604
    %v1606 = vmul.f32 %v1601, %v1605
    %s1607 = scalar_lea.vmem [#allocation6], 32
    %1608 = vst [vmem:[%s1607] sm:$0xff] %v1606
    %s1609 = smul.u32 5, 4
    %s1610 = smul.addr %s1609, 8
    %s1611 = scalar_lea.vmem [#allocation2], %s1610
    %v1612 = vld [vmem:[%s1611] sm:$0xff]
    %v1613 = vld [vmem:[%s1611 + $0x8] sm:$0xff]
    %v1614 = vld [vmem:[%s1611 + $0x10] sm:$0xff]
    %v1615 = vld [vmem:[%s1611 + $0x18] sm:$0xff]
    %v1616 = vld [vmem:[%s2] sm:$0xff]
    %v1617 = vld [vmem:[%s2 + $0x8] sm:$0xff]
    %v1618 = vld [vmem:[%s2 + $0x10] sm:$0xff]
    %v1619 = vld [vmem:[%s2 + $0x18] sm:$0xff]
    %v1620 = vld [vmem:[%s2 + $0x20] sm:$0xff]
    %v1621 = vld [vmem:[%s2 + $0x28] sm:$0xff]
    %v1622 = vld [vmem:[%s2 + $0x30] sm:$0xff]
    %v1623 = vld [vmem:[%s2 + $0x38] sm:$0xff]
    %v1624 = vld [vmem:[%s2 + $0x40] sm:$0xff]
    %v1625 = vld [vmem:[%s2 + $0x48] sm:$0xff]
    %v1626 = vld [vmem:[%s2 + $0x50] sm:$0xff]
    %v1627 = vld [vmem:[%s2 + $0x58] sm:$0xff]
    %v1628 = vld [vmem:[%s2 + $0x60] sm:$0xff]
    %v1629 = vld [vmem:[%s2 + $0x68] sm:$0xff]
    %v1630 = vld [vmem:[%s2 + $0x70] sm:$0xff]
    %v1631 = vld [vmem:[%s2 + $0x78] sm:$0xff]
    %v1632 = vld [vmem:[%s2 + $0x80] sm:$0xff]
    %v1633 = vld [vmem:[%s2 + $0x88] sm:$0xff]
    %v1634 = vld [vmem:[%s2 + $0x90] sm:$0xff]
    %v1635 = vld [vmem:[%s2 + $0x98] sm:$0xff]
    %v1636 = vld [vmem:[%s2 + $0xa0] sm:$0xff]
    %v1637 = vld [vmem:[%s2 + $0xa8] sm:$0xff]
    %v1638 = vld [vmem:[%s2 + $0xb0] sm:$0xff]
    %v1639 = vld [vmem:[%s2 + $0xb8] sm:$0xff]
    %v1640 = vld [vmem:[%s2 + $0xc0] sm:$0xff]
    %v1641 = vld [vmem:[%s2 + $0xc8] sm:$0xff]
    %v1642 = vld [vmem:[%s2 + $0xd0] sm:$0xff]
    %v1643 = vld [vmem:[%s2 + $0xd8] sm:$0xff]
    %v1644 = vld [vmem:[%s2 + $0xe0] sm:$0xff]
    %v1645 = vld [vmem:[%s2 + $0xe8] sm:$0xff]
    %v1646 = vld [vmem:[%s2 + $0xf0] sm:$0xff]
    %v1647 = vld [vmem:[%s2 + $0xf8] sm:$0xff]
    %v1648 = vld [vmem:[%s2 + $0x100] sm:$0xff]
    %v1649 = vld [vmem:[%s2 + $0x108] sm:$0xff]
    %v1650 = vld [vmem:[%s2 + $0x110] sm:$0xff]
    %v1651 = vld [vmem:[%s2 + $0x118] sm:$0xff]
    %v1652 = vld [vmem:[%s2 + $0x120] sm:$0xff]
    %v1653 = vld [vmem:[%s2 + $0x128] sm:$0xff]
    %v1654 = vld [vmem:[%s2 + $0x130] sm:$0xff]
    %v1655 = vld [vmem:[%s2 + $0x138] sm:$0xff]
    %v1656 = vld [vmem:[%s2 + $0x140] sm:$0xff]
    %v1657 = vld [vmem:[%s2 + $0x148] sm:$0xff]
    %v1658 = vld [vmem:[%s2 + $0x150] sm:$0xff]
    %v1659 = vld [vmem:[%s2 + $0x158] sm:$0xff]
    %v1660 = vld [vmem:[%s2 + $0x160] sm:$0xff]
    %v1661 = vld [vmem:[%s2 + $0x168] sm:$0xff]
    %v1662 = vld [vmem:[%s2 + $0x170] sm:$0xff]
    %v1663 = vld [vmem:[%s2 + $0x178] sm:$0xff]
    %v1664 = vld [vmem:[%s2 + $0x180] sm:$0xff]
    %v1665 = vld [vmem:[%s2 + $0x188] sm:$0xff]
    %v1666 = vld [vmem:[%s2 + $0x190] sm:$0xff]
    %v1667 = vld [vmem:[%s2 + $0x198] sm:$0xff]
    %v1668 = vld [vmem:[%s2 + $0x1a0] sm:$0xff]
    %v1669 = vld [vmem:[%s2 + $0x1a8] sm:$0xff]
    %v1670 = vld [vmem:[%s2 + $0x1b0] sm:$0xff]
    %v1671 = vld [vmem:[%s2 + $0x1b8] sm:$0xff]
    %v1672 = vld [vmem:[%s2 + $0x1c0] sm:$0xff]
    %v1673 = vld [vmem:[%s2 + $0x1c8] sm:$0xff]
    %v1674 = vld [vmem:[%s2 + $0x1d0] sm:$0xff]
    %v1675 = vld [vmem:[%s2 + $0x1d8] sm:$0xff]
    %v1676 = vld [vmem:[%s2 + $0x1e0] sm:$0xff]
    %v1677 = vld [vmem:[%s2 + $0x1e8] sm:$0xff]
    %v1678 = vld [vmem:[%s2 + $0x1f0] sm:$0xff]
    %v1679 = vld [vmem:[%s2 + $0x1f8] sm:$0xff]
    %1680 = vmatprep.subr.mxu0 %v1677
    %1681 = vmatpush1.msra.mxu0 %v1676
    %1682 = vmatprep.subr.mxu0 %v1673
    %1683 = vmatpush1.msra.mxu0 %v1672
    %1684 = vmatprep.subr.mxu0 %v1669
    %1685 = vmatpush1.msra.mxu0 %v1668
    %1686 = vmatprep.subr.mxu0 %v1665
    %1687 = vmatpush1.msra.mxu0 %v1664
    %1688 = vmatprep.subr.mxu0 %v1661
    %1689 = vmatpush1.msra.mxu0 %v1660
    %1690 = vmatprep.subr.mxu0 %v1657
    %1691 = vmatpush1.msra.mxu0 %v1656
    %1692 = vmatprep.subr.mxu0 %v1653
    %1693 = vmatpush1.msra.mxu0 %v1652
    %1694 = vmatprep.subr.mxu0 %v1649
    %1695 = vmatpush1.msra.mxu0 %v1648
    %1696 = vmatprep.subr.mxu0 %v1645
    %1697 = vmatpush1.msra.mxu0 %v1644
    %1698 = vmatprep.subr.mxu0 %v1641
    %1699 = vmatpush1.msra.mxu0 %v1640
    %1700 = vmatprep.subr.mxu0 %v1637
    %1701 = vmatpush1.msra.mxu0 %v1636
    %1702 = vmatprep.subr.mxu0 %v1633
    %1703 = vmatpush1.msra.mxu0 %v1632
    %1704 = vmatprep.subr.mxu0 %v1629
    %1705 = vmatpush1.msra.mxu0 %v1628
    %1706 = vmatprep.subr.mxu0 %v1625
    %1707 = vmatpush1.msra.mxu0 %v1624
    %1708 = vmatprep.subr.mxu0 %v1621
    %1709 = vmatpush1.msra.mxu0 %v1620
    %1710 = vmatprep.subr.mxu0 %v1617
    %1711 = vmatpush1.msra.mxu0 %v1616
    %1712 = vmatprep.subr.mxu0 0.0
    %1713 = vmatpush2.msra.mxu0 0.0
    %1714 = vmatprep.subr.mxu0 0.0
    %1715 = vmatpush2.msra.mxu0 0.0
    %1716 = vmatprep.subr.mxu0 0.0
    %1717 = vmatpush2.msra.mxu0 0.0
    %1718 = vmatprep.subr.mxu0 0.0
    %1719 = vmatpush2.msra.mxu0 0.0
    %1720 = vmatprep.subr.mxu0 0.0
    %1721 = vmatpush2.msra.mxu0 0.0
    %1722 = vmatprep.subr.mxu0 0.0
    %1723 = vmatpush2.msra.mxu0 0.0
    %1724 = vmatprep.subr.mxu0 0.0
    %1725 = vmatpush2.msra.mxu0 0.0
    %1726 = vmatprep.subr.mxu0 0.0
    %1727 = vmatpush2.msra.mxu0 0.0
    %1728 = vmatprep.subr.mxu0 0.0
    %1729 = vmatpush2.msra.mxu0 0.0
    %1730 = vmatprep.subr.mxu0 0.0
    %1731 = vmatpush2.msra.mxu0 0.0
    %1732 = vmatprep.subr.mxu0 0.0
    %1733 = vmatpush2.msra.mxu0 0.0
    %1734 = vmatprep.subr.mxu0 0.0
    %1735 = vmatpush2.msra.mxu0 0.0
    %1736 = vmatprep.subr.mxu0 0.0
    %1737 = vmatpush2.msra.mxu0 0.0
    %1738 = vmatprep.subr.mxu0 0.0
    %1739 = vmatpush2.msra.mxu0 0.0
    %1740 = vmatprep.subr.mxu0 0.0
    %1741 = vmatpush2.msra.mxu0 0.0
    %1742 = vmatprep.subr.mxu0 0.0
    %1743 = vmatpush2.msra.mxu0 0.0
    %1744 = vmatprep.mubr.f32.mxu0 0.0
    %1745 = vmatmul.mubr.f32.gmra.mxu0 %v1606
    %v1746 = vpop.f32.mrf.mxu0
    %v1747 = vadd.f32 0.0, %v1746
    %v1748 = vpop.f32.mrf.mxu0
    %v1749 = vadd.f32 0.0, %v1748
    %1750 = vdwg.mxu0
    %1751 = vmatprep.subr.mxu0 %v1679
    %1752 = vmatpush1.msra.mxu0 %v1678
    %1753 = vmatprep.subr.mxu0 %v1675
    %1754 = vmatpush1.msra.mxu0 %v1674
    %1755 = vmatprep.subr.mxu0 %v1671
    %1756 = vmatpush1.msra.mxu0 %v1670
    %1757 = vmatprep.subr.mxu0 %v1667
    %1758 = vmatpush1.msra.mxu0 %v1666
    %1759 = vmatprep.subr.mxu0 %v1663
    %1760 = vmatpush1.msra.mxu0 %v1662
    %1761 = vmatprep.subr.mxu0 %v1659
    %1762 = vmatpush1.msra.mxu0 %v1658
    %1763 = vmatprep.subr.mxu0 %v1655
    %1764 = vmatpush1.msra.mxu0 %v1654
    %1765 = vmatprep.subr.mxu0 %v1651
    %1766 = vmatpush1.msra.mxu0 %v1650
    %1767 = vmatprep.subr.mxu0 %v1647
    %1768 = vmatpush1.msra.mxu0 %v1646
    %1769 = vmatprep.subr.mxu0 %v1643
    %1770 = vmatpush1.msra.mxu0 %v1642
    %1771 = vmatprep.subr.mxu0 %v1639
    %1772 = vmatpush1.msra.mxu0 %v1638
    %1773 = vmatprep.subr.mxu0 %v1635
    %1774 = vmatpush1.msra.mxu0 %v1634
    %1775 = vmatprep.subr.mxu0 %v1631
    %1776 = vmatpush1.msra.mxu0 %v1630
    %1777 = vmatprep.subr.mxu0 %v1627
    %1778 = vmatpush1.msra.mxu0 %v1626
    %1779 = vmatprep.subr.mxu0 %v1623
    %1780 = vmatpush1.msra.mxu0 %v1622
    %1781 = vmatprep.subr.mxu0 %v1619
    %1782 = vmatpush1.msra.mxu0 %v1618
    %1783 = vmatprep.subr.mxu0 0.0
    %1784 = vmatpush2.msra.mxu0 0.0
    %1785 = vmatprep.subr.mxu0 0.0
    %1786 = vmatpush2.msra.mxu0 0.0
    %1787 = vmatprep.subr.mxu0 0.0
    %1788 = vmatpush2.msra.mxu0 0.0
    %1789 = vmatprep.subr.mxu0 0.0
    %1790 = vmatpush2.msra.mxu0 0.0
    %1791 = vmatprep.subr.mxu0 0.0
    %1792 = vmatpush2.msra.mxu0 0.0
    %1793 = vmatprep.subr.mxu0 0.0
    %1794 = vmatpush2.msra.mxu0 0.0
    %1795 = vmatprep.subr.mxu0 0.0
    %1796 = vmatpush2.msra.mxu0 0.0
    %1797 = vmatprep.subr.mxu0 0.0
    %1798 = vmatpush2.msra.mxu0 0.0
    %1799 = vmatprep.subr.mxu0 0.0
    %1800 = vmatpush2.msra.mxu0 0.0
    %1801 = vmatprep.subr.mxu0 0.0
    %1802 = vmatpush2.msra.mxu0 0.0
    %1803 = vmatprep.subr.mxu0 0.0
    %1804 = vmatpush2.msra.mxu0 0.0
    %1805 = vmatprep.subr.mxu0 0.0
    %1806 = vmatpush2.msra.mxu0 0.0
    %1807 = vmatprep.subr.mxu0 0.0
    %1808 = vmatpush2.msra.mxu0 0.0
    %1809 = vmatprep.subr.mxu0 0.0
    %1810 = vmatpush2.msra.mxu0 0.0
    %1811 = vmatprep.subr.mxu0 0.0
    %1812 = vmatpush2.msra.mxu0 0.0
    %1813 = vmatprep.subr.mxu0 0.0
    %1814 = vmatpush2.msra.mxu0 0.0
    %1815 = vmatprep.mubr.f32.mxu0 0.0
    %1816 = vmatmul.mubr.f32.gmra.mxu0 %v1606
    %v1817 = vpop.f32.mrf.mxu0
    %v1818 = vadd.f32 0.0, %v1817
    %v1819 = vpop.f32.mrf.mxu0
    %v1820 = vadd.f32 0.0, %v1819
    %1821 = vdwg.mxu0
    %v1822 = vadd.f32 %v1612, %v1747
    %v1823 = vadd.f32 %v1613, %v1749
    %v1824 = vadd.f32 %v1614, %v1818
    %v1825 = vadd.f32 %v1615, %v1820
    %v1826 = vxor.u32 %v1822, 2147483648
    %v1827 = vmul.f32 %v1826, 1.442695
    %v1828 = vpow.pop %v1827
    %v1829 = vadd.f32 %v1828, 1.0
    %v1830 = vrcp.pop %v1829
    %v1831 = vmul.f32 1.0, %v1830
    %v1832 = vxor.u32 %v1823, 2147483648
    %v1833 = vmul.f32 %v1832, 1.442695
    %v1834 = vpow.pop %v1833
    %v1835 = vadd.f32 %v1834, 1.0
    %v1836 = vrcp.pop %v1835
    %v1837 = vmul.f32 1.0, %v1836
    %v1838 = vtanh.pop %v1824
    %v1839 = vxor.u32 %v1825, 2147483648
    %v1840 = vmul.f32 %v1839, 1.442695
    %v1841 = vpow.pop %v1840
    %v1842 = vadd.f32 %v1841, 1.0
    %v1843 = vrcp.pop %v1842
    %v1844 = vmul.f32 1.0, %v1843
    %v1845 = vmul.f32 %v1837, %v1604
    %v1846 = vmul.f32 %v1831, %v1838
    %v1847 = vadd.f32 %v1845, %v1846
    %v1848 = vtanh.pop %v1847
    %v1849 = vmul.f32 %v1844, %v1848
    %s1850 = scalar_lea.vmem [#allocation6], 40
    %1851 = vst [vmem:[%s1850] sm:$0xff] %v1849
    %s1852 = smul.u32 6, 4
    %s1853 = smul.addr %s1852, 8
    %s1854 = scalar_lea.vmem [#allocation2], %s1853
    %v1855 = vld [vmem:[%s1854] sm:$0xff]
    %v1856 = vld [vmem:[%s1854 + $0x8] sm:$0xff]
    %v1857 = vld [vmem:[%s1854 + $0x10] sm:$0xff]
    %v1858 = vld [vmem:[%s1854 + $0x18] sm:$0xff]
    %v1859 = vld [vmem:[%s2] sm:$0xff]
    %v1860 = vld [vmem:[%s2 + $0x8] sm:$0xff]
    %v1861 = vld [vmem:[%s2 + $0x10] sm:$0xff]
    %v1862 = vld [vmem:[%s2 + $0x18] sm:$0xff]
    %v1863 = vld [vmem:[%s2 + $0x20] sm:$0xff]
    %v1864 = vld [vmem:[%s2 + $0x28] sm:$0xff]
    %v1865 = vld [vmem:[%s2 + $0x30] sm:$0xff]
    %v1866 = vld [vmem:[%s2 + $0x38] sm:$0xff]
    %v1867 = vld [vmem:[%s2 + $0x40] sm:$0xff]
    %v1868 = vld [vmem:[%s2 + $0x48] sm:$0xff]
    %v1869 = vld [vmem:[%s2 + $0x50] sm:$0xff]
    %v1870 = vld [vmem:[%s2 + $0x58] sm:$0xff]
    %v1871 = vld [vmem:[%s2 + $0x60] sm:$0xff]
    %v1872 = vld [vmem:[%s2 + $0x68] sm:$0xff]
    %v1873 = vld [vmem:[%s2 + $0x70] sm:$0xff]
    %v1874 = vld [vmem:[%s2 + $0x78] sm:$0xff]
    %v1875 = vld [vmem:[%s2 + $0x80] sm:$0xff]
    %v1876 = vld [vmem:[%s2 + $0x88] sm:$0xff]
    %v1877 = vld [vmem:[%s2 + $0x90] sm:$0xff]
    %v1878 = vld [vmem:[%s2 + $0x98] sm:$0xff]
    %v1879 = vld [vmem:[%s2 + $0xa0] sm:$0xff]
    %v1880 = vld [vmem:[%s2 + $0xa8] sm:$0xff]
    %v1881 = vld [vmem:[%s2 + $0xb0] sm:$0xff]
    %v1882 = vld [vmem:[%s2 + $0xb8] sm:$0xff]
    %v1883 = vld [vmem:[%s2 + $0xc0] sm:$0xff]
    %v1884 = vld [vmem:[%s2 + $0xc8] sm:$0xff]
    %v1885 = vld [vmem:[%s2 + $0xd0] sm:$0xff]
    %v1886 = vld [vmem:[%s2 + $0xd8] sm:$0xff]
    %v1887 = vld [vmem:[%s2 + $0xe0] sm:$0xff]
    %v1888 = vld [vmem:[%s2 + $0xe8] sm:$0xff]
    %v1889 = vld [vmem:[%s2 + $0xf0] sm:$0xff]
    %v1890 = vld [vmem:[%s2 + $0xf8] sm:$0xff]
    %v1891 = vld [vmem:[%s2 + $0x100] sm:$0xff]
    %v1892 = vld [vmem:[%s2 + $0x108] sm:$0xff]
    %v1893 = vld [vmem:[%s2 + $0x110] sm:$0xff]
    %v1894 = vld [vmem:[%s2 + $0x118] sm:$0xff]
    %v1895 = vld [vmem:[%s2 + $0x120] sm:$0xff]
    %v1896 = vld [vmem:[%s2 + $0x128] sm:$0xff]
    %v1897 = vld [vmem:[%s2 + $0x130] sm:$0xff]
    %v1898 = vld [vmem:[%s2 + $0x138] sm:$0xff]
    %v1899 = vld [vmem:[%s2 + $0x140] sm:$0xff]
    %v1900 = vld [vmem:[%s2 + $0x148] sm:$0xff]
    %v1901 = vld [vmem:[%s2 + $0x150] sm:$0xff]
    %v1902 = vld [vmem:[%s2 + $0x158] sm:$0xff]
    %v1903 = vld [vmem:[%s2 + $0x160] sm:$0xff]
    %v1904 = vld [vmem:[%s2 + $0x168] sm:$0xff]
    %v1905 = vld [vmem:[%s2 + $0x170] sm:$0xff]
    %v1906 = vld [vmem:[%s2 + $0x178] sm:$0xff]
    %v1907 = vld [vmem:[%s2 + $0x180] sm:$0xff]
    %v1908 = vld [vmem:[%s2 + $0x188] sm:$0xff]
    %v1909 = vld [vmem:[%s2 + $0x190] sm:$0xff]
    %v1910 = vld [vmem:[%s2 + $0x198] sm:$0xff]
    %v1911 = vld [vmem:[%s2 + $0x1a0] sm:$0xff]
    %v1912 = vld [vmem:[%s2 + $0x1a8] sm:$0xff]
    %v1913 = vld [vmem:[%s2 + $0x1b0] sm:$0xff]
    %v1914 = vld [vmem:[%s2 + $0x1b8] sm:$0xff]
    %v1915 = vld [vmem:[%s2 + $0x1c0] sm:$0xff]
    %v1916 = vld [vmem:[%s2 + $0x1c8] sm:$0xff]
    %v1917 = vld [vmem:[%s2 + $0x1d0] sm:$0xff]
    %v1918 = vld [vmem:[%s2 + $0x1d8] sm:$0xff]
    %v1919 = vld [vmem:[%s2 + $0x1e0] sm:$0xff]
    %v1920 = vld [vmem:[%s2 + $0x1e8] sm:$0xff]
    %v1921 = vld [vmem:[%s2 + $0x1f0] sm:$0xff]
    %v1922 = vld [vmem:[%s2 + $0x1f8] sm:$0xff]
    %1923 = vmatprep.subr.mxu0 %v1920
    %1924 = vmatpush1.msra.mxu0 %v1919
    %1925 = vmatprep.subr.mxu0 %v1916
    %1926 = vmatpush1.msra.mxu0 %v1915
    %1927 = vmatprep.subr.mxu0 %v1912
    %1928 = vmatpush1.msra.mxu0 %v1911
    %1929 = vmatprep.subr.mxu0 %v1908
    %1930 = vmatpush1.msra.mxu0 %v1907
    %1931 = vmatprep.subr.mxu0 %v1904
    %1932 = vmatpush1.msra.mxu0 %v1903
    %1933 = vmatprep.subr.mxu0 %v1900
    %1934 = vmatpush1.msra.mxu0 %v1899
    %1935 = vmatprep.subr.mxu0 %v1896
    %1936 = vmatpush1.msra.mxu0 %v1895
    %1937 = vmatprep.subr.mxu0 %v1892
    %1938 = vmatpush1.msra.mxu0 %v1891
    %1939 = vmatprep.subr.mxu0 %v1888
    %1940 = vmatpush1.msra.mxu0 %v1887
    %1941 = vmatprep.subr.mxu0 %v1884
    %1942 = vmatpush1.msra.mxu0 %v1883
    %1943 = vmatprep.subr.mxu0 %v1880
    %1944 = vmatpush1.msra.mxu0 %v1879
    %1945 = vmatprep.subr.mxu0 %v1876
    %1946 = vmatpush1.msra.mxu0 %v1875
    %1947 = vmatprep.subr.mxu0 %v1872
    %1948 = vmatpush1.msra.mxu0 %v1871
    %1949 = vmatprep.subr.mxu0 %v1868
    %1950 = vmatpush1.msra.mxu0 %v1867
    %1951 = vmatprep.subr.mxu0 %v1864
    %1952 = vmatpush1.msra.mxu0 %v1863
    %1953 = vmatprep.subr.mxu0 %v1860
    %1954 = vmatpush1.msra.mxu0 %v1859
    %1955 = vmatprep.subr.mxu0 0.0
    %1956 = vmatpush2.msra.mxu0 0.0
    %1957 = vmatprep.subr.mxu0 0.0
    %1958 = vmatpush2.msra.mxu0 0.0
    %1959 = vmatprep.subr.mxu0 0.0
    %1960 = vmatpush2.msra.mxu0 0.0
    %1961 = vmatprep.subr.mxu0 0.0
    %1962 = vmatpush2.msra.mxu0 0.0
    %1963 = vmatprep.subr.mxu0 0.0
    %1964 = vmatpush2.msra.mxu0 0.0
    %1965 = vmatprep.subr.mxu0 0.0
    %1966 = vmatpush2.msra.mxu0 0.0
    %1967 = vmatprep.subr.mxu0 0.0
    %1968 = vmatpush2.msra.mxu0 0.0
    %1969 = vmatprep.subr.mxu0 0.0
    %1970 = vmatpush2.msra.mxu0 0.0
    %1971 = vmatprep.subr.mxu0 0.0
    %1972 = vmatpush2.msra.mxu0 0.0
    %1973 = vmatprep.subr.mxu0 0.0
    %1974 = vmatpush2.msra.mxu0 0.0
    %1975 = vmatprep.subr.mxu0 0.0
    %1976 = vmatpush2.msra.mxu0 0.0
    %1977 = vmatprep.subr.mxu0 0.0
    %1978 = vmatpush2.msra.mxu0 0.0
    %1979 = vmatprep.subr.mxu0 0.0
    %1980 = vmatpush2.msra.mxu0 0.0
    %1981 = vmatprep.subr.mxu0 0.0
    %1982 = vmatpush2.msra.mxu0 0.0
    %1983 = vmatprep.subr.mxu0 0.0
    %1984 = vmatpush2.msra.mxu0 0.0
    %1985 = vmatprep.subr.mxu0 0.0
    %1986 = vmatpush2.msra.mxu0 0.0
    %1987 = vmatprep.mubr.f32.mxu0 0.0
    %1988 = vmatmul.mubr.f32.gmra.mxu0 %v1849
    %v1989 = vpop.f32.mrf.mxu0
    %v1990 = vadd.f32 0.0, %v1989
    %v1991 = vpop.f32.mrf.mxu0
    %v1992 = vadd.f32 0.0, %v1991
    %1993 = vdwg.mxu0
    %1994 = vmatprep.subr.mxu0 %v1922
    %1995 = vmatpush1.msra.mxu0 %v1921
    %1996 = vmatprep.subr.mxu0 %v1918
    %1997 = vmatpush1.msra.mxu0 %v1917
    %1998 = vmatprep.subr.mxu0 %v1914
    %1999 = vmatpush1.msra.mxu0 %v1913
    %2000 = vmatprep.subr.mxu0 %v1910
    %2001 = vmatpush1.msra.mxu0 %v1909
    %2002 = vmatprep.subr.mxu0 %v1906
    %2003 = vmatpush1.msra.mxu0 %v1905
    %2004 = vmatprep.subr.mxu0 %v1902
    %2005 = vmatpush1.msra.mxu0 %v1901
    %2006 = vmatprep.subr.mxu0 %v1898
    %2007 = vmatpush1.msra.mxu0 %v1897
    %2008 = vmatprep.subr.mxu0 %v1894
    %2009 = vmatpush1.msra.mxu0 %v1893
    %2010 = vmatprep.subr.mxu0 %v1890
    %2011 = vmatpush1.msra.mxu0 %v1889
    %2012 = vmatprep.subr.mxu0 %v1886
    %2013 = vmatpush1.msra.mxu0 %v1885
    %2014 = vmatprep.subr.mxu0 %v1882
    %2015 = vmatpush1.msra.mxu0 %v1881
    %2016 = vmatprep.subr.mxu0 %v1878
    %2017 = vmatpush1.msra.mxu0 %v1877
    %2018 = vmatprep.subr.mxu0 %v1874
    %2019 = vmatpush1.msra.mxu0 %v1873
    %2020 = vmatprep.subr.mxu0 %v1870
    %2021 = vmatpush1.msra.mxu0 %v1869
    %2022 = vmatprep.subr.mxu0 %v1866
    %2023 = vmatpush1.msra.mxu0 %v1865
    %2024 = vmatprep.subr.mxu0 %v1862
    %2025 = vmatpush1.msra.mxu0 %v1861
    %2026 = vmatprep.subr.mxu0 0.0
    %2027 = vmatpush2.msra.mxu0 0.0
    %2028 = vmatprep.subr.mxu0 0.0
    %2029 = vmatpush2.msra.mxu0 0.0
    %2030 = vmatprep.subr.mxu0 0.0
    %2031 = vmatpush2.msra.mxu0 0.0
    %2032 = vmatprep.subr.mxu0 0.0
    %2033 = vmatpush2.msra.mxu0 0.0
    %2034 = vmatprep.subr.mxu0 0.0
    %2035 = vmatpush2.msra.mxu0 0.0
    %2036 = vmatprep.subr.mxu0 0.0
    %2037 = vmatpush2.msra.mxu0 0.0
    %2038 = vmatprep.subr.mxu0 0.0
    %2039 = vmatpush2.msra.mxu0 0.0
    %2040 = vmatprep.subr.mxu0 0.0
    %2041 = vmatpush2.msra.mxu0 0.0
    %2042 = vmatprep.subr.mxu0 0.0
    %2043 = vmatpush2.msra.mxu0 0.0
    %2044 = vmatprep.subr.mxu0 0.0
    %2045 = vmatpush2.msra.mxu0 0.0
    %2046 = vmatprep.subr.mxu0 0.0
    %2047 = vmatpush2.msra.mxu0 0.0
    %2048 = vmatprep.subr.mxu0 0.0
    %2049 = vmatpush2.msra.mxu0 0.0
    %2050 = vmatprep.subr.mxu0 0.0
    %2051 = vmatpush2.msra.mxu0 0.0
    %2052 = vmatprep.subr.mxu0 0.0
    %2053 = vmatpush2.msra.mxu0 0.0
    %2054 = vmatprep.subr.mxu0 0.0
    %2055 = vmatpush2.msra.mxu0 0.0
    %2056 = vmatprep.subr.mxu0 0.0
    %2057 = vmatpush2.msra.mxu0 0.0
    %2058 = vmatprep.mubr.f32.mxu0 0.0
    %2059 = vmatmul.mubr.f32.gmra.mxu0 %v1849
    %v2060 = vpop.f32.mrf.mxu0
    %v2061 = vadd.f32 0.0, %v2060
    %v2062 = vpop.f32.mrf.mxu0
    %v2063 = vadd.f32 0.0, %v2062
    %2064 = vdwg.mxu0
    %v2065 = vadd.f32 %v1855, %v1990
    %v2066 = vadd.f32 %v1856, %v1992
    %v2067 = vadd.f32 %v1857, %v2061
    %v2068 = vadd.f32 %v1858, %v2063
    %v2069 = vxor.u32 %v2065, 2147483648
    %v2070 = vmul.f32 %v2069, 1.442695
    %v2071 = vpow.pop %v2070
    %v2072 = vadd.f32 %v2071, 1.0
    %v2073 = vrcp.pop %v2072
    %v2074 = vmul.f32 1.0, %v2073
    %v2075 = vxor.u32 %v2066, 2147483648
    %v2076 = vmul.f32 %v2075, 1.442695
    %v2077 = vpow.pop %v2076
    %v2078 = vadd.f32 %v2077, 1.0
    %v2079 = vrcp.pop %v2078
    %v2080 = vmul.f32 1.0, %v2079
    %v2081 = vtanh.pop %v2067
    %v2082 = vxor.u32 %v2068, 2147483648
    %v2083 = vmul.f32 %v2082, 1.442695
    %v2084 = vpow.pop %v2083
    %v2085 = vadd.f32 %v2084, 1.0
    %v2086 = vrcp.pop %v2085
    %v2087 = vmul.f32 1.0, %v2086
    %v2088 = vmul.f32 %v2080, %v1847
    %v2089 = vmul.f32 %v2074, %v2081
    %v2090 = vadd.f32 %v2088, %v2089
    %v2091 = vtanh.pop %v2090
    %v2092 = vmul.f32 %v2087, %v2091
    %s2093 = scalar_lea.vmem [#allocation6], 48
    %2094 = vst [vmem:[%s2093] sm:$0xff] %v2092
    %s2095 = smul.u32 7, 4
    %s2096 = smul.addr %s2095, 8
    %s2097 = scalar_lea.vmem [#allocation2], %s2096
    %v2098 = vld [vmem:[%s2097] sm:$0xff]
    %v2099 = vld [vmem:[%s2097 + $0x8] sm:$0xff]
    %v2100 = vld [vmem:[%s2097 + $0x10] sm:$0xff]
    %v2101 = vld [vmem:[%s2097 + $0x18] sm:$0xff]
    %v2102 = vld [vmem:[%s2] sm:$0xff]
    %v2103 = vld [vmem:[%s2 + $0x8] sm:$0xff]
    %v2104 = vld [vmem:[%s2 + $0x10] sm:$0xff]
    %v2105 = vld [vmem:[%s2 + $0x18] sm:$0xff]
    %v2106 = vld [vmem:[%s2 + $0x20] sm:$0xff]
    %v2107 = vld [vmem:[%s2 + $0x28] sm:$0xff]
    %v2108 = vld [vmem:[%s2 + $0x30] sm:$0xff]
    %v2109 = vld [vmem:[%s2 + $0x38] sm:$0xff]
    %v2110 = vld [vmem:[%s2 + $0x40] sm:$0xff]
    %v2111 = vld [vmem:[%s2 + $0x48] sm:$0xff]
    %v2112 = vld [vmem:[%s2 + $0x50] sm:$0xff]
    %v2113 = vld [vmem:[%s2 + $0x58] sm:$0xff]
    %v2114 = vld [vmem:[%s2 + $0x60] sm:$0xff]
    %v2115 = vld [vmem:[%s2 + $0x68] sm:$0xff]
    %v2116 = vld [vmem:[%s2 + $0x70] sm:$0xff]
    %v2117 = vld [vmem:[%s2 + $0x78] sm:$0xff]
    %v2118 = vld [vmem:[%s2 + $0x80] sm:$0xff]
    %v2119 = vld [vmem:[%s2 + $0x88] sm:$0xff]
    %v2120 = vld [vmem:[%s2 + $0x90] sm:$0xff]
    %v2121 = vld [vmem:[%s2 + $0x98] sm:$0xff]
    %v2122 = vld [vmem:[%s2 + $0xa0] sm:$0xff]
    %v2123 = vld [vmem:[%s2 + $0xa8] sm:$0xff]
    %v2124 = vld [vmem:[%s2 + $0xb0] sm:$0xff]
    %v2125 = vld [vmem:[%s2 + $0xb8] sm:$0xff]
    %v2126 = vld [vmem:[%s2 + $0xc0] sm:$0xff]
    %v2127 = vld [vmem:[%s2 + $0xc8] sm:$0xff]
    %v2128 = vld [vmem:[%s2 + $0xd0] sm:$0xff]
    %v2129 = vld [vmem:[%s2 + $0xd8] sm:$0xff]
    %v2130 = vld [vmem:[%s2 + $0xe0] sm:$0xff]
    %v2131 = vld [vmem:[%s2 + $0xe8] sm:$0xff]
    %v2132 = vld [vmem:[%s2 + $0xf0] sm:$0xff]
    %v2133 = vld [vmem:[%s2 + $0xf8] sm:$0xff]
    %v2134 = vld [vmem:[%s2 + $0x100] sm:$0xff]
    %v2135 = vld [vmem:[%s2 + $0x108] sm:$0xff]
    %v2136 = vld [vmem:[%s2 + $0x110] sm:$0xff]
    %v2137 = vld [vmem:[%s2 + $0x118] sm:$0xff]
    %v2138 = vld [vmem:[%s2 + $0x120] sm:$0xff]
    %v2139 = vld [vmem:[%s2 + $0x128] sm:$0xff]
    %v2140 = vld [vmem:[%s2 + $0x130] sm:$0xff]
    %v2141 = vld [vmem:[%s2 + $0x138] sm:$0xff]
    %v2142 = vld [vmem:[%s2 + $0x140] sm:$0xff]
    %v2143 = vld [vmem:[%s2 + $0x148] sm:$0xff]
    %v2144 = vld [vmem:[%s2 + $0x150] sm:$0xff]
    %v2145 = vld [vmem:[%s2 + $0x158] sm:$0xff]
    %v2146 = vld [vmem:[%s2 + $0x160] sm:$0xff]
    %v2147 = vld [vmem:[%s2 + $0x168] sm:$0xff]
    %v2148 = vld [vmem:[%s2 + $0x170] sm:$0xff]
    %v2149 = vld [vmem:[%s2 + $0x178] sm:$0xff]
    %v2150 = vld [vmem:[%s2 + $0x180] sm:$0xff]
    %v2151 = vld [vmem:[%s2 + $0x188] sm:$0xff]
    %v2152 = vld [vmem:[%s2 + $0x190] sm:$0xff]
    %v2153 = vld [vmem:[%s2 + $0x198] sm:$0xff]
    %v2154 = vld [vmem:[%s2 + $0x1a0] sm:$0xff]
    %v2155 = vld [vmem:[%s2 + $0x1a8] sm:$0xff]
    %v2156 = vld [vmem:[%s2 + $0x1b0] sm:$0xff]
    %v2157 = vld [vmem:[%s2 + $0x1b8] sm:$0xff]
    %v2158 = vld [vmem:[%s2 + $0x1c0] sm:$0xff]
    %v2159 = vld [vmem:[%s2 + $0x1c8] sm:$0xff]
    %v2160 = vld [vmem:[%s2 + $0x1d0] sm:$0xff]
    %v2161 = vld [vmem:[%s2 + $0x1d8] sm:$0xff]
    %v2162 = vld [vmem:[%s2 + $0x1e0] sm:$0xff]
    %v2163 = vld [vmem:[%s2 + $0x1e8] sm:$0xff]
    %v2164 = vld [vmem:[%s2 + $0x1f0] sm:$0xff]
    %v2165 = vld [vmem:[%s2 + $0x1f8] sm:$0xff]
    %2166 = vmatprep.subr.mxu0 %v2163
    %2167 = vmatpush1.msra.mxu0 %v2162
    %2168 = vmatprep.subr.mxu0 %v2159
    %2169 = vmatpush1.msra.mxu0 %v2158
    %2170 = vmatprep.subr.mxu0 %v2155
    %2171 = vmatpush1.msra.mxu0 %v2154
    %2172 = vmatprep.subr.mxu0 %v2151
    %2173 = vmatpush1.msra.mxu0 %v2150
    %2174 = vmatprep.subr.mxu0 %v2147
    %2175 = vmatpush1.msra.mxu0 %v2146
    %2176 = vmatprep.subr.mxu0 %v2143
    %2177 = vmatpush1.msra.mxu0 %v2142
    %2178 = vmatprep.subr.mxu0 %v2139
    %2179 = vmatpush1.msra.mxu0 %v2138
    %2180 = vmatprep.subr.mxu0 %v2135
    %2181 = vmatpush1.msra.mxu0 %v2134
    %2182 = vmatprep.subr.mxu0 %v2131
    %2183 = vmatpush1.msra.mxu0 %v2130
    %2184 = vmatprep.subr.mxu0 %v2127
    %2185 = vmatpush1.msra.mxu0 %v2126
    %2186 = vmatprep.subr.mxu0 %v2123
    %2187 = vmatpush1.msra.mxu0 %v2122
    %2188 = vmatprep.subr.mxu0 %v2119
    %2189 = vmatpush1.msra.mxu0 %v2118
    %2190 = vmatprep.subr.mxu0 %v2115
    %2191 = vmatpush1.msra.mxu0 %v2114
    %2192 = vmatprep.subr.mxu0 %v2111
    %2193 = vmatpush1.msra.mxu0 %v2110
    %2194 = vmatprep.subr.mxu0 %v2107
    %2195 = vmatpush1.msra.mxu0 %v2106
    %2196 = vmatprep.subr.mxu0 %v2103
    %2197 = vmatpush1.msra.mxu0 %v2102
    %2198 = vmatprep.subr.mxu0 0.0
    %2199 = vmatpush2.msra.mxu0 0.0
    %2200 = vmatprep.subr.mxu0 0.0
    %2201 = vmatpush2.msra.mxu0 0.0
    %2202 = vmatprep.subr.mxu0 0.0
    %2203 = vmatpush2.msra.mxu0 0.0
    %2204 = vmatprep.subr.mxu0 0.0
    %2205 = vmatpush2.msra.mxu0 0.0
    %2206 = vmatprep.subr.mxu0 0.0
    %2207 = vmatpush2.msra.mxu0 0.0
    %2208 = vmatprep.subr.mxu0 0.0
    %2209 = vmatpush2.msra.mxu0 0.0
    %2210 = vmatprep.subr.mxu0 0.0
    %2211 = vmatpush2.msra.mxu0 0.0
    %2212 = vmatprep.subr.mxu0 0.0
    %2213 = vmatpush2.msra.mxu0 0.0
    %2214 = vmatprep.subr.mxu0 0.0
    %2215 = vmatpush2.msra.mxu0 0.0
    %2216 = vmatprep.subr.mxu0 0.0
    %2217 = vmatpush2.msra.mxu0 0.0
    %2218 = vmatprep.subr.mxu0 0.0
    %2219 = vmatpush2.msra.mxu0 0.0
    %2220 = vmatprep.subr.mxu0 0.0
    %2221 = vmatpush2.msra.mxu0 0.0
    %2222 = vmatprep.subr.mxu0 0.0
    %2223 = vmatpush2.msra.mxu0 0.0
    %2224 = vmatprep.subr.mxu0 0.0
    %2225 = vmatpush2.msra.mxu0 0.0
    %2226 = vmatprep.subr.mxu0 0.0
    %2227 = vmatpush2.msra.mxu0 0.0
    %2228 = vmatprep.subr.mxu0 0.0
    %2229 = vmatpush2.msra.mxu0 0.0
    %2230 = vmatprep.mubr.f32.mxu0 0.0
    %2231 = vmatmul.mubr.f32.gmra.mxu0 %v2092
    %v2232 = vpop.f32.mrf.mxu0
    %v2233 = vadd.f32 0.0, %v2232
    %v2234 = vpop.f32.mrf.mxu0
    %v2235 = vadd.f32 0.0, %v2234
    %2236 = vdwg.mxu0
    %2237 = vmatprep.subr.mxu0 %v2165
    %2238 = vmatpush1.msra.mxu0 %v2164
    %2239 = vmatprep.subr.mxu0 %v2161
    %2240 = vmatpush1.msra.mxu0 %v2160
    %2241 = vmatprep.subr.mxu0 %v2157
    %2242 = vmatpush1.msra.mxu0 %v2156
    %2243 = vmatprep.subr.mxu0 %v2153
    %2244 = vmatpush1.msra.mxu0 %v2152
    %2245 = vmatprep.subr.mxu0 %v2149
    %2246 = vmatpush1.msra.mxu0 %v2148
    %2247 = vmatprep.subr.mxu0 %v2145
    %2248 = vmatpush1.msra.mxu0 %v2144
    %2249 = vmatprep.subr.mxu0 %v2141
    %2250 = vmatpush1.msra.mxu0 %v2140
    %2251 = vmatprep.subr.mxu0 %v2137
    %2252 = vmatpush1.msra.mxu0 %v2136
    %2253 = vmatprep.subr.mxu0 %v2133
    %2254 = vmatpush1.msra.mxu0 %v2132
    %2255 = vmatprep.subr.mxu0 %v2129
    %2256 = vmatpush1.msra.mxu0 %v2128
    %2257 = vmatprep.subr.mxu0 %v2125
    %2258 = vmatpush1.msra.mxu0 %v2124
    %2259 = vmatprep.subr.mxu0 %v2121
    %2260 = vmatpush1.msra.mxu0 %v2120
    %2261 = vmatprep.subr.mxu0 %v2117
    %2262 = vmatpush1.msra.mxu0 %v2116
    %2263 = vmatprep.subr.mxu0 %v2113
    %2264 = vmatpush1.msra.mxu0 %v2112
    %2265 = vmatprep.subr.mxu0 %v2109
    %2266 = vmatpush1.msra.mxu0 %v2108
    %2267 = vmatprep.subr.mxu0 %v2105
    %2268 = vmatpush1.msra.mxu0 %v2104
    %2269 = vmatprep.subr.mxu0 0.0
    %2270 = vmatpush2.msra.mxu0 0.0
    %2271 = vmatprep.subr.mxu0 0.0
    %2272 = vmatpush2.msra.mxu0 0.0
    %2273 = vmatprep.subr.mxu0 0.0
    %2274 = vmatpush2.msra.mxu0 0.0
    %2275 = vmatprep.subr.mxu0 0.0
    %2276 = vmatpush2.msra.mxu0 0.0
    %2277 = vmatprep.subr.mxu0 0.0
    %2278 = vmatpush2.msra.mxu0 0.0
    %2279 = vmatprep.subr.mxu0 0.0
    %2280 = vmatpush2.msra.mxu0 0.0
    %2281 = vmatprep.subr.mxu0 0.0
    %2282 = vmatpush2.msra.mxu0 0.0
    %2283 = vmatprep.subr.mxu0 0.0
    %2284 = vmatpush2.msra.mxu0 0.0
    %2285 = vmatprep.subr.mxu0 0.0
    %2286 = vmatpush2.msra.mxu0 0.0
    %2287 = vmatprep.subr.mxu0 0.0
    %2288 = vmatpush2.msra.mxu0 0.0
    %2289 = vmatprep.subr.mxu0 0.0
    %2290 = vmatpush2.msra.mxu0 0.0
    %2291 = vmatprep.subr.mxu0 0.0
    %2292 = vmatpush2.msra.mxu0 0.0
    %2293 = vmatprep.subr.mxu0 0.0
    %2294 = vmatpush2.msra.mxu0 0.0
    %2295 = vmatprep.subr.mxu0 0.0
    %2296 = vmatpush2.msra.mxu0 0.0
    %2297 = vmatprep.subr.mxu0 0.0
    %2298 = vmatpush2.msra.mxu0 0.0
    %2299 = vmatprep.subr.mxu0 0.0
    %2300 = vmatpush2.msra.mxu0 0.0
    %2301 = vmatprep.mubr.f32.mxu0 0.0
    %2302 = vmatmul.mubr.f32.gmra.mxu0 %v2092
    %v2303 = vpop.f32.mrf.mxu0
    %v2304 = vadd.f32 0.0, %v2303
    %v2305 = vpop.f32.mrf.mxu0
    %v2306 = vadd.f32 0.0, %v2305
    %2307 = vdwg.mxu0
    %v2308 = vadd.f32 %v2098, %v2233
    %v2309 = vadd.f32 %v2099, %v2235
    %v2310 = vadd.f32 %v2100, %v2304
    %v2311 = vadd.f32 %v2101, %v2306
    %v2312 = vxor.u32 %v2308, 2147483648
    %v2313 = vmul.f32 %v2312, 1.442695
    %v2314 = vpow.pop %v2313
    %v2315 = vadd.f32 %v2314, 1.0
    %v2316 = vrcp.pop %v2315
    %v2317 = vmul.f32 1.0, %v2316
    %v2318 = vxor.u32 %v2309, 2147483648
    %v2319 = vmul.f32 %v2318, 1.442695
    %v2320 = vpow.pop %v2319
    %v2321 = vadd.f32 %v2320, 1.0
    %v2322 = vrcp.pop %v2321
    %v2323 = vmul.f32 1.0, %v2322
    %v2324 = vtanh.pop %v2310
    %v2325 = vxor.u32 %v2311, 2147483648
    %v2326 = vmul.f32 %v2325, 1.442695
    %v2327 = vpow.pop %v2326
    %v2328 = vadd.f32 %v2327, 1.0
    %v2329 = vrcp.pop %v2328
    %v2330 = vmul.f32 1.0, %v2329
    %v2331 = vmul.f32 %v2323, %v2090
    %v2332 = vmul.f32 %v2317, %v2324
    %v2333 = vadd.f32 %v2331, %v2332
    %v2334 = vtanh.pop %v2333
    %v2335 = vmul.f32 %v2330, %v2334
    %s2336 = scalar_lea.vmem [#allocation6], 56
    %2337 = vst [vmem:[%s2336] sm:$0xff] %v2335
    %2338 = vst [vmem:[%s5] sm:$0xff] %v2335
    %2339 = vst [vmem:[%s6] sm:$0xff] %v2333
    // Predicated region
    $region26: #{a_call__.3} parent=1 // pred_check
      _
    $region27: #{a_call__.3} parent=1 // pred_check_branch
      %2341 = sbr.rel (0) target = $region29
    $region28: #{a_call__.3} parent=1 // pred_region
      %s2343 = ssub.s32 1024, 1024
      %2344 = vsyncadd [#allocation5], %s2343
      %s2345 = sshll.u32 [#allocation6], 4
      %s2346 = int_to_ptr.vmem [resolvable:$true] %s2345
      %2351 = dma.vmem_to_hbm [thread:$0]  %s2346, 1024, %s4, [#allocation5], 128, 128, 8
    $region29: #{a_call__.3} parent=1 // pred_fallthru
      _
    // Predicated region
    $region30: #{a_call__.3} parent=1 // pred_check
      _
    $region31: #{a_call__.3} parent=1 // pred_check_branch
      %2353 = sbr.rel (0) target = $region33
    $region32: #{a_call__.3} parent=1 // pred_region
      _
    $region33: #{a_call__.3} parent=1 // pred_fallthru
      _
    // Predicated region
    $region34: #{a_call__.3} parent=1 // pred_check
      _
    $region35: #{a_call__.3} parent=1 // pred_check_branch
      %2355 = sbr.rel (0) target = $region37
    $region36: #{a_call__.3} parent=1 // pred_region
      _
    $region37: #{a_call__.3} parent=1 // pred_fallthru
      _
    // Predicated region
    $region38: #{a_call__.3} parent=1 // pred_check
      _
    $region39: #{a_call__.3} parent=1 // pred_check_branch
      %2357 = sbr.rel (0) target = $region41
    $region40: #{a_call__.3} parent=1 // pred_region
      %2358 = dma.done [#allocation5], 1024
    $region41: #{a_call__.3} parent=1 // pred_fallthru
      _
    // Predicated region
    $region42: #{a_call__.3} parent=1 // pred_check
      _
    $region43: #{a_call__.3} parent=1 // pred_check_branch
      %2360 = sbr.rel (0) target = $region45
    $region44: #{a_call__.3} parent=1 // pred_region
      _
    $region45: #{a_call__.3} parent=1 // pred_fallthru
      _
    // Predicated region
    $region46: #{a_call__.3} parent=1 // pred_check
      _
    $region47: #{a_call__.3} parent=1 // pred_check_branch
      %2362 = sbr.rel (0) target = $region49
    $region48: #{a_call__.3} parent=1 // pred_region
      _
    $region49: #{a_call__.3} parent=1 // pred_fallthru
      _
    %2363 = vsyncpa [#allocation4], 1
    %2364 = vsyncpa [#allocation5], 1

</llo_original>
